<compile_context>
chip_gen: v7x
topology: tpu7x:2x2x1
jax: 0.10.0
libtpu: 0.0.40
codegen_flags: <defaults>
</compile_context>

<pallas_src>
import numpy as np
import jax
import jax.numpy as jnp
from jax.experimental import pallas as pl
from jax.experimental.pallas import tpu as pltpu

MIN_VALUE = 11.0
MAX_VALUE = 16.0


def _convT_clamp_kernel(x_ref, w_ref, b_ref, o_ref, canvas_ref):
    """Whole-batch ConvTranspose2d(stride=1, padding=0) + clamp.

    x_ref:      (N, C_in, H, W)                 VMEM, raw input.
    w_ref:      (C_in*C_out*K*K,)               SMEM, PyTorch-layout weights, row-major flat.
    b_ref:      (C_out,)                        SMEM bias.
    o_ref:      (N, C_out, H+K-1, W+K-1)        VMEM output (exact shape, no canvas).
    canvas_ref: (N, C_in, H+2(K-1), W+2(K-1))   VMEM scratch (zero-padded input).
    """
    n_batch, c_in, H, W = x_ref.shape
    _, c_out, h_out, w_out = o_ref.shape
    K = h_out - H + 1          # kernel size (3)
    pad = K - 1

    # Zero the padded canvas once, then paste the raw input at offset (pad, pad).
    canvas_ref[...] = jnp.zeros_like(canvas_ref)
    for n in range(n_batch):
        for ci in range(c_in):
            canvas_ref[n, ci, pad:pad + H, pad:pad + W] = x_ref[n, ci]

    # Transposed conv (stride=1, padding=0) == full correlation of the zero-padded
    # input with the spatially flipped, in/out-swapped kernel.  The flip/swap is
    # folded into the SMEM weight index below, so the weight stays in the original
    # PyTorch (C_in, C_out, K, K) layout.
    for n in range(n_batch):
        # Bias-initialized f32 accumulators, one per output channel.
        accs = [jnp.full((h_out, w_out), b_ref[co], dtype=jnp.float32)
                for co in range(c_out)]
        for ci in range(c_in):
            for kh in range(K):
                for kw in range(K):
                    # Static sub-slice of the VMEM scratch ref (offset handled in
                    # the load path; no value-level lane relayout).
                    win = canvas_ref[n, ci, kh:kh + h_out, kw:kw + w_out]
                    for co in range(c_out):
                        # Flipped tap: (K-1-kh, K-1-kw) in PyTorch layout.
                        w = w_ref[((ci * c_out + co) * K + (K - 1 - kh)) * K
                                  + (K - 1 - kw)]
                        accs[co] = accs[co] + w * win
        # Fused clamp + store at the exact output shape.
        for co in range(c_out):
            o_ref[n, co] = jnp.clip(accs[co], MIN_VALUE, MAX_VALUE).astype(o_ref.dtype)


@jax.jit
def conv_transpose_clamp(x_nchw, weight_iohw, bias):
    """ConvTranspose2d(stride=1, padding=0) followed by clamp(11, 16).

    x_nchw:      (N, C_in, H, W)
    weight_iohw: (C_in, C_out, K, K)   (PyTorch ConvTranspose2d layout, unmodified)
    bias:        (C_out,)
    """
    n, c_in, H, W = x_nchw.shape
    c_in_w, c_out, K, K2 = weight_iohw.shape
    assert c_in_w == c_in and K == K2
    h_out, w_out = H + K - 1, W + K - 1
    hp, wp = H + 2 * (K - 1), W + 2 * (K - 1)

    x = x_nchw.astype(jnp.float32)
    w_flat = weight_iohw.astype(jnp.float32).reshape(-1)   # (C_in*C_out*K*K,)
    b = bias.astype(jnp.float32)

    out = pl.pallas_call(
        _convT_clamp_kernel,
        grid=(1,),                                # whole batch in one grid step
        in_specs=[
            pl.BlockSpec((n, c_in, H, W), lambda i: (0, 0, 0, 0)),
            pl.BlockSpec(memory_space=pltpu.MemorySpace.SMEM),
            pl.BlockSpec(memory_space=pltpu.MemorySpace.SMEM),
        ],
        out_specs=pl.BlockSpec((n, c_out, h_out, w_out), lambda i: (0, 0, 0, 0)),
        out_shape=jax.ShapeDtypeStruct((n, c_out, h_out, w_out), jnp.float32),
        scratch_shapes=[pltpu.VMEM((n, c_in, hp, wp), jnp.float32)],
    )(x, w_flat, b)

    return out.astype(x_nchw.dtype)


def _ref_numpy(x, w, b):
    # Naive scatter-style transposed conv + clamp (pure NumPy ground truth).
    N, c_in, H, W = x.shape
    _, c_out, K, _ = w.shape
    out = np.zeros((N, c_out, H + K - 1, W + K - 1), np.float32)
    for nn in range(N):
        for ci in range(c_in):
            for co in range(c_out):
                for i in range(H):
                    for j in range(W):
                        out[nn, co, i:i + K, j:j + K] += x[nn, ci, i, j] * w[ci, co]
    out += b[None, :, None, None]
    return np.clip(out, MIN_VALUE, MAX_VALUE)


if __name__ == "__main__":
    key = jax.random.PRNGKey(0)
    kx, kw_, kb = jax.random.split(key, 3)

    # Module implies C_in=C_out=3, K=3, spatial 16x16; batch=2 exercises the
    # batched single-step kernel.
    N, C_IN, C_OUT, K, H, W = 2, 3, 3, 3, 16, 16
    x = jax.random.normal(kx, (N, C_IN, H, W), dtype=jnp.float32)
    # PyTorch ConvTranspose2d weight layout: (in_channels, out_channels, kH, kW).
    weight = 0.5 * jax.random.normal(kw_, (C_IN, C_OUT, K, K), dtype=jnp.float32)
    # Bias centered between the clamp bounds so both clamp sides are exercised.
    bias = 13.0 + jax.random.normal(kb, (C_OUT,), dtype=jnp.float32)

    y = conv_transpose_clamp(x, weight, bias)
    y = jax.block_until_ready(y)

    ref = _ref_numpy(np.asarray(x), np.asarray(weight), np.asarray(bias))
    np.testing.assert_allclose(np.asarray(y), ref, rtol=1e-5, atol=1e-5)

    print("KERNEL_OK")
</pallas_src>

<mosaic_0001>
module attributes {stable_mosaic.version = 11 : i64} {
  func.func @_convT_clamp_kernel(%arg0: i32, %arg1: memref<2x3x16x16xf32, #tpu.memory_space<vmem>>, %arg2: memref<81xf32, #tpu.memory_space<smem>>, %arg3: memref<3xf32, #tpu.memory_space<smem>>, %arg4: memref<2x3x18x18xf32, #tpu.memory_space<vmem>>, %arg5: memref<2x3x20x20xf32, #tpu.memory_space<vmem>>) attributes {dimension_semantics = [#tpu.dimension_semantics<arbitrary>], iteration_bounds = array<i64: 1>, scalar_prefetch = 0 : i64, scratch_operands = 1 : i64, tpu.core_type = #tpu.core_type<tc>, window_params = [{pipeline_mode = #tpu.pipeline_mode<synchronous>, transform_indices = @transform_0, window_bounds = array<i64: 2, 3, 16, 16>}, {transform_indices = @transform_1, window_bounds = array<i64: 81>}, {transform_indices = @transform_2, window_bounds = array<i64: 3>}, {pipeline_mode = #tpu.pipeline_mode<synchronous>, transform_indices = @transform_3, window_bounds = array<i64: 2, 3, 18, 18>}]} {
    %cst = arith.constant 0.000000e+00 : f32
    %0 = vector.broadcast %cst : f32 to vector<2x3x20x20xf32>
    %c0 = arith.constant 0 : index
    %c0_0 = arith.constant 0 : index
    %c0_1 = arith.constant 0 : index
    %c0_2 = arith.constant 0 : index
    %1 = vector.load %arg5[%c0, %c0_0, %c0_1, %c0_2] : memref<2x3x20x20xf32, #tpu.memory_space<vmem>>, vector<2x3x20x20xf32>
    tpu.vector_store %arg5[%c0, %c0_0, %c0_1, %c0_2], %0 {strides = array<i32>} : memref<2x3x20x20xf32, #tpu.memory_space<vmem>>, vector<2x3x20x20xf32>,
    %c0_3 = arith.constant 0 : index
    %c0_4 = arith.constant 0 : index
    %c0_5 = arith.constant 0 : index
    %c0_6 = arith.constant 0 : index
    %2 = vector.load %arg1[%c0_3, %c0_4, %c0_5, %c0_6] : memref<2x3x16x16xf32, #tpu.memory_space<vmem>>, vector<1x1x16x16xf32>
    %3 = vector.shape_cast %2 : vector<1x1x16x16xf32> to vector<16x16xf32>
    %c0_7 = arith.constant 0 : index
    %c0_8 = arith.constant 0 : index
    %c2 = arith.constant 2 : index
    %c2_9 = arith.constant 2 : index
    %4 = vector.load %arg5[%c0_7, %c0_8, %c2, %c2_9] : memref<2x3x20x20xf32, #tpu.memory_space<vmem>>, vector<1x1x16x16xf32>
    %5 = vector.shape_cast %4 : vector<1x1x16x16xf32> to vector<16x16xf32>
    %6 = vector.shape_cast %3 : vector<16x16xf32> to vector<1x1x16x16xf32>
    tpu.vector_store %arg5[%c0_7, %c0_8, %c2, %c2_9], %6 {strides = array<i32>} : memref<2x3x20x20xf32, #tpu.memory_space<vmem>>, vector<1x1x16x16xf32>,
    %c0_10 = arith.constant 0 : index
    %c1 = arith.constant 1 : index
    %c0_11 = arith.constant 0 : index
    %c0_12 = arith.constant 0 : index
    %7 = vector.load %arg1[%c0_10, %c1, %c0_11, %c0_12] : memref<2x3x16x16xf32, #tpu.memory_space<vmem>>, vector<1x1x16x16xf32>
    %8 = vector.shape_cast %7 : vector<1x1x16x16xf32> to vector<16x16xf32>
    %c0_13 = arith.constant 0 : index
    %c1_14 = arith.constant 1 : index
    %c2_15 = arith.constant 2 : index
    %c2_16 = arith.constant 2 : index
    %9 = vector.load %arg5[%c0_13, %c1_14, %c2_15, %c2_16] : memref<2x3x20x20xf32, #tpu.memory_space<vmem>>, vector<1x1x16x16xf32>
    %10 = vector.shape_cast %9 : vector<1x1x16x16xf32> to vector<16x16xf32>
    %11 = vector.shape_cast %8 : vector<16x16xf32> to vector<1x1x16x16xf32>
    tpu.vector_store %arg5[%c0_13, %c1_14, %c2_15, %c2_16], %11 {strides = array<i32>} : memref<2x3x20x20xf32, #tpu.memory_space<vmem>>, vector<1x1x16x16xf32>,
    %c0_17 = arith.constant 0 : index
    %c2_18 = arith.constant 2 : index
    %c0_19 = arith.constant 0 : index
    %c0_20 = arith.constant 0 : index
    %12 = vector.load %arg1[%c0_17, %c2_18, %c0_19, %c0_20] : memref<2x3x16x16xf32, #tpu.memory_space<vmem>>, vector<1x1x16x16xf32>
    %13 = vector.shape_cast %12 : vector<1x1x16x16xf32> to vector<16x16xf32>
    %c0_21 = arith.constant 0 : index
    %c2_22 = arith.constant 2 : index
    %c2_23 = arith.constant 2 : index
    %c2_24 = arith.constant 2 : index
    %14 = vector.load %arg5[%c0_21, %c2_22, %c2_23, %c2_24] : memref<2x3x20x20xf32, #tpu.memory_space<vmem>>, vector<1x1x16x16xf32>
    %15 = vector.shape_cast %14 : vector<1x1x16x16xf32> to vector<16x16xf32>
    %16 = vector.shape_cast %13 : vector<16x16xf32> to vector<1x1x16x16xf32>
    tpu.vector_store %arg5[%c0_21, %c2_22, %c2_23, %c2_24], %16 {strides = array<i32>} : memref<2x3x20x20xf32, #tpu.memory_space<vmem>>, vector<1x1x16x16xf32>,
    %c1_25 = arith.constant 1 : index
    %c0_26 = arith.constant 0 : index
    %c0_27 = arith.constant 0 : index
    %c0_28 = arith.constant 0 : index
    %17 = vector.load %arg1[%c1_25, %c0_26, %c0_27, %c0_28] : memref<2x3x16x16xf32, #tpu.memory_space<vmem>>, vector<1x1x16x16xf32>
    %18 = vector.shape_cast %17 : vector<1x1x16x16xf32> to vector<16x16xf32>
    %c1_29 = arith.constant 1 : index
    %c0_30 = arith.constant 0 : index
    %c2_31 = arith.constant 2 : index
    %c2_32 = arith.constant 2 : index
    %19 = vector.load %arg5[%c1_29, %c0_30, %c2_31, %c2_32] : memref<2x3x20x20xf32, #tpu.memory_space<vmem>>, vector<1x1x16x16xf32>
    %20 = vector.shape_cast %19 : vector<1x1x16x16xf32> to vector<16x16xf32>
    %21 = vector.shape_cast %18 : vector<16x16xf32> to vector<1x1x16x16xf32>
    tpu.vector_store %arg5[%c1_29, %c0_30, %c2_31, %c2_32], %21 {strides = array<i32>} : memref<2x3x20x20xf32, #tpu.memory_space<vmem>>, vector<1x1x16x16xf32>,
    %c1_33 = arith.constant 1 : index
    %c1_34 = arith.constant 1 : index
    %c0_35 = arith.constant 0 : index
    %c0_36 = arith.constant 0 : index
    %22 = vector.load %arg1[%c1_33, %c1_34, %c0_35, %c0_36] : memref<2x3x16x16xf32, #tpu.memory_space<vmem>>, vector<1x1x16x16xf32>
    %23 = vector.shape_cast %22 : vector<1x1x16x16xf32> to vector<16x16xf32>
    %c1_37 = arith.constant 1 : index
    %c1_38 = arith.constant 1 : index
    %c2_39 = arith.constant 2 : index
    %c2_40 = arith.constant 2 : index
    %24 = vector.load %arg5[%c1_37, %c1_38, %c2_39, %c2_40] : memref<2x3x20x20xf32, #tpu.memory_space<vmem>>, vector<1x1x16x16xf32>
    %25 = vector.shape_cast %24 : vector<1x1x16x16xf32> to vector<16x16xf32>
    %26 = vector.shape_cast %23 : vector<16x16xf32> to vector<1x1x16x16xf32>
    tpu.vector_store %arg5[%c1_37, %c1_38, %c2_39, %c2_40], %26 {strides = array<i32>} : memref<2x3x20x20xf32, #tpu.memory_space<vmem>>, vector<1x1x16x16xf32>,
    %c1_41 = arith.constant 1 : index
    %c2_42 = arith.constant 2 : index
    %c0_43 = arith.constant 0 : index
    %c0_44 = arith.constant 0 : index
    %27 = vector.load %arg1[%c1_41, %c2_42, %c0_43, %c0_44] : memref<2x3x16x16xf32, #tpu.memory_space<vmem>>, vector<1x1x16x16xf32>
    %28 = vector.shape_cast %27 : vector<1x1x16x16xf32> to vector<16x16xf32>
    %c1_45 = arith.constant 1 : index
    %c2_46 = arith.constant 2 : index
    %c2_47 = arith.constant 2 : index
    %c2_48 = arith.constant 2 : index
    %29 = vector.load %arg5[%c1_45, %c2_46, %c2_47, %c2_48] : memref<2x3x20x20xf32, #tpu.memory_space<vmem>>, vector<1x1x16x16xf32>
    %30 = vector.shape_cast %29 : vector<1x1x16x16xf32> to vector<16x16xf32>
    %31 = vector.shape_cast %28 : vector<16x16xf32> to vector<1x1x16x16xf32>
    tpu.vector_store %arg5[%c1_45, %c2_46, %c2_47, %c2_48], %31 {strides = array<i32>} : memref<2x3x20x20xf32, #tpu.memory_space<vmem>>, vector<1x1x16x16xf32>,
    %c0_49 = arith.constant 0 : index
    %32 = memref.load %arg3[%c0_49] : memref<3xf32, #tpu.memory_space<smem>>
    %33 = vector.broadcast %32 : f32 to vector<18x18xf32>
    %c1_50 = arith.constant 1 : index
    %34 = memref.load %arg3[%c1_50] : memref<3xf32, #tpu.memory_space<smem>>
    %35 = vector.broadcast %34 : f32 to vector<18x18xf32>
    %c2_51 = arith.constant 2 : index
    %36 = memref.load %arg3[%c2_51] : memref<3xf32, #tpu.memory_space<smem>>
    %37 = vector.broadcast %36 : f32 to vector<18x18xf32>
    %c0_52 = arith.constant 0 : index
    %c0_53 = arith.constant 0 : index
    %c0_54 = arith.constant 0 : index
    %c0_55 = arith.constant 0 : index
    %38 = vector.load %arg5[%c0_52, %c0_53, %c0_54, %c0_55] : memref<2x3x20x20xf32, #tpu.memory_space<vmem>>, vector<1x1x18x18xf32>
    %39 = vector.shape_cast %38 : vector<1x1x18x18xf32> to vector<18x18xf32>
    %c8 = arith.constant 8 : index
    %40 = memref.load %arg2[%c8] : memref<81xf32, #tpu.memory_space<smem>>
    %41 = vector.broadcast %40 : f32 to vector<18x18xf32>
    %42 = arith.mulf %41, %39 : vector<18x18xf32>
    %43 = arith.addf %33, %42 : vector<18x18xf32>
    %c17 = arith.constant 17 : index
    %44 = memref.load %arg2[%c17] : memref<81xf32, #tpu.memory_space<smem>>
    %45 = vector.broadcast %44 : f32 to vector<18x18xf32>
    %46 = arith.mulf %45, %39 : vector<18x18xf32>
    %47 = arith.addf %35, %46 : vector<18x18xf32>
    %c26 = arith.constant 26 : index
    %48 = memref.load %arg2[%c26] : memref<81xf32, #tpu.memory_space<smem>>
    %49 = vector.broadcast %48 : f32 to vector<18x18xf32>
    %50 = arith.mulf %49, %39 : vector<18x18xf32>
    %51 = arith.addf %37, %50 : vector<18x18xf32>
    %c0_56 = arith.constant 0 : index
    %c0_57 = arith.constant 0 : index
    %c0_58 = arith.constant 0 : index
    %c1_59 = arith.constant 1 : index
    %52 = vector.load %arg5[%c0_56, %c0_57, %c0_58, %c1_59] : memref<2x3x20x20xf32, #tpu.memory_space<vmem>>, vector<1x1x18x18xf32>
    %53 = vector.shape_cast %52 : vector<1x1x18x18xf32> to vector<18x18xf32>
    %c7 = arith.constant 7 : index
    %54 = memref.load %arg2[%c7] : memref<81xf32, #tpu.memory_space<smem>>
    %55 = vector.broadcast %54 : f32 to vector<18x18xf32>
    %56 = arith.mulf %55, %53 : vector<18x18xf32>
    %57 = arith.addf %43, %56 : vector<18x18xf32>
    %c16 = arith.constant 16 : index
    %58 = memref.load %arg2[%c16] : memref<81xf32, #tpu.memory_space<smem>>
    %59 = vector.broadcast %58 : f32 to vector<18x18xf32>
    %60 = arith.mulf %59, %53 : vector<18x18xf32>
    %61 = arith.addf %47, %60 : vector<18x18xf32>
    %c25 = arith.constant 25 : index
    %62 = memref.load %arg2[%c25] : memref<81xf32, #tpu.memory_space<smem>>
    %63 = vector.broadcast %62 : f32 to vector<18x18xf32>
    %64 = arith.mulf %63, %53 : vector<18x18xf32>
    %65 = arith.addf %51, %64 : vector<18x18xf32>
    %c0_60 = arith.constant 0 : index
    %c0_61 = arith.constant 0 : index
    %c0_62 = arith.constant 0 : index
    %c2_63 = arith.constant 2 : index
    %66 = vector.load %arg5[%c0_60, %c0_61, %c0_62, %c2_63] : memref<2x3x20x20xf32, #tpu.memory_space<vmem>>, vector<1x1x18x18xf32>
    %67 = vector.shape_cast %66 : vector<1x1x18x18xf32> to vector<18x18xf32>
    %c6 = arith.constant 6 : index
    %68 = memref.load %arg2[%c6] : memref<81xf32, #tpu.memory_space<smem>>
    %69 = vector.broadcast %68 : f32 to vector<18x18xf32>
    %70 = arith.mulf %69, %67 : vector<18x18xf32>
    %71 = arith.addf %57, %70 : vector<18x18xf32>
    %c15 = arith.constant 15 : index
    %72 = memref.load %arg2[%c15] : memref<81xf32, #tpu.memory_space<smem>>
    %73 = vector.broadcast %72 : f32 to vector<18x18xf32>
    %74 = arith.mulf %73, %67 : vector<18x18xf32>
    %75 = arith.addf %61, %74 : vector<18x18xf32>
    %c24 = arith.constant 24 : index
    %76 = memref.load %arg2[%c24] : memref<81xf32, #tpu.memory_space<smem>>
    %77 = vector.broadcast %76 : f32 to vector<18x18xf32>
    %78 = arith.mulf %77, %67 : vector<18x18xf32>
    %79 = arith.addf %65, %78 : vector<18x18xf32>
    %c0_64 = arith.constant 0 : index
    %c0_65 = arith.constant 0 : index
    %c1_66 = arith.constant 1 : index
    %c0_67 = arith.constant 0 : index
    %80 = vector.load %arg5[%c0_64, %c0_65, %c1_66, %c0_67] : memref<2x3x20x20xf32, #tpu.memory_space<vmem>>, vector<1x1x18x18xf32>
    %81 = vector.shape_cast %80 : vector<1x1x18x18xf32> to vector<18x18xf32>
    %c5 = arith.constant 5 : index
    %82 = memref.load %arg2[%c5] : memref<81xf32, #tpu.memory_space<smem>>
    %83 = vector.broadcast %82 : f32 to vector<18x18xf32>
    %84 = arith.mulf %83, %81 : vector<18x18xf32>
    %85 = arith.addf %71, %84 : vector<18x18xf32>
    %c14 = arith.constant 14 : index
    %86 = memref.load %arg2[%c14] : memref<81xf32, #tpu.memory_space<smem>>
    %87 = vector.broadcast %86 : f32 to vector<18x18xf32>
    %88 = arith.mulf %87, %81 : vector<18x18xf32>
    %89 = arith.addf %75, %88 : vector<18x18xf32>
    %c23 = arith.constant 23 : index
    %90 = memref.load %arg2[%c23] : memref<81xf32, #tpu.memory_space<smem>>
    %91 = vector.broadcast %90 : f32 to vector<18x18xf32>
    %92 = arith.mulf %91, %81 : vector<18x18xf32>
    %93 = arith.addf %79, %92 : vector<18x18xf32>
    %c0_68 = arith.constant 0 : index
    %c0_69 = arith.constant 0 : index
    %c1_70 = arith.constant 1 : index
    %c1_71 = arith.constant 1 : index
    %94 = vector.load %arg5[%c0_68, %c0_69, %c1_70, %c1_71] : memref<2x3x20x20xf32, #tpu.memory_space<vmem>>, vector<1x1x18x18xf32>
    %95 = vector.shape_cast %94 : vector<1x1x18x18xf32> to vector<18x18xf32>
    %c4 = arith.constant 4 : index
    %96 = memref.load %arg2[%c4] : memref<81xf32, #tpu.memory_space<smem>>
    %97 = vector.broadcast %96 : f32 to vector<18x18xf32>
    %98 = arith.mulf %97, %95 : vector<18x18xf32>
    %99 = arith.addf %85, %98 : vector<18x18xf32>
    %c13 = arith.constant 13 : index
    %100 = memref.load %arg2[%c13] : memref<81xf32, #tpu.memory_space<smem>>
    %101 = vector.broadcast %100 : f32 to vector<18x18xf32>
    %102 = arith.mulf %101, %95 : vector<18x18xf32>
    %103 = arith.addf %89, %102 : vector<18x18xf32>
    %c22 = arith.constant 22 : index
    %104 = memref.load %arg2[%c22] : memref<81xf32, #tpu.memory_space<smem>>
    %105 = vector.broadcast %104 : f32 to vector<18x18xf32>
    %106 = arith.mulf %105, %95 : vector<18x18xf32>
    %107 = arith.addf %93, %106 : vector<18x18xf32>
    %c0_72 = arith.constant 0 : index
    %c0_73 = arith.constant 0 : index
    %c1_74 = arith.constant 1 : index
    %c2_75 = arith.constant 2 : index
    %108 = vector.load %arg5[%c0_72, %c0_73, %c1_74, %c2_75] : memref<2x3x20x20xf32, #tpu.memory_space<vmem>>, vector<1x1x18x18xf32>
    %109 = vector.shape_cast %108 : vector<1x1x18x18xf32> to vector<18x18xf32>
    %c3 = arith.constant 3 : index
    %110 = memref.load %arg2[%c3] : memref<81xf32, #tpu.memory_space<smem>>
    %111 = vector.broadcast %110 : f32 to vector<18x18xf32>
    %112 = arith.mulf %111, %109 : vector<18x18xf32>
    %113 = arith.addf %99, %112 : vector<18x18xf32>
    %c12 = arith.constant 12 : index
    %114 = memref.load %arg2[%c12] : memref<81xf32, #tpu.memory_space<smem>>
    %115 = vector.broadcast %114 : f32 to vector<18x18xf32>
    %116 = arith.mulf %115, %109 : vector<18x18xf32>
    %117 = arith.addf %103, %116 : vector<18x18xf32>
    %c21 = arith.constant 21 : index
    %118 = memref.load %arg2[%c21] : memref<81xf32, #tpu.memory_space<smem>>
    %119 = vector.broadcast %118 : f32 to vector<18x18xf32>
    %120 = arith.mulf %119, %109 : vector<18x18xf32>
    %121 = arith.addf %107, %120 : vector<18x18xf32>
    %c0_76 = arith.constant 0 : index
    %c0_77 = arith.constant 0 : index
    %c2_78 = arith.constant 2 : index
    %c0_79 = arith.constant 0 : index
    %122 = vector.load %arg5[%c0_76, %c0_77, %c2_78, %c0_79] : memref<2x3x20x20xf32, #tpu.memory_space<vmem>>, vector<1x1x18x18xf32>
    %123 = vector.shape_cast %122 : vector<1x1x18x18xf32> to vector<18x18xf32>
    %c2_80 = arith.constant 2 : index
    %124 = memref.load %arg2[%c2_80] : memref<81xf32, #tpu.memory_space<smem>>
    %125 = vector.broadcast %124 : f32 to vector<18x18xf32>
    %126 = arith.mulf %125, %123 : vector<18x18xf32>
    %127 = arith.addf %113, %126 : vector<18x18xf32>
    %c11 = arith.constant 11 : index
    %128 = memref.load %arg2[%c11] : memref<81xf32, #tpu.memory_space<smem>>
    %129 = vector.broadcast %128 : f32 to vector<18x18xf32>
    %130 = arith.mulf %129, %123 : vector<18x18xf32>
    %131 = arith.addf %117, %130 : vector<18x18xf32>
    %c20 = arith.constant 20 : index
    %132 = memref.load %arg2[%c20] : memref<81xf32, #tpu.memory_space<smem>>
    %133 = vector.broadcast %132 : f32 to vector<18x18xf32>
    %134 = arith.mulf %133, %123 : vector<18x18xf32>
    %135 = arith.addf %121, %134 : vector<18x18xf32>
    %c0_81 = arith.constant 0 : index
    %c0_82 = arith.constant 0 : index
    %c2_83 = arith.constant 2 : index
    %c1_84 = arith.constant 1 : index
    %136 = vector.load %arg5[%c0_81, %c0_82, %c2_83, %c1_84] : memref<2x3x20x20xf32, #tpu.memory_space<vmem>>, vector<1x1x18x18xf32>
    %137 = vector.shape_cast %136 : vector<1x1x18x18xf32> to vector<18x18xf32>
    %c1_85 = arith.constant 1 : index
    %138 = memref.load %arg2[%c1_85] : memref<81xf32, #tpu.memory_space<smem>>
    %139 = vector.broadcast %138 : f32 to vector<18x18xf32>
    %140 = arith.mulf %139, %137 : vector<18x18xf32>
    %141 = arith.addf %127, %140 : vector<18x18xf32>
    %c10 = arith.constant 10 : index
    %142 = memref.load %arg2[%c10] : memref<81xf32, #tpu.memory_space<smem>>
    %143 = vector.broadcast %142 : f32 to vector<18x18xf32>
    %144 = arith.mulf %143, %137 : vector<18x18xf32>
    %145 = arith.addf %131, %144 : vector<18x18xf32>
    %c19 = arith.constant 19 : index
    %146 = memref.load %arg2[%c19] : memref<81xf32, #tpu.memory_space<smem>>
    %147 = vector.broadcast %146 : f32 to vector<18x18xf32>
    %148 = arith.mulf %147, %137 : vector<18x18xf32>
    %149 = arith.addf %135, %148 : vector<18x18xf32>
    %c0_86 = arith.constant 0 : index
    %c0_87 = arith.constant 0 : index
    %c2_88 = arith.constant 2 : index
    %c2_89 = arith.constant 2 : index
    %150 = vector.load %arg5[%c0_86, %c0_87, %c2_88, %c2_89] : memref<2x3x20x20xf32, #tpu.memory_space<vmem>>, vector<1x1x18x18xf32>
    %151 = vector.shape_cast %150 : vector<1x1x18x18xf32> to vector<18x18xf32>
    %c0_90 = arith.constant 0 : index
    %152 = memref.load %arg2[%c0_90] : memref<81xf32, #tpu.memory_space<smem>>
    %153 = vector.broadcast %152 : f32 to vector<18x18xf32>
    %154 = arith.mulf %153, %151 : vector<18x18xf32>
    %155 = arith.addf %141, %154 : vector<18x18xf32>
    %c9 = arith.constant 9 : index
    %156 = memref.load %arg2[%c9] : memref<81xf32, #tpu.memory_space<smem>>
    %157 = vector.broadcast %156 : f32 to vector<18x18xf32>
    %158 = arith.mulf %157, %151 : vector<18x18xf32>
    %159 = arith.addf %145, %158 : vector<18x18xf32>
    %c18 = arith.constant 18 : index
    %160 = memref.load %arg2[%c18] : memref<81xf32, #tpu.memory_space<smem>>
    %161 = vector.broadcast %160 : f32 to vector<18x18xf32>
    %162 = arith.mulf %161, %151 : vector<18x18xf32>
    %163 = arith.addf %149, %162 : vector<18x18xf32>
    %c0_91 = arith.constant 0 : index
    %c1_92 = arith.constant 1 : index
    %c0_93 = arith.constant 0 : index
    %c0_94 = arith.constant 0 : index
    %164 = vector.load %arg5[%c0_91, %c1_92, %c0_93, %c0_94] : memref<2x3x20x20xf32, #tpu.memory_space<vmem>>, vector<1x1x18x18xf32>
    %165 = vector.shape_cast %164 : vector<1x1x18x18xf32> to vector<18x18xf32>
    %c35 = arith.constant 35 : index
    %166 = memref.load %arg2[%c35] : memref<81xf32, #tpu.memory_space<smem>>
    %167 = vector.broadcast %166 : f32 to vector<18x18xf32>
    %168 = arith.mulf %167, %165 : vector<18x18xf32>
    %169 = arith.addf %155, %168 : vector<18x18xf32>
    %c44 = arith.constant 44 : index
    %170 = memref.load %arg2[%c44] : memref<81xf32, #tpu.memory_space<smem>>
    %171 = vector.broadcast %170 : f32 to vector<18x18xf32>
    %172 = arith.mulf %171, %165 : vector<18x18xf32>
    %173 = arith.addf %159, %172 : vector<18x18xf32>
    %c53 = arith.constant 53 : index
    %174 = memref.load %arg2[%c53] : memref<81xf32, #tpu.memory_space<smem>>
    %175 = vector.broadcast %174 : f32 to vector<18x18xf32>
    %176 = arith.mulf %175, %165 : vector<18x18xf32>
    %177 = arith.addf %163, %176 : vector<18x18xf32>
    %c0_95 = arith.constant 0 : index
    %c1_96 = arith.constant 1 : index
    %c0_97 = arith.constant 0 : index
    %c1_98 = arith.constant 1 : index
    %178 = vector.load %arg5[%c0_95, %c1_96, %c0_97, %c1_98] : memref<2x3x20x20xf32, #tpu.memory_space<vmem>>, vector<1x1x18x18xf32>
    %179 = vector.shape_cast %178 : vector<1x1x18x18xf32> to vector<18x18xf32>
    %c34 = arith.constant 34 : index
    %180 = memref.load %arg2[%c34] : memref<81xf32, #tpu.memory_space<smem>>
    %181 = vector.broadcast %180 : f32 to vector<18x18xf32>
    %182 = arith.mulf %181, %179 : vector<18x18xf32>
    %183 = arith.addf %169, %182 : vector<18x18xf32>
    %c43 = arith.constant 43 : index
    %184 = memref.load %arg2[%c43] : memref<81xf32, #tpu.memory_space<smem>>
    %185 = vector.broadcast %184 : f32 to vector<18x18xf32>
    %186 = arith.mulf %185, %179 : vector<18x18xf32>
    %187 = arith.addf %173, %186 : vector<18x18xf32>
    %c52 = arith.constant 52 : index
    %188 = memref.load %arg2[%c52] : memref<81xf32, #tpu.memory_space<smem>>
    %189 = vector.broadcast %188 : f32 to vector<18x18xf32>
    %190 = arith.mulf %189, %179 : vector<18x18xf32>
    %191 = arith.addf %177, %190 : vector<18x18xf32>
    %c0_99 = arith.constant 0 : index
    %c1_100 = arith.constant 1 : index
    %c0_101 = arith.constant 0 : index
    %c2_102 = arith.constant 2 : index
    %192 = vector.load %arg5[%c0_99, %c1_100, %c0_101, %c2_102] : memref<2x3x20x20xf32, #tpu.memory_space<vmem>>, vector<1x1x18x18xf32>
    %193 = vector.shape_cast %192 : vector<1x1x18x18xf32> to vector<18x18xf32>
    %c33 = arith.constant 33 : index
    %194 = memref.load %arg2[%c33] : memref<81xf32, #tpu.memory_space<smem>>
    %195 = vector.broadcast %194 : f32 to vector<18x18xf32>
    %196 = arith.mulf %195, %193 : vector<18x18xf32>
    %197 = arith.addf %183, %196 : vector<18x18xf32>
    %c42 = arith.constant 42 : index
    %198 = memref.load %arg2[%c42] : memref<81xf32, #tpu.memory_space<smem>>
    %199 = vector.broadcast %198 : f32 to vector<18x18xf32>
    %200 = arith.mulf %199, %193 : vector<18x18xf32>
    %201 = arith.addf %187, %200 : vector<18x18xf32>
    %c51 = arith.constant 51 : index
    %202 = memref.load %arg2[%c51] : memref<81xf32, #tpu.memory_space<smem>>
    %203 = vector.broadcast %202 : f32 to vector<18x18xf32>
    %204 = arith.mulf %203, %193 : vector<18x18xf32>
    %205 = arith.addf %191, %204 : vector<18x18xf32>
    %c0_103 = arith.constant 0 : index
    %c1_104 = arith.constant 1 : index
    %c1_105 = arith.constant 1 : index
    %c0_106 = arith.constant 0 : index
    %206 = vector.load %arg5[%c0_103, %c1_104, %c1_105, %c0_106] : memref<2x3x20x20xf32, #tpu.memory_space<vmem>>, vector<1x1x18x18xf32>
    %207 = vector.shape_cast %206 : vector<1x1x18x18xf32> to vector<18x18xf32>
    %c32 = arith.constant 32 : index
    %208 = memref.load %arg2[%c32] : memref<81xf32, #tpu.memory_space<smem>>
    %209 = vector.broadcast %208 : f32 to vector<18x18xf32>
    %210 = arith.mulf %209, %207 : vector<18x18xf32>
    %211 = arith.addf %197, %210 : vector<18x18xf32>
    %c41 = arith.constant 41 : index
    %212 = memref.load %arg2[%c41] : memref<81xf32, #tpu.memory_space<smem>>
    %213 = vector.broadcast %212 : f32 to vector<18x18xf32>
    %214 = arith.mulf %213, %207 : vector<18x18xf32>
    %215 = arith.addf %201, %214 : vector<18x18xf32>
    %c50 = arith.constant 50 : index
    %216 = memref.load %arg2[%c50] : memref<81xf32, #tpu.memory_space<smem>>
    %217 = vector.broadcast %216 : f32 to vector<18x18xf32>
    %218 = arith.mulf %217, %207 : vector<18x18xf32>
    %219 = arith.addf %205, %218 : vector<18x18xf32>
    %c0_107 = arith.constant 0 : index
    %c1_108 = arith.constant 1 : index
    %c1_109 = arith.constant 1 : index
    %c1_110 = arith.constant 1 : index
    %220 = vector.load %arg5[%c0_107, %c1_108, %c1_109, %c1_110] : memref<2x3x20x20xf32, #tpu.memory_space<vmem>>, vector<1x1x18x18xf32>
    %221 = vector.shape_cast %220 : vector<1x1x18x18xf32> to vector<18x18xf32>
    %c31 = arith.constant 31 : index
    %222 = memref.load %arg2[%c31] : memref<81xf32, #tpu.memory_space<smem>>
    %223 = vector.broadcast %222 : f32 to vector<18x18xf32>
    %224 = arith.mulf %223, %221 : vector<18x18xf32>
    %225 = arith.addf %211, %224 : vector<18x18xf32>
    %c40 = arith.constant 40 : index
    %226 = memref.load %arg2[%c40] : memref<81xf32, #tpu.memory_space<smem>>
    %227 = vector.broadcast %226 : f32 to vector<18x18xf32>
    %228 = arith.mulf %227, %221 : vector<18x18xf32>
    %229 = arith.addf %215, %228 : vector<18x18xf32>
    %c49 = arith.constant 49 : index
    %230 = memref.load %arg2[%c49] : memref<81xf32, #tpu.memory_space<smem>>
    %231 = vector.broadcast %230 : f32 to vector<18x18xf32>
    %232 = arith.mulf %231, %221 : vector<18x18xf32>
    %233 = arith.addf %219, %232 : vector<18x18xf32>
    %c0_111 = arith.constant 0 : index
    %c1_112 = arith.constant 1 : index
    %c1_113 = arith.constant 1 : index
    %c2_114 = arith.constant 2 : index
    %234 = vector.load %arg5[%c0_111, %c1_112, %c1_113, %c2_114] : memref<2x3x20x20xf32, #tpu.memory_space<vmem>>, vector<1x1x18x18xf32>
    %235 = vector.shape_cast %234 : vector<1x1x18x18xf32> to vector<18x18xf32>
    %c30 = arith.constant 30 : index
    %236 = memref.load %arg2[%c30] : memref<81xf32, #tpu.memory_space<smem>>
    %237 = vector.broadcast %236 : f32 to vector<18x18xf32>
    %238 = arith.mulf %237, %235 : vector<18x18xf32>
    %239 = arith.addf %225, %238 : vector<18x18xf32>
    %c39 = arith.constant 39 : index
    %240 = memref.load %arg2[%c39] : memref<81xf32, #tpu.memory_space<smem>>
    %241 = vector.broadcast %240 : f32 to vector<18x18xf32>
    %242 = arith.mulf %241, %235 : vector<18x18xf32>
    %243 = arith.addf %229, %242 : vector<18x18xf32>
    %c48 = arith.constant 48 : index
    %244 = memref.load %arg2[%c48] : memref<81xf32, #tpu.memory_space<smem>>
    %245 = vector.broadcast %244 : f32 to vector<18x18xf32>
    %246 = arith.mulf %245, %235 : vector<18x18xf32>
    %247 = arith.addf %233, %246 : vector<18x18xf32>
    %c0_115 = arith.constant 0 : index
    %c1_116 = arith.constant 1 : index
    %c2_117 = arith.constant 2 : index
    %c0_118 = arith.constant 0 : index
    %248 = vector.load %arg5[%c0_115, %c1_116, %c2_117, %c0_118] : memref<2x3x20x20xf32, #tpu.memory_space<vmem>>, vector<1x1x18x18xf32>
    %249 = vector.shape_cast %248 : vector<1x1x18x18xf32> to vector<18x18xf32>
    %c29 = arith.constant 29 : index
    %250 = memref.load %arg2[%c29] : memref<81xf32, #tpu.memory_space<smem>>
    %251 = vector.broadcast %250 : f32 to vector<18x18xf32>
    %252 = arith.mulf %251, %249 : vector<18x18xf32>
    %253 = arith.addf %239, %252 : vector<18x18xf32>
    %c38 = arith.constant 38 : index
    %254 = memref.load %arg2[%c38] : memref<81xf32, #tpu.memory_space<smem>>
    %255 = vector.broadcast %254 : f32 to vector<18x18xf32>
    %256 = arith.mulf %255, %249 : vector<18x18xf32>
    %257 = arith.addf %243, %256 : vector<18x18xf32>
    %c47 = arith.constant 47 : index
    %258 = memref.load %arg2[%c47] : memref<81xf32, #tpu.memory_space<smem>>
    %259 = vector.broadcast %258 : f32 to vector<18x18xf32>
    %260 = arith.mulf %259, %249 : vector<18x18xf32>
    %261 = arith.addf %247, %260 : vector<18x18xf32>
    %c0_119 = arith.constant 0 : index
    %c1_120 = arith.constant 1 : index
    %c2_121 = arith.constant 2 : index
    %c1_122 = arith.constant 1 : index
    %262 = vector.load %arg5[%c0_119, %c1_120, %c2_121, %c1_122] : memref<2x3x20x20xf32, #tpu.memory_space<vmem>>, vector<1x1x18x18xf32>
    %263 = vector.shape_cast %262 : vector<1x1x18x18xf32> to vector<18x18xf32>
    %c28 = arith.constant 28 : index
    %264 = memref.load %arg2[%c28] : memref<81xf32, #tpu.memory_space<smem>>
    %265 = vector.broadcast %264 : f32 to vector<18x18xf32>
    %266 = arith.mulf %265, %263 : vector<18x18xf32>
    %267 = arith.addf %253, %266 : vector<18x18xf32>
    %c37 = arith.constant 37 : index
    %268 = memref.load %arg2[%c37] : memref<81xf32, #tpu.memory_space<smem>>
    %269 = vector.broadcast %268 : f32 to vector<18x18xf32>
    %270 = arith.mulf %269, %263 : vector<18x18xf32>
    %271 = arith.addf %257, %270 : vector<18x18xf32>
    %c46 = arith.constant 46 : index
    %272 = memref.load %arg2[%c46] : memref<81xf32, #tpu.memory_space<smem>>
    %273 = vector.broadcast %272 : f32 to vector<18x18xf32>
    %274 = arith.mulf %273, %263 : vector<18x18xf32>
    %275 = arith.addf %261, %274 : vector<18x18xf32>
    %c0_123 = arith.constant 0 : index
    %c1_124 = arith.constant 1 : index
    %c2_125 = arith.constant 2 : index
    %c2_126 = arith.constant 2 : index
    %276 = vector.load %arg5[%c0_123, %c1_124, %c2_125, %c2_126] : memref<2x3x20x20xf32, #tpu.memory_space<vmem>>, vector<1x1x18x18xf32>
    %277 = vector.shape_cast %276 : vector<1x1x18x18xf32> to vector<18x18xf32>
    %c27 = arith.constant 27 : index
    %278 = memref.load %arg2[%c27] : memref<81xf32, #tpu.memory_space<smem>>
    %279 = vector.broadcast %278 : f32 to vector<18x18xf32>
    %280 = arith.mulf %279, %277 : vector<18x18xf32>
    %281 = arith.addf %267, %280 : vector<18x18xf32>
    %c36 = arith.constant 36 : index
    %282 = memref.load %arg2[%c36] : memref<81xf32, #tpu.memory_space<smem>>
    %283 = vector.broadcast %282 : f32 to vector<18x18xf32>
    %284 = arith.mulf %283, %277 : vector<18x18xf32>
    %285 = arith.addf %271, %284 : vector<18x18xf32>
    %c45 = arith.constant 45 : index
    %286 = memref.load %arg2[%c45] : memref<81xf32, #tpu.memory_space<smem>>
    %287 = vector.broadcast %286 : f32 to vector<18x18xf32>
    %288 = arith.mulf %287, %277 : vector<18x18xf32>
    %289 = arith.addf %275, %288 : vector<18x18xf32>
    %c0_127 = arith.constant 0 : index
    %c2_128 = arith.constant 2 : index
    %c0_129 = arith.constant 0 : index
    %c0_130 = arith.constant 0 : index
    %290 = vector.load %arg5[%c0_127, %c2_128, %c0_129, %c0_130] : memref<2x3x20x20xf32, #tpu.memory_space<vmem>>, vector<1x1x18x18xf32>
    %291 = vector.shape_cast %290 : vector<1x1x18x18xf32> to vector<18x18xf32>
    %c62 = arith.constant 62 : index
    %292 = memref.load %arg2[%c62] : memref<81xf32, #tpu.memory_space<smem>>
    %293 = vector.broadcast %292 : f32 to vector<18x18xf32>
    %294 = arith.mulf %293, %291 : vector<18x18xf32>
    %295 = arith.addf %281, %294 : vector<18x18xf32>
    %c71 = arith.constant 71 : index
    %296 = memref.load %arg2[%c71] : memref<81xf32, #tpu.memory_space<smem>>
    %297 = vector.broadcast %296 : f32 to vector<18x18xf32>
    %298 = arith.mulf %297, %291 : vector<18x18xf32>
    %299 = arith.addf %285, %298 : vector<18x18xf32>
    %c80 = arith.constant 80 : index
    %300 = memref.load %arg2[%c80] : memref<81xf32, #tpu.memory_space<smem>>
    %301 = vector.broadcast %300 : f32 to vector<18x18xf32>
    %302 = arith.mulf %301, %291 : vector<18x18xf32>
    %303 = arith.addf %289, %302 : vector<18x18xf32>
    %c0_131 = arith.constant 0 : index
    %c2_132 = arith.constant 2 : index
    %c0_133 = arith.constant 0 : index
    %c1_134 = arith.constant 1 : index
    %304 = vector.load %arg5[%c0_131, %c2_132, %c0_133, %c1_134] : memref<2x3x20x20xf32, #tpu.memory_space<vmem>>, vector<1x1x18x18xf32>
    %305 = vector.shape_cast %304 : vector<1x1x18x18xf32> to vector<18x18xf32>
    %c61 = arith.constant 61 : index
    %306 = memref.load %arg2[%c61] : memref<81xf32, #tpu.memory_space<smem>>
    %307 = vector.broadcast %306 : f32 to vector<18x18xf32>
    %308 = arith.mulf %307, %305 : vector<18x18xf32>
    %309 = arith.addf %295, %308 : vector<18x18xf32>
    %c70 = arith.constant 70 : index
    %310 = memref.load %arg2[%c70] : memref<81xf32, #tpu.memory_space<smem>>
    %311 = vector.broadcast %310 : f32 to vector<18x18xf32>
    %312 = arith.mulf %311, %305 : vector<18x18xf32>
    %313 = arith.addf %299, %312 : vector<18x18xf32>
    %c79 = arith.constant 79 : index
    %314 = memref.load %arg2[%c79] : memref<81xf32, #tpu.memory_space<smem>>
    %315 = vector.broadcast %314 : f32 to vector<18x18xf32>
    %316 = arith.mulf %315, %305 : vector<18x18xf32>
    %317 = arith.addf %303, %316 : vector<18x18xf32>
    %c0_135 = arith.constant 0 : index
    %c2_136 = arith.constant 2 : index
    %c0_137 = arith.constant 0 : index
    %c2_138 = arith.constant 2 : index
    %318 = vector.load %arg5[%c0_135, %c2_136, %c0_137, %c2_138] : memref<2x3x20x20xf32, #tpu.memory_space<vmem>>, vector<1x1x18x18xf32>
    %319 = vector.shape_cast %318 : vector<1x1x18x18xf32> to vector<18x18xf32>
    %c60 = arith.constant 60 : index
    %320 = memref.load %arg2[%c60] : memref<81xf32, #tpu.memory_space<smem>>
    %321 = vector.broadcast %320 : f32 to vector<18x18xf32>
    %322 = arith.mulf %321, %319 : vector<18x18xf32>
    %323 = arith.addf %309, %322 : vector<18x18xf32>
    %c69 = arith.constant 69 : index
    %324 = memref.load %arg2[%c69] : memref<81xf32, #tpu.memory_space<smem>>
    %325 = vector.broadcast %324 : f32 to vector<18x18xf32>
    %326 = arith.mulf %325, %319 : vector<18x18xf32>
    %327 = arith.addf %313, %326 : vector<18x18xf32>
    %c78 = arith.constant 78 : index
    %328 = memref.load %arg2[%c78] : memref<81xf32, #tpu.memory_space<smem>>
    %329 = vector.broadcast %328 : f32 to vector<18x18xf32>
    %330 = arith.mulf %329, %319 : vector<18x18xf32>
    %331 = arith.addf %317, %330 : vector<18x18xf32>
    %c0_139 = arith.constant 0 : index
    %c2_140 = arith.constant 2 : index
    %c1_141 = arith.constant 1 : index
    %c0_142 = arith.constant 0 : index
    %332 = vector.load %arg5[%c0_139, %c2_140, %c1_141, %c0_142] : memref<2x3x20x20xf32, #tpu.memory_space<vmem>>, vector<1x1x18x18xf32>
    %333 = vector.shape_cast %332 : vector<1x1x18x18xf32> to vector<18x18xf32>
    %c59 = arith.constant 59 : index
    %334 = memref.load %arg2[%c59] : memref<81xf32, #tpu.memory_space<smem>>
    %335 = vector.broadcast %334 : f32 to vector<18x18xf32>
    %336 = arith.mulf %335, %333 : vector<18x18xf32>
    %337 = arith.addf %323, %336 : vector<18x18xf32>
    %c68 = arith.constant 68 : index
    %338 = memref.load %arg2[%c68] : memref<81xf32, #tpu.memory_space<smem>>
    %339 = vector.broadcast %338 : f32 to vector<18x18xf32>
    %340 = arith.mulf %339, %333 : vector<18x18xf32>
    %341 = arith.addf %327, %340 : vector<18x18xf32>
    %c77 = arith.constant 77 : index
    %342 = memref.load %arg2[%c77] : memref<81xf32, #tpu.memory_space<smem>>
    %343 = vector.broadcast %342 : f32 to vector<18x18xf32>
    %344 = arith.mulf %343, %333 : vector<18x18xf32>
    %345 = arith.addf %331, %344 : vector<18x18xf32>
    %c0_143 = arith.constant 0 : index
    %c2_144 = arith.constant 2 : index
    %c1_145 = arith.constant 1 : index
    %c1_146 = arith.constant 1 : index
    %346 = vector.load %arg5[%c0_143, %c2_144, %c1_145, %c1_146] : memref<2x3x20x20xf32, #tpu.memory_space<vmem>>, vector<1x1x18x18xf32>
    %347 = vector.shape_cast %346 : vector<1x1x18x18xf32> to vector<18x18xf32>
    %c58 = arith.constant 58 : index
    %348 = memref.load %arg2[%c58] : memref<81xf32, #tpu.memory_space<smem>>
    %349 = vector.broadcast %348 : f32 to vector<18x18xf32>
    %350 = arith.mulf %349, %347 : vector<18x18xf32>
    %351 = arith.addf %337, %350 : vector<18x18xf32>
    %c67 = arith.constant 67 : index
    %352 = memref.load %arg2[%c67] : memref<81xf32, #tpu.memory_space<smem>>
    %353 = vector.broadcast %352 : f32 to vector<18x18xf32>
    %354 = arith.mulf %353, %347 : vector<18x18xf32>
    %355 = arith.addf %341, %354 : vector<18x18xf32>
    %c76 = arith.constant 76 : index
    %356 = memref.load %arg2[%c76] : memref<81xf32, #tpu.memory_space<smem>>
    %357 = vector.broadcast %356 : f32 to vector<18x18xf32>
    %358 = arith.mulf %357, %347 : vector<18x18xf32>
    %359 = arith.addf %345, %358 : vector<18x18xf32>
    %c0_147 = arith.constant 0 : index
    %c2_148 = arith.constant 2 : index
    %c1_149 = arith.constant 1 : index
    %c2_150 = arith.constant 2 : index
    %360 = vector.load %arg5[%c0_147, %c2_148, %c1_149, %c2_150] : memref<2x3x20x20xf32, #tpu.memory_space<vmem>>, vector<1x1x18x18xf32>
    %361 = vector.shape_cast %360 : vector<1x1x18x18xf32> to vector<18x18xf32>
    %c57 = arith.constant 57 : index
    %362 = memref.load %arg2[%c57] : memref<81xf32, #tpu.memory_space<smem>>
    %363 = vector.broadcast %362 : f32 to vector<18x18xf32>
    %364 = arith.mulf %363, %361 : vector<18x18xf32>
    %365 = arith.addf %351, %364 : vector<18x18xf32>
    %c66 = arith.constant 66 : index
    %366 = memref.load %arg2[%c66] : memref<81xf32, #tpu.memory_space<smem>>
    %367 = vector.broadcast %366 : f32 to vector<18x18xf32>
    %368 = arith.mulf %367, %361 : vector<18x18xf32>
    %369 = arith.addf %355, %368 : vector<18x18xf32>
    %c75 = arith.constant 75 : index
    %370 = memref.load %arg2[%c75] : memref<81xf32, #tpu.memory_space<smem>>
    %371 = vector.broadcast %370 : f32 to vector<18x18xf32>
    %372 = arith.mulf %371, %361 : vector<18x18xf32>
    %373 = arith.addf %359, %372 : vector<18x18xf32>
    %c0_151 = arith.constant 0 : index
    %c2_152 = arith.constant 2 : index
    %c2_153 = arith.constant 2 : index
    %c0_154 = arith.constant 0 : index
    %374 = vector.load %arg5[%c0_151, %c2_152, %c2_153, %c0_154] : memref<2x3x20x20xf32, #tpu.memory_space<vmem>>, vector<1x1x18x18xf32>
    %375 = vector.shape_cast %374 : vector<1x1x18x18xf32> to vector<18x18xf32>
    %c56 = arith.constant 56 : index
    %376 = memref.load %arg2[%c56] : memref<81xf32, #tpu.memory_space<smem>>
    %377 = vector.broadcast %376 : f32 to vector<18x18xf32>
    %378 = arith.mulf %377, %375 : vector<18x18xf32>
    %379 = arith.addf %365, %378 : vector<18x18xf32>
    %c65 = arith.constant 65 : index
    %380 = memref.load %arg2[%c65] : memref<81xf32, #tpu.memory_space<smem>>
    %381 = vector.broadcast %380 : f32 to vector<18x18xf32>
    %382 = arith.mulf %381, %375 : vector<18x18xf32>
    %383 = arith.addf %369, %382 : vector<18x18xf32>
    %c74 = arith.constant 74 : index
    %384 = memref.load %arg2[%c74] : memref<81xf32, #tpu.memory_space<smem>>
    %385 = vector.broadcast %384 : f32 to vector<18x18xf32>
    %386 = arith.mulf %385, %375 : vector<18x18xf32>
    %387 = arith.addf %373, %386 : vector<18x18xf32>
    %c0_155 = arith.constant 0 : index
    %c2_156 = arith.constant 2 : index
    %c2_157 = arith.constant 2 : index
    %c1_158 = arith.constant 1 : index
    %388 = vector.load %arg5[%c0_155, %c2_156, %c2_157, %c1_158] : memref<2x3x20x20xf32, #tpu.memory_space<vmem>>, vector<1x1x18x18xf32>
    %389 = vector.shape_cast %388 : vector<1x1x18x18xf32> to vector<18x18xf32>
    %c55 = arith.constant 55 : index
    %390 = memref.load %arg2[%c55] : memref<81xf32, #tpu.memory_space<smem>>
    %391 = vector.broadcast %390 : f32 to vector<18x18xf32>
    %392 = arith.mulf %391, %389 : vector<18x18xf32>
    %393 = arith.addf %379, %392 : vector<18x18xf32>
    %c64 = arith.constant 64 : index
    %394 = memref.load %arg2[%c64] : memref<81xf32, #tpu.memory_space<smem>>
    %395 = vector.broadcast %394 : f32 to vector<18x18xf32>
    %396 = arith.mulf %395, %389 : vector<18x18xf32>
    %397 = arith.addf %383, %396 : vector<18x18xf32>
    %c73 = arith.constant 73 : index
    %398 = memref.load %arg2[%c73] : memref<81xf32, #tpu.memory_space<smem>>
    %399 = vector.broadcast %398 : f32 to vector<18x18xf32>
    %400 = arith.mulf %399, %389 : vector<18x18xf32>
    %401 = arith.addf %387, %400 : vector<18x18xf32>
    %c0_159 = arith.constant 0 : index
    %c2_160 = arith.constant 2 : index
    %c2_161 = arith.constant 2 : index
    %c2_162 = arith.constant 2 : index
    %402 = vector.load %arg5[%c0_159, %c2_160, %c2_161, %c2_162] : memref<2x3x20x20xf32, #tpu.memory_space<vmem>>, vector<1x1x18x18xf32>
    %403 = vector.shape_cast %402 : vector<1x1x18x18xf32> to vector<18x18xf32>
    %c54 = arith.constant 54 : index
    %404 = memref.load %arg2[%c54] : memref<81xf32, #tpu.memory_space<smem>>
    %405 = vector.broadcast %404 : f32 to vector<18x18xf32>
    %406 = arith.mulf %405, %403 : vector<18x18xf32>
    %407 = arith.addf %393, %406 : vector<18x18xf32>
    %c63 = arith.constant 63 : index
    %408 = memref.load %arg2[%c63] : memref<81xf32, #tpu.memory_space<smem>>
    %409 = vector.broadcast %408 : f32 to vector<18x18xf32>
    %410 = arith.mulf %409, %403 : vector<18x18xf32>
    %411 = arith.addf %397, %410 : vector<18x18xf32>
    %c72 = arith.constant 72 : index
    %412 = memref.load %arg2[%c72] : memref<81xf32, #tpu.memory_space<smem>>
    %413 = vector.broadcast %412 : f32 to vector<18x18xf32>
    %414 = arith.mulf %413, %403 : vector<18x18xf32>
    %415 = arith.addf %401, %414 : vector<18x18xf32>
    %cst_163 = arith.constant 1.100000e+01 : f32
    %cst_164 = arith.constant 1.600000e+01 : f32
    %416 = vector.broadcast %cst_163 : f32 to vector<18x18xf32>
    %417 = arith.maximumf %416, %407 : vector<18x18xf32>
    %418 = vector.broadcast %cst_164 : f32 to vector<18x18xf32>
    %419 = arith.minimumf %418, %417 : vector<18x18xf32>
    %c0_165 = arith.constant 0 : index
    %c0_166 = arith.constant 0 : index
    %c0_167 = arith.constant 0 : index
    %c0_168 = arith.constant 0 : index
    %420 = vector.load %arg4[%c0_165, %c0_166, %c0_167, %c0_168] : memref<2x3x18x18xf32, #tpu.memory_space<vmem>>, vector<1x1x18x18xf32>
    %421 = vector.shape_cast %420 : vector<1x1x18x18xf32> to vector<18x18xf32>
    %422 = vector.shape_cast %419 : vector<18x18xf32> to vector<1x1x18x18xf32>
    tpu.vector_store %arg4[%c0_165, %c0_166, %c0_167, %c0_168], %422 {strides = array<i32>} : memref<2x3x18x18xf32, #tpu.memory_space<vmem>>, vector<1x1x18x18xf32>,
    %cst_169 = arith.constant 1.100000e+01 : f32
    %cst_170 = arith.constant 1.600000e+01 : f32
    %423 = vector.broadcast %cst_169 : f32 to vector<18x18xf32>
    %424 = arith.maximumf %423, %411 : vector<18x18xf32>
    %425 = vector.broadcast %cst_170 : f32 to vector<18x18xf32>
    %426 = arith.minimumf %425, %424 : vector<18x18xf32>
    %c0_171 = arith.constant 0 : index
    %c1_172 = arith.constant 1 : index
    %c0_173 = arith.constant 0 : index
    %c0_174 = arith.constant 0 : index
    %427 = vector.load %arg4[%c0_171, %c1_172, %c0_173, %c0_174] : memref<2x3x18x18xf32, #tpu.memory_space<vmem>>, vector<1x1x18x18xf32>
    %428 = vector.shape_cast %427 : vector<1x1x18x18xf32> to vector<18x18xf32>
    %429 = vector.shape_cast %426 : vector<18x18xf32> to vector<1x1x18x18xf32>
    tpu.vector_store %arg4[%c0_171, %c1_172, %c0_173, %c0_174], %429 {strides = array<i32>} : memref<2x3x18x18xf32, #tpu.memory_space<vmem>>, vector<1x1x18x18xf32>,
    %cst_175 = arith.constant 1.100000e+01 : f32
    %cst_176 = arith.constant 1.600000e+01 : f32
    %430 = vector.broadcast %cst_175 : f32 to vector<18x18xf32>
    %431 = arith.maximumf %430, %415 : vector<18x18xf32>
    %432 = vector.broadcast %cst_176 : f32 to vector<18x18xf32>
    %433 = arith.minimumf %432, %431 : vector<18x18xf32>
    %c0_177 = arith.constant 0 : index
    %c2_178 = arith.constant 2 : index
    %c0_179 = arith.constant 0 : index
    %c0_180 = arith.constant 0 : index
    %434 = vector.load %arg4[%c0_177, %c2_178, %c0_179, %c0_180] : memref<2x3x18x18xf32, #tpu.memory_space<vmem>>, vector<1x1x18x18xf32>
    %435 = vector.shape_cast %434 : vector<1x1x18x18xf32> to vector<18x18xf32>
    %436 = vector.shape_cast %433 : vector<18x18xf32> to vector<1x1x18x18xf32>
    tpu.vector_store %arg4[%c0_177, %c2_178, %c0_179, %c0_180], %436 {strides = array<i32>} : memref<2x3x18x18xf32, #tpu.memory_space<vmem>>, vector<1x1x18x18xf32>,
    %c0_181 = arith.constant 0 : index
    %437 = memref.load %arg3[%c0_181] : memref<3xf32, #tpu.memory_space<smem>>
    %438 = vector.broadcast %437 : f32 to vector<18x18xf32>
    %c1_182 = arith.constant 1 : index
    %439 = memref.load %arg3[%c1_182] : memref<3xf32, #tpu.memory_space<smem>>
    %440 = vector.broadcast %439 : f32 to vector<18x18xf32>
    %c2_183 = arith.constant 2 : index
    %441 = memref.load %arg3[%c2_183] : memref<3xf32, #tpu.memory_space<smem>>
    %442 = vector.broadcast %441 : f32 to vector<18x18xf32>
    %c1_184 = arith.constant 1 : index
    %c0_185 = arith.constant 0 : index
    %c0_186 = arith.constant 0 : index
    %c0_187 = arith.constant 0 : index
    %443 = vector.load %arg5[%c1_184, %c0_185, %c0_186, %c0_187] : memref<2x3x20x20xf32, #tpu.memory_space<vmem>>, vector<1x1x18x18xf32>
    %444 = vector.shape_cast %443 : vector<1x1x18x18xf32> to vector<18x18xf32>
    %c8_188 = arith.constant 8 : index
    %445 = memref.load %arg2[%c8_188] : memref<81xf32, #tpu.memory_space<smem>>
    %446 = vector.broadcast %445 : f32 to vector<18x18xf32>
    %447 = arith.mulf %446, %444 : vector<18x18xf32>
    %448 = arith.addf %438, %447 : vector<18x18xf32>
    %c17_189 = arith.constant 17 : index
    %449 = memref.load %arg2[%c17_189] : memref<81xf32, #tpu.memory_space<smem>>
    %450 = vector.broadcast %449 : f32 to vector<18x18xf32>
    %451 = arith.mulf %450, %444 : vector<18x18xf32>
    %452 = arith.addf %440, %451 : vector<18x18xf32>
    %c26_190 = arith.constant 26 : index
    %453 = memref.load %arg2[%c26_190] : memref<81xf32, #tpu.memory_space<smem>>
    %454 = vector.broadcast %453 : f32 to vector<18x18xf32>
    %455 = arith.mulf %454, %444 : vector<18x18xf32>
    %456 = arith.addf %442, %455 : vector<18x18xf32>
    %c1_191 = arith.constant 1 : index
    %c0_192 = arith.constant 0 : index
    %c0_193 = arith.constant 0 : index
    %c1_194 = arith.constant 1 : index
    %457 = vector.load %arg5[%c1_191, %c0_192, %c0_193, %c1_194] : memref<2x3x20x20xf32, #tpu.memory_space<vmem>>, vector<1x1x18x18xf32>
    %458 = vector.shape_cast %457 : vector<1x1x18x18xf32> to vector<18x18xf32>
    %c7_195 = arith.constant 7 : index
    %459 = memref.load %arg2[%c7_195] : memref<81xf32, #tpu.memory_space<smem>>
    %460 = vector.broadcast %459 : f32 to vector<18x18xf32>
    %461 = arith.mulf %460, %458 : vector<18x18xf32>
    %462 = arith.addf %448, %461 : vector<18x18xf32>
    %c16_196 = arith.constant 16 : index
    %463 = memref.load %arg2[%c16_196] : memref<81xf32, #tpu.memory_space<smem>>
    %464 = vector.broadcast %463 : f32 to vector<18x18xf32>
    %465 = arith.mulf %464, %458 : vector<18x18xf32>
    %466 = arith.addf %452, %465 : vector<18x18xf32>
    %c25_197 = arith.constant 25 : index
    %467 = memref.load %arg2[%c25_197] : memref<81xf32, #tpu.memory_space<smem>>
    %468 = vector.broadcast %467 : f32 to vector<18x18xf32>
    %469 = arith.mulf %468, %458 : vector<18x18xf32>
    %470 = arith.addf %456, %469 : vector<18x18xf32>
    %c1_198 = arith.constant 1 : index
    %c0_199 = arith.constant 0 : index
    %c0_200 = arith.constant 0 : index
    %c2_201 = arith.constant 2 : index
    %471 = vector.load %arg5[%c1_198, %c0_199, %c0_200, %c2_201] : memref<2x3x20x20xf32, #tpu.memory_space<vmem>>, vector<1x1x18x18xf32>
    %472 = vector.shape_cast %471 : vector<1x1x18x18xf32> to vector<18x18xf32>
    %c6_202 = arith.constant 6 : index
    %473 = memref.load %arg2[%c6_202] : memref<81xf32, #tpu.memory_space<smem>>
    %474 = vector.broadcast %473 : f32 to vector<18x18xf32>
    %475 = arith.mulf %474, %472 : vector<18x18xf32>
    %476 = arith.addf %462, %475 : vector<18x18xf32>
    %c15_203 = arith.constant 15 : index
    %477 = memref.load %arg2[%c15_203] : memref<81xf32, #tpu.memory_space<smem>>
    %478 = vector.broadcast %477 : f32 to vector<18x18xf32>
    %479 = arith.mulf %478, %472 : vector<18x18xf32>
    %480 = arith.addf %466, %479 : vector<18x18xf32>
    %c24_204 = arith.constant 24 : index
    %481 = memref.load %arg2[%c24_204] : memref<81xf32, #tpu.memory_space<smem>>
    %482 = vector.broadcast %481 : f32 to vector<18x18xf32>
    %483 = arith.mulf %482, %472 : vector<18x18xf32>
    %484 = arith.addf %470, %483 : vector<18x18xf32>
    %c1_205 = arith.constant 1 : index
    %c0_206 = arith.constant 0 : index
    %c1_207 = arith.constant 1 : index
    %c0_208 = arith.constant 0 : index
    %485 = vector.load %arg5[%c1_205, %c0_206, %c1_207, %c0_208] : memref<2x3x20x20xf32, #tpu.memory_space<vmem>>, vector<1x1x18x18xf32>
    %486 = vector.shape_cast %485 : vector<1x1x18x18xf32> to vector<18x18xf32>
    %c5_209 = arith.constant 5 : index
    %487 = memref.load %arg2[%c5_209] : memref<81xf32, #tpu.memory_space<smem>>
    %488 = vector.broadcast %487 : f32 to vector<18x18xf32>
    %489 = arith.mulf %488, %486 : vector<18x18xf32>
    %490 = arith.addf %476, %489 : vector<18x18xf32>
    %c14_210 = arith.constant 14 : index
    %491 = memref.load %arg2[%c14_210] : memref<81xf32, #tpu.memory_space<smem>>
    %492 = vector.broadcast %491 : f32 to vector<18x18xf32>
    %493 = arith.mulf %492, %486 : vector<18x18xf32>
    %494 = arith.addf %480, %493 : vector<18x18xf32>
    %c23_211 = arith.constant 23 : index
    %495 = memref.load %arg2[%c23_211] : memref<81xf32, #tpu.memory_space<smem>>
    %496 = vector.broadcast %495 : f32 to vector<18x18xf32>
    %497 = arith.mulf %496, %486 : vector<18x18xf32>
    %498 = arith.addf %484, %497 : vector<18x18xf32>
    %c1_212 = arith.constant 1 : index
    %c0_213 = arith.constant 0 : index
    %c1_214 = arith.constant 1 : index
    %c1_215 = arith.constant 1 : index
    %499 = vector.load %arg5[%c1_212, %c0_213, %c1_214, %c1_215] : memref<2x3x20x20xf32, #tpu.memory_space<vmem>>, vector<1x1x18x18xf32>
    %500 = vector.shape_cast %499 : vector<1x1x18x18xf32> to vector<18x18xf32>
    %c4_216 = arith.constant 4 : index
    %501 = memref.load %arg2[%c4_216] : memref<81xf32, #tpu.memory_space<smem>>
    %502 = vector.broadcast %501 : f32 to vector<18x18xf32>
    %503 = arith.mulf %502, %500 : vector<18x18xf32>
    %504 = arith.addf %490, %503 : vector<18x18xf32>
    %c13_217 = arith.constant 13 : index
    %505 = memref.load %arg2[%c13_217] : memref<81xf32, #tpu.memory_space<smem>>
    %506 = vector.broadcast %505 : f32 to vector<18x18xf32>
    %507 = arith.mulf %506, %500 : vector<18x18xf32>
    %508 = arith.addf %494, %507 : vector<18x18xf32>
    %c22_218 = arith.constant 22 : index
    %509 = memref.load %arg2[%c22_218] : memref<81xf32, #tpu.memory_space<smem>>
    %510 = vector.broadcast %509 : f32 to vector<18x18xf32>
    %511 = arith.mulf %510, %500 : vector<18x18xf32>
    %512 = arith.addf %498, %511 : vector<18x18xf32>
    %c1_219 = arith.constant 1 : index
    %c0_220 = arith.constant 0 : index
    %c1_221 = arith.constant 1 : index
    %c2_222 = arith.constant 2 : index
    %513 = vector.load %arg5[%c1_219, %c0_220, %c1_221, %c2_222] : memref<2x3x20x20xf32, #tpu.memory_space<vmem>>, vector<1x1x18x18xf32>
    %514 = vector.shape_cast %513 : vector<1x1x18x18xf32> to vector<18x18xf32>
    %c3_223 = arith.constant 3 : index
    %515 = memref.load %arg2[%c3_223] : memref<81xf32, #tpu.memory_space<smem>>
    %516 = vector.broadcast %515 : f32 to vector<18x18xf32>
    %517 = arith.mulf %516, %514 : vector<18x18xf32>
    %518 = arith.addf %504, %517 : vector<18x18xf32>
    %c12_224 = arith.constant 12 : index
    %519 = memref.load %arg2[%c12_224] : memref<81xf32, #tpu.memory_space<smem>>
    %520 = vector.broadcast %519 : f32 to vector<18x18xf32>
    %521 = arith.mulf %520, %514 : vector<18x18xf32>
    %522 = arith.addf %508, %521 : vector<18x18xf32>
    %c21_225 = arith.constant 21 : index
    %523 = memref.load %arg2[%c21_225] : memref<81xf32, #tpu.memory_space<smem>>
    %524 = vector.broadcast %523 : f32 to vector<18x18xf32>
    %525 = arith.mulf %524, %514 : vector<18x18xf32>
    %526 = arith.addf %512, %525 : vector<18x18xf32>
    %c1_226 = arith.constant 1 : index
    %c0_227 = arith.constant 0 : index
    %c2_228 = arith.constant 2 : index
    %c0_229 = arith.constant 0 : index
    %527 = vector.load %arg5[%c1_226, %c0_227, %c2_228, %c0_229] : memref<2x3x20x20xf32, #tpu.memory_space<vmem>>, vector<1x1x18x18xf32>
    %528 = vector.shape_cast %527 : vector<1x1x18x18xf32> to vector<18x18xf32>
    %c2_230 = arith.constant 2 : index
    %529 = memref.load %arg2[%c2_230] : memref<81xf32, #tpu.memory_space<smem>>
    %530 = vector.broadcast %529 : f32 to vector<18x18xf32>
    %531 = arith.mulf %530, %528 : vector<18x18xf32>
    %532 = arith.addf %518, %531 : vector<18x18xf32>
    %c11_231 = arith.constant 11 : index
    %533 = memref.load %arg2[%c11_231] : memref<81xf32, #tpu.memory_space<smem>>
    %534 = vector.broadcast %533 : f32 to vector<18x18xf32>
    %535 = arith.mulf %534, %528 : vector<18x18xf32>
    %536 = arith.addf %522, %535 : vector<18x18xf32>
    %c20_232 = arith.constant 20 : index
    %537 = memref.load %arg2[%c20_232] : memref<81xf32, #tpu.memory_space<smem>>
    %538 = vector.broadcast %537 : f32 to vector<18x18xf32>
    %539 = arith.mulf %538, %528 : vector<18x18xf32>
    %540 = arith.addf %526, %539 : vector<18x18xf32>
    %c1_233 = arith.constant 1 : index
    %c0_234 = arith.constant 0 : index
    %c2_235 = arith.constant 2 : index
    %c1_236 = arith.constant 1 : index
    %541 = vector.load %arg5[%c1_233, %c0_234, %c2_235, %c1_236] : memref<2x3x20x20xf32, #tpu.memory_space<vmem>>, vector<1x1x18x18xf32>
    %542 = vector.shape_cast %541 : vector<1x1x18x18xf32> to vector<18x18xf32>
    %c1_237 = arith.constant 1 : index
    %543 = memref.load %arg2[%c1_237] : memref<81xf32, #tpu.memory_space<smem>>
    %544 = vector.broadcast %543 : f32 to vector<18x18xf32>
    %545 = arith.mulf %544, %542 : vector<18x18xf32>
    %546 = arith.addf %532, %545 : vector<18x18xf32>
    %c10_238 = arith.constant 10 : index
    %547 = memref.load %arg2[%c10_238] : memref<81xf32, #tpu.memory_space<smem>>
    %548 = vector.broadcast %547 : f32 to vector<18x18xf32>
    %549 = arith.mulf %548, %542 : vector<18x18xf32>
    %550 = arith.addf %536, %549 : vector<18x18xf32>
    %c19_239 = arith.constant 19 : index
    %551 = memref.load %arg2[%c19_239] : memref<81xf32, #tpu.memory_space<smem>>
    %552 = vector.broadcast %551 : f32 to vector<18x18xf32>
    %553 = arith.mulf %552, %542 : vector<18x18xf32>
    %554 = arith.addf %540, %553 : vector<18x18xf32>
    %c1_240 = arith.constant 1 : index
    %c0_241 = arith.constant 0 : index
    %c2_242 = arith.constant 2 : index
    %c2_243 = arith.constant 2 : index
    %555 = vector.load %arg5[%c1_240, %c0_241, %c2_242, %c2_243] : memref<2x3x20x20xf32, #tpu.memory_space<vmem>>, vector<1x1x18x18xf32>
    %556 = vector.shape_cast %555 : vector<1x1x18x18xf32> to vector<18x18xf32>
    %c0_244 = arith.constant 0 : index
    %557 = memref.load %arg2[%c0_244] : memref<81xf32, #tpu.memory_space<smem>>
    %558 = vector.broadcast %557 : f32 to vector<18x18xf32>
    %559 = arith.mulf %558, %556 : vector<18x18xf32>
    %560 = arith.addf %546, %559 : vector<18x18xf32>
    %c9_245 = arith.constant 9 : index
    %561 = memref.load %arg2[%c9_245] : memref<81xf32, #tpu.memory_space<smem>>
    %562 = vector.broadcast %561 : f32 to vector<18x18xf32>
    %563 = arith.mulf %562, %556 : vector<18x18xf32>
    %564 = arith.addf %550, %563 : vector<18x18xf32>
    %c18_246 = arith.constant 18 : index
    %565 = memref.load %arg2[%c18_246] : memref<81xf32, #tpu.memory_space<smem>>
    %566 = vector.broadcast %565 : f32 to vector<18x18xf32>
    %567 = arith.mulf %566, %556 : vector<18x18xf32>
    %568 = arith.addf %554, %567 : vector<18x18xf32>
    %c1_247 = arith.constant 1 : index
    %c1_248 = arith.constant 1 : index
    %c0_249 = arith.constant 0 : index
    %c0_250 = arith.constant 0 : index
    %569 = vector.load %arg5[%c1_247, %c1_248, %c0_249, %c0_250] : memref<2x3x20x20xf32, #tpu.memory_space<vmem>>, vector<1x1x18x18xf32>
    %570 = vector.shape_cast %569 : vector<1x1x18x18xf32> to vector<18x18xf32>
    %c35_251 = arith.constant 35 : index
    %571 = memref.load %arg2[%c35_251] : memref<81xf32, #tpu.memory_space<smem>>
    %572 = vector.broadcast %571 : f32 to vector<18x18xf32>
    %573 = arith.mulf %572, %570 : vector<18x18xf32>
    %574 = arith.addf %560, %573 : vector<18x18xf32>
    %c44_252 = arith.constant 44 : index
    %575 = memref.load %arg2[%c44_252] : memref<81xf32, #tpu.memory_space<smem>>
    %576 = vector.broadcast %575 : f32 to vector<18x18xf32>
    %577 = arith.mulf %576, %570 : vector<18x18xf32>
    %578 = arith.addf %564, %577 : vector<18x18xf32>
    %c53_253 = arith.constant 53 : index
    %579 = memref.load %arg2[%c53_253] : memref<81xf32, #tpu.memory_space<smem>>
    %580 = vector.broadcast %579 : f32 to vector<18x18xf32>
    %581 = arith.mulf %580, %570 : vector<18x18xf32>
    %582 = arith.addf %568, %581 : vector<18x18xf32>
    %c1_254 = arith.constant 1 : index
    %c1_255 = arith.constant 1 : index
    %c0_256 = arith.constant 0 : index
    %c1_257 = arith.constant 1 : index
    %583 = vector.load %arg5[%c1_254, %c1_255, %c0_256, %c1_257] : memref<2x3x20x20xf32, #tpu.memory_space<vmem>>, vector<1x1x18x18xf32>
    %584 = vector.shape_cast %583 : vector<1x1x18x18xf32> to vector<18x18xf32>
    %c34_258 = arith.constant 34 : index
    %585 = memref.load %arg2[%c34_258] : memref<81xf32, #tpu.memory_space<smem>>
    %586 = vector.broadcast %585 : f32 to vector<18x18xf32>
    %587 = arith.mulf %586, %584 : vector<18x18xf32>
    %588 = arith.addf %574, %587 : vector<18x18xf32>
    %c43_259 = arith.constant 43 : index
    %589 = memref.load %arg2[%c43_259] : memref<81xf32, #tpu.memory_space<smem>>
    %590 = vector.broadcast %589 : f32 to vector<18x18xf32>
    %591 = arith.mulf %590, %584 : vector<18x18xf32>
    %592 = arith.addf %578, %591 : vector<18x18xf32>
    %c52_260 = arith.constant 52 : index
    %593 = memref.load %arg2[%c52_260] : memref<81xf32, #tpu.memory_space<smem>>
    %594 = vector.broadcast %593 : f32 to vector<18x18xf32>
    %595 = arith.mulf %594, %584 : vector<18x18xf32>
    %596 = arith.addf %582, %595 : vector<18x18xf32>
    %c1_261 = arith.constant 1 : index
    %c1_262 = arith.constant 1 : index
    %c0_263 = arith.constant 0 : index
    %c2_264 = arith.constant 2 : index
    %597 = vector.load %arg5[%c1_261, %c1_262, %c0_263, %c2_264] : memref<2x3x20x20xf32, #tpu.memory_space<vmem>>, vector<1x1x18x18xf32>
    %598 = vector.shape_cast %597 : vector<1x1x18x18xf32> to vector<18x18xf32>
    %c33_265 = arith.constant 33 : index
    %599 = memref.load %arg2[%c33_265] : memref<81xf32, #tpu.memory_space<smem>>
    %600 = vector.broadcast %599 : f32 to vector<18x18xf32>
    %601 = arith.mulf %600, %598 : vector<18x18xf32>
    %602 = arith.addf %588, %601 : vector<18x18xf32>
    %c42_266 = arith.constant 42 : index
    %603 = memref.load %arg2[%c42_266] : memref<81xf32, #tpu.memory_space<smem>>
    %604 = vector.broadcast %603 : f32 to vector<18x18xf32>
    %605 = arith.mulf %604, %598 : vector<18x18xf32>
    %606 = arith.addf %592, %605 : vector<18x18xf32>
    %c51_267 = arith.constant 51 : index
    %607 = memref.load %arg2[%c51_267] : memref<81xf32, #tpu.memory_space<smem>>
    %608 = vector.broadcast %607 : f32 to vector<18x18xf32>
    %609 = arith.mulf %608, %598 : vector<18x18xf32>
    %610 = arith.addf %596, %609 : vector<18x18xf32>
    %c1_268 = arith.constant 1 : index
    %c1_269 = arith.constant 1 : index
    %c1_270 = arith.constant 1 : index
    %c0_271 = arith.constant 0 : index
    %611 = vector.load %arg5[%c1_268, %c1_269, %c1_270, %c0_271] : memref<2x3x20x20xf32, #tpu.memory_space<vmem>>, vector<1x1x18x18xf32>
    %612 = vector.shape_cast %611 : vector<1x1x18x18xf32> to vector<18x18xf32>
    %c32_272 = arith.constant 32 : index
    %613 = memref.load %arg2[%c32_272] : memref<81xf32, #tpu.memory_space<smem>>
    %614 = vector.broadcast %613 : f32 to vector<18x18xf32>
    %615 = arith.mulf %614, %612 : vector<18x18xf32>
    %616 = arith.addf %602, %615 : vector<18x18xf32>
    %c41_273 = arith.constant 41 : index
    %617 = memref.load %arg2[%c41_273] : memref<81xf32, #tpu.memory_space<smem>>
    %618 = vector.broadcast %617 : f32 to vector<18x18xf32>
    %619 = arith.mulf %618, %612 : vector<18x18xf32>
    %620 = arith.addf %606, %619 : vector<18x18xf32>
    %c50_274 = arith.constant 50 : index
    %621 = memref.load %arg2[%c50_274] : memref<81xf32, #tpu.memory_space<smem>>
    %622 = vector.broadcast %621 : f32 to vector<18x18xf32>
    %623 = arith.mulf %622, %612 : vector<18x18xf32>
    %624 = arith.addf %610, %623 : vector<18x18xf32>
    %c1_275 = arith.constant 1 : index
    %c1_276 = arith.constant 1 : index
    %c1_277 = arith.constant 1 : index
    %c1_278 = arith.constant 1 : index
    %625 = vector.load %arg5[%c1_275, %c1_276, %c1_277, %c1_278] : memref<2x3x20x20xf32, #tpu.memory_space<vmem>>, vector<1x1x18x18xf32>
    %626 = vector.shape_cast %625 : vector<1x1x18x18xf32> to vector<18x18xf32>
    %c31_279 = arith.constant 31 : index
    %627 = memref.load %arg2[%c31_279] : memref<81xf32, #tpu.memory_space<smem>>
    %628 = vector.broadcast %627 : f32 to vector<18x18xf32>
    %629 = arith.mulf %628, %626 : vector<18x18xf32>
    %630 = arith.addf %616, %629 : vector<18x18xf32>
    %c40_280 = arith.constant 40 : index
    %631 = memref.load %arg2[%c40_280] : memref<81xf32, #tpu.memory_space<smem>>
    %632 = vector.broadcast %631 : f32 to vector<18x18xf32>
    %633 = arith.mulf %632, %626 : vector<18x18xf32>
    %634 = arith.addf %620, %633 : vector<18x18xf32>
    %c49_281 = arith.constant 49 : index
    %635 = memref.load %arg2[%c49_281] : memref<81xf32, #tpu.memory_space<smem>>
    %636 = vector.broadcast %635 : f32 to vector<18x18xf32>
    %637 = arith.mulf %636, %626 : vector<18x18xf32>
    %638 = arith.addf %624, %637 : vector<18x18xf32>
    %c1_282 = arith.constant 1 : index
    %c1_283 = arith.constant 1 : index
    %c1_284 = arith.constant 1 : index
    %c2_285 = arith.constant 2 : index
    %639 = vector.load %arg5[%c1_282, %c1_283, %c1_284, %c2_285] : memref<2x3x20x20xf32, #tpu.memory_space<vmem>>, vector<1x1x18x18xf32>
    %640 = vector.shape_cast %639 : vector<1x1x18x18xf32> to vector<18x18xf32>
    %c30_286 = arith.constant 30 : index
    %641 = memref.load %arg2[%c30_286] : memref<81xf32, #tpu.memory_space<smem>>
    %642 = vector.broadcast %641 : f32 to vector<18x18xf32>
    %643 = arith.mulf %642, %640 : vector<18x18xf32>
    %644 = arith.addf %630, %643 : vector<18x18xf32>
    %c39_287 = arith.constant 39 : index
    %645 = memref.load %arg2[%c39_287] : memref<81xf32, #tpu.memory_space<smem>>
    %646 = vector.broadcast %645 : f32 to vector<18x18xf32>
    %647 = arith.mulf %646, %640 : vector<18x18xf32>
    %648 = arith.addf %634, %647 : vector<18x18xf32>
    %c48_288 = arith.constant 48 : index
    %649 = memref.load %arg2[%c48_288] : memref<81xf32, #tpu.memory_space<smem>>
    %650 = vector.broadcast %649 : f32 to vector<18x18xf32>
    %651 = arith.mulf %650, %640 : vector<18x18xf32>
    %652 = arith.addf %638, %651 : vector<18x18xf32>
    %c1_289 = arith.constant 1 : index
    %c1_290 = arith.constant 1 : index
    %c2_291 = arith.constant 2 : index
    %c0_292 = arith.constant 0 : index
    %653 = vector.load %arg5[%c1_289, %c1_290, %c2_291, %c0_292] : memref<2x3x20x20xf32, #tpu.memory_space<vmem>>, vector<1x1x18x18xf32>
    %654 = vector.shape_cast %653 : vector<1x1x18x18xf32> to vector<18x18xf32>
    %c29_293 = arith.constant 29 : index
    %655 = memref.load %arg2[%c29_293] : memref<81xf32, #tpu.memory_space<smem>>
    %656 = vector.broadcast %655 : f32 to vector<18x18xf32>
    %657 = arith.mulf %656, %654 : vector<18x18xf32>
    %658 = arith.addf %644, %657 : vector<18x18xf32>
    %c38_294 = arith.constant 38 : index
    %659 = memref.load %arg2[%c38_294] : memref<81xf32, #tpu.memory_space<smem>>
    %660 = vector.broadcast %659 : f32 to vector<18x18xf32>
    %661 = arith.mulf %660, %654 : vector<18x18xf32>
    %662 = arith.addf %648, %661 : vector<18x18xf32>
    %c47_295 = arith.constant 47 : index
    %663 = memref.load %arg2[%c47_295] : memref<81xf32, #tpu.memory_space<smem>>
    %664 = vector.broadcast %663 : f32 to vector<18x18xf32>
    %665 = arith.mulf %664, %654 : vector<18x18xf32>
    %666 = arith.addf %652, %665 : vector<18x18xf32>
    %c1_296 = arith.constant 1 : index
    %c1_297 = arith.constant 1 : index
    %c2_298 = arith.constant 2 : index
    %c1_299 = arith.constant 1 : index
    %667 = vector.load %arg5[%c1_296, %c1_297, %c2_298, %c1_299] : memref<2x3x20x20xf32, #tpu.memory_space<vmem>>, vector<1x1x18x18xf32>
    %668 = vector.shape_cast %667 : vector<1x1x18x18xf32> to vector<18x18xf32>
    %c28_300 = arith.constant 28 : index
    %669 = memref.load %arg2[%c28_300] : memref<81xf32, #tpu.memory_space<smem>>
    %670 = vector.broadcast %669 : f32 to vector<18x18xf32>
    %671 = arith.mulf %670, %668 : vector<18x18xf32>
    %672 = arith.addf %658, %671 : vector<18x18xf32>
    %c37_301 = arith.constant 37 : index
    %673 = memref.load %arg2[%c37_301] : memref<81xf32, #tpu.memory_space<smem>>
    %674 = vector.broadcast %673 : f32 to vector<18x18xf32>
    %675 = arith.mulf %674, %668 : vector<18x18xf32>
    %676 = arith.addf %662, %675 : vector<18x18xf32>
    %c46_302 = arith.constant 46 : index
    %677 = memref.load %arg2[%c46_302] : memref<81xf32, #tpu.memory_space<smem>>
    %678 = vector.broadcast %677 : f32 to vector<18x18xf32>
    %679 = arith.mulf %678, %668 : vector<18x18xf32>
    %680 = arith.addf %666, %679 : vector<18x18xf32>
    %c1_303 = arith.constant 1 : index
    %c1_304 = arith.constant 1 : index
    %c2_305 = arith.constant 2 : index
    %c2_306 = arith.constant 2 : index
    %681 = vector.load %arg5[%c1_303, %c1_304, %c2_305, %c2_306] : memref<2x3x20x20xf32, #tpu.memory_space<vmem>>, vector<1x1x18x18xf32>
    %682 = vector.shape_cast %681 : vector<1x1x18x18xf32> to vector<18x18xf32>
    %c27_307 = arith.constant 27 : index
    %683 = memref.load %arg2[%c27_307] : memref<81xf32, #tpu.memory_space<smem>>
    %684 = vector.broadcast %683 : f32 to vector<18x18xf32>
    %685 = arith.mulf %684, %682 : vector<18x18xf32>
    %686 = arith.addf %672, %685 : vector<18x18xf32>
    %c36_308 = arith.constant 36 : index
    %687 = memref.load %arg2[%c36_308] : memref<81xf32, #tpu.memory_space<smem>>
    %688 = vector.broadcast %687 : f32 to vector<18x18xf32>
    %689 = arith.mulf %688, %682 : vector<18x18xf32>
    %690 = arith.addf %676, %689 : vector<18x18xf32>
    %c45_309 = arith.constant 45 : index
    %691 = memref.load %arg2[%c45_309] : memref<81xf32, #tpu.memory_space<smem>>
    %692 = vector.broadcast %691 : f32 to vector<18x18xf32>
    %693 = arith.mulf %692, %682 : vector<18x18xf32>
    %694 = arith.addf %680, %693 : vector<18x18xf32>
    %c1_310 = arith.constant 1 : index
    %c2_311 = arith.constant 2 : index
    %c0_312 = arith.constant 0 : index
    %c0_313 = arith.constant 0 : index
    %695 = vector.load %arg5[%c1_310, %c2_311, %c0_312, %c0_313] : memref<2x3x20x20xf32, #tpu.memory_space<vmem>>, vector<1x1x18x18xf32>
    %696 = vector.shape_cast %695 : vector<1x1x18x18xf32> to vector<18x18xf32>
    %c62_314 = arith.constant 62 : index
    %697 = memref.load %arg2[%c62_314] : memref<81xf32, #tpu.memory_space<smem>>
    %698 = vector.broadcast %697 : f32 to vector<18x18xf32>
    %699 = arith.mulf %698, %696 : vector<18x18xf32>
    %700 = arith.addf %686, %699 : vector<18x18xf32>
    %c71_315 = arith.constant 71 : index
    %701 = memref.load %arg2[%c71_315] : memref<81xf32, #tpu.memory_space<smem>>
    %702 = vector.broadcast %701 : f32 to vector<18x18xf32>
    %703 = arith.mulf %702, %696 : vector<18x18xf32>
    %704 = arith.addf %690, %703 : vector<18x18xf32>
    %c80_316 = arith.constant 80 : index
    %705 = memref.load %arg2[%c80_316] : memref<81xf32, #tpu.memory_space<smem>>
    %706 = vector.broadcast %705 : f32 to vector<18x18xf32>
    %707 = arith.mulf %706, %696 : vector<18x18xf32>
    %708 = arith.addf %694, %707 : vector<18x18xf32>
    %c1_317 = arith.constant 1 : index
    %c2_318 = arith.constant 2 : index
    %c0_319 = arith.constant 0 : index
    %c1_320 = arith.constant 1 : index
    %709 = vector.load %arg5[%c1_317, %c2_318, %c0_319, %c1_320] : memref<2x3x20x20xf32, #tpu.memory_space<vmem>>, vector<1x1x18x18xf32>
    %710 = vector.shape_cast %709 : vector<1x1x18x18xf32> to vector<18x18xf32>
    %c61_321 = arith.constant 61 : index
    %711 = memref.load %arg2[%c61_321] : memref<81xf32, #tpu.memory_space<smem>>
    %712 = vector.broadcast %711 : f32 to vector<18x18xf32>
    %713 = arith.mulf %712, %710 : vector<18x18xf32>
    %714 = arith.addf %700, %713 : vector<18x18xf32>
    %c70_322 = arith.constant 70 : index
    %715 = memref.load %arg2[%c70_322] : memref<81xf32, #tpu.memory_space<smem>>
    %716 = vector.broadcast %715 : f32 to vector<18x18xf32>
    %717 = arith.mulf %716, %710 : vector<18x18xf32>
    %718 = arith.addf %704, %717 : vector<18x18xf32>
    %c79_323 = arith.constant 79 : index
    %719 = memref.load %arg2[%c79_323] : memref<81xf32, #tpu.memory_space<smem>>
    %720 = vector.broadcast %719 : f32 to vector<18x18xf32>
    %721 = arith.mulf %720, %710 : vector<18x18xf32>
    %722 = arith.addf %708, %721 : vector<18x18xf32>
    %c1_324 = arith.constant 1 : index
    %c2_325 = arith.constant 2 : index
    %c0_326 = arith.constant 0 : index
    %c2_327 = arith.constant 2 : index
    %723 = vector.load %arg5[%c1_324, %c2_325, %c0_326, %c2_327] : memref<2x3x20x20xf32, #tpu.memory_space<vmem>>, vector<1x1x18x18xf32>
    %724 = vector.shape_cast %723 : vector<1x1x18x18xf32> to vector<18x18xf32>
    %c60_328 = arith.constant 60 : index
    %725 = memref.load %arg2[%c60_328] : memref<81xf32, #tpu.memory_space<smem>>
    %726 = vector.broadcast %725 : f32 to vector<18x18xf32>
    %727 = arith.mulf %726, %724 : vector<18x18xf32>
    %728 = arith.addf %714, %727 : vector<18x18xf32>
    %c69_329 = arith.constant 69 : index
    %729 = memref.load %arg2[%c69_329] : memref<81xf32, #tpu.memory_space<smem>>
    %730 = vector.broadcast %729 : f32 to vector<18x18xf32>
    %731 = arith.mulf %730, %724 : vector<18x18xf32>
    %732 = arith.addf %718, %731 : vector<18x18xf32>
    %c78_330 = arith.constant 78 : index
    %733 = memref.load %arg2[%c78_330] : memref<81xf32, #tpu.memory_space<smem>>
    %734 = vector.broadcast %733 : f32 to vector<18x18xf32>
    %735 = arith.mulf %734, %724 : vector<18x18xf32>
    %736 = arith.addf %722, %735 : vector<18x18xf32>
    %c1_331 = arith.constant 1 : index
    %c2_332 = arith.constant 2 : index
    %c1_333 = arith.constant 1 : index
    %c0_334 = arith.constant 0 : index
    %737 = vector.load %arg5[%c1_331, %c2_332, %c1_333, %c0_334] : memref<2x3x20x20xf32, #tpu.memory_space<vmem>>, vector<1x1x18x18xf32>
    %738 = vector.shape_cast %737 : vector<1x1x18x18xf32> to vector<18x18xf32>
    %c59_335 = arith.constant 59 : index
    %739 = memref.load %arg2[%c59_335] : memref<81xf32, #tpu.memory_space<smem>>
    %740 = vector.broadcast %739 : f32 to vector<18x18xf32>
    %741 = arith.mulf %740, %738 : vector<18x18xf32>
    %742 = arith.addf %728, %741 : vector<18x18xf32>
    %c68_336 = arith.constant 68 : index
    %743 = memref.load %arg2[%c68_336] : memref<81xf32, #tpu.memory_space<smem>>
    %744 = vector.broadcast %743 : f32 to vector<18x18xf32>
    %745 = arith.mulf %744, %738 : vector<18x18xf32>
    %746 = arith.addf %732, %745 : vector<18x18xf32>
    %c77_337 = arith.constant 77 : index
    %747 = memref.load %arg2[%c77_337] : memref<81xf32, #tpu.memory_space<smem>>
    %748 = vector.broadcast %747 : f32 to vector<18x18xf32>
    %749 = arith.mulf %748, %738 : vector<18x18xf32>
    %750 = arith.addf %736, %749 : vector<18x18xf32>
    %c1_338 = arith.constant 1 : index
    %c2_339 = arith.constant 2 : index
    %c1_340 = arith.constant 1 : index
    %c1_341 = arith.constant 1 : index
    %751 = vector.load %arg5[%c1_338, %c2_339, %c1_340, %c1_341] : memref<2x3x20x20xf32, #tpu.memory_space<vmem>>, vector<1x1x18x18xf32>
    %752 = vector.shape_cast %751 : vector<1x1x18x18xf32> to vector<18x18xf32>
    %c58_342 = arith.constant 58 : index
    %753 = memref.load %arg2[%c58_342] : memref<81xf32, #tpu.memory_space<smem>>
    %754 = vector.broadcast %753 : f32 to vector<18x18xf32>
    %755 = arith.mulf %754, %752 : vector<18x18xf32>
    %756 = arith.addf %742, %755 : vector<18x18xf32>
    %c67_343 = arith.constant 67 : index
    %757 = memref.load %arg2[%c67_343] : memref<81xf32, #tpu.memory_space<smem>>
    %758 = vector.broadcast %757 : f32 to vector<18x18xf32>
    %759 = arith.mulf %758, %752 : vector<18x18xf32>
    %760 = arith.addf %746, %759 : vector<18x18xf32>
    %c76_344 = arith.constant 76 : index
    %761 = memref.load %arg2[%c76_344] : memref<81xf32, #tpu.memory_space<smem>>
    %762 = vector.broadcast %761 : f32 to vector<18x18xf32>
    %763 = arith.mulf %762, %752 : vector<18x18xf32>
    %764 = arith.addf %750, %763 : vector<18x18xf32>
    %c1_345 = arith.constant 1 : index
    %c2_346 = arith.constant 2 : index
    %c1_347 = arith.constant 1 : index
    %c2_348 = arith.constant 2 : index
    %765 = vector.load %arg5[%c1_345, %c2_346, %c1_347, %c2_348] : memref<2x3x20x20xf32, #tpu.memory_space<vmem>>, vector<1x1x18x18xf32>
    %766 = vector.shape_cast %765 : vector<1x1x18x18xf32> to vector<18x18xf32>
    %c57_349 = arith.constant 57 : index
    %767 = memref.load %arg2[%c57_349] : memref<81xf32, #tpu.memory_space<smem>>
    %768 = vector.broadcast %767 : f32 to vector<18x18xf32>
    %769 = arith.mulf %768, %766 : vector<18x18xf32>
    %770 = arith.addf %756, %769 : vector<18x18xf32>
    %c66_350 = arith.constant 66 : index
    %771 = memref.load %arg2[%c66_350] : memref<81xf32, #tpu.memory_space<smem>>
    %772 = vector.broadcast %771 : f32 to vector<18x18xf32>
    %773 = arith.mulf %772, %766 : vector<18x18xf32>
    %774 = arith.addf %760, %773 : vector<18x18xf32>
    %c75_351 = arith.constant 75 : index
    %775 = memref.load %arg2[%c75_351] : memref<81xf32, #tpu.memory_space<smem>>
    %776 = vector.broadcast %775 : f32 to vector<18x18xf32>
    %777 = arith.mulf %776, %766 : vector<18x18xf32>
    %778 = arith.addf %764, %777 : vector<18x18xf32>
    %c1_352 = arith.constant 1 : index
    %c2_353 = arith.constant 2 : index
    %c2_354 = arith.constant 2 : index
    %c0_355 = arith.constant 0 : index
    %779 = vector.load %arg5[%c1_352, %c2_353, %c2_354, %c0_355] : memref<2x3x20x20xf32, #tpu.memory_space<vmem>>, vector<1x1x18x18xf32>
    %780 = vector.shape_cast %779 : vector<1x1x18x18xf32> to vector<18x18xf32>
    %c56_356 = arith.constant 56 : index
    %781 = memref.load %arg2[%c56_356] : memref<81xf32, #tpu.memory_space<smem>>
    %782 = vector.broadcast %781 : f32 to vector<18x18xf32>
    %783 = arith.mulf %782, %780 : vector<18x18xf32>
    %784 = arith.addf %770, %783 : vector<18x18xf32>
    %c65_357 = arith.constant 65 : index
    %785 = memref.load %arg2[%c65_357] : memref<81xf32, #tpu.memory_space<smem>>
    %786 = vector.broadcast %785 : f32 to vector<18x18xf32>
    %787 = arith.mulf %786, %780 : vector<18x18xf32>
    %788 = arith.addf %774, %787 : vector<18x18xf32>
    %c74_358 = arith.constant 74 : index
    %789 = memref.load %arg2[%c74_358] : memref<81xf32, #tpu.memory_space<smem>>
    %790 = vector.broadcast %789 : f32 to vector<18x18xf32>
    %791 = arith.mulf %790, %780 : vector<18x18xf32>
    %792 = arith.addf %778, %791 : vector<18x18xf32>
    %c1_359 = arith.constant 1 : index
    %c2_360 = arith.constant 2 : index
    %c2_361 = arith.constant 2 : index
    %c1_362 = arith.constant 1 : index
    %793 = vector.load %arg5[%c1_359, %c2_360, %c2_361, %c1_362] : memref<2x3x20x20xf32, #tpu.memory_space<vmem>>, vector<1x1x18x18xf32>
    %794 = vector.shape_cast %793 : vector<1x1x18x18xf32> to vector<18x18xf32>
    %c55_363 = arith.constant 55 : index
    %795 = memref.load %arg2[%c55_363] : memref<81xf32, #tpu.memory_space<smem>>
    %796 = vector.broadcast %795 : f32 to vector<18x18xf32>
    %797 = arith.mulf %796, %794 : vector<18x18xf32>
    %798 = arith.addf %784, %797 : vector<18x18xf32>
    %c64_364 = arith.constant 64 : index
    %799 = memref.load %arg2[%c64_364] : memref<81xf32, #tpu.memory_space<smem>>
    %800 = vector.broadcast %799 : f32 to vector<18x18xf32>
    %801 = arith.mulf %800, %794 : vector<18x18xf32>
    %802 = arith.addf %788, %801 : vector<18x18xf32>
    %c73_365 = arith.constant 73 : index
    %803 = memref.load %arg2[%c73_365] : memref<81xf32, #tpu.memory_space<smem>>
    %804 = vector.broadcast %803 : f32 to vector<18x18xf32>
    %805 = arith.mulf %804, %794 : vector<18x18xf32>
    %806 = arith.addf %792, %805 : vector<18x18xf32>
    %c1_366 = arith.constant 1 : index
    %c2_367 = arith.constant 2 : index
    %c2_368 = arith.constant 2 : index
    %c2_369 = arith.constant 2 : index
    %807 = vector.load %arg5[%c1_366, %c2_367, %c2_368, %c2_369] : memref<2x3x20x20xf32, #tpu.memory_space<vmem>>, vector<1x1x18x18xf32>
    %808 = vector.shape_cast %807 : vector<1x1x18x18xf32> to vector<18x18xf32>
    %c54_370 = arith.constant 54 : index
    %809 = memref.load %arg2[%c54_370] : memref<81xf32, #tpu.memory_space<smem>>
    %810 = vector.broadcast %809 : f32 to vector<18x18xf32>
    %811 = arith.mulf %810, %808 : vector<18x18xf32>
    %812 = arith.addf %798, %811 : vector<18x18xf32>
    %c63_371 = arith.constant 63 : index
    %813 = memref.load %arg2[%c63_371] : memref<81xf32, #tpu.memory_space<smem>>
    %814 = vector.broadcast %813 : f32 to vector<18x18xf32>
    %815 = arith.mulf %814, %808 : vector<18x18xf32>
    %816 = arith.addf %802, %815 : vector<18x18xf32>
    %c72_372 = arith.constant 72 : index
    %817 = memref.load %arg2[%c72_372] : memref<81xf32, #tpu.memory_space<smem>>
    %818 = vector.broadcast %817 : f32 to vector<18x18xf32>
    %819 = arith.mulf %818, %808 : vector<18x18xf32>
    %820 = arith.addf %806, %819 : vector<18x18xf32>
    %cst_373 = arith.constant 1.100000e+01 : f32
    %cst_374 = arith.constant 1.600000e+01 : f32
    %821 = vector.broadcast %cst_373 : f32 to vector<18x18xf32>
    %822 = arith.maximumf %821, %812 : vector<18x18xf32>
    %823 = vector.broadcast %cst_374 : f32 to vector<18x18xf32>
    %824 = arith.minimumf %823, %822 : vector<18x18xf32>
    %c1_375 = arith.constant 1 : index
    %c0_376 = arith.constant 0 : index
    %c0_377 = arith.constant 0 : index
    %c0_378 = arith.constant 0 : index
    %825 = vector.load %arg4[%c1_375, %c0_376, %c0_377, %c0_378] : memref<2x3x18x18xf32, #tpu.memory_space<vmem>>, vector<1x1x18x18xf32>
    %826 = vector.shape_cast %825 : vector<1x1x18x18xf32> to vector<18x18xf32>
    %827 = vector.shape_cast %824 : vector<18x18xf32> to vector<1x1x18x18xf32>
    tpu.vector_store %arg4[%c1_375, %c0_376, %c0_377, %c0_378], %827 {strides = array<i32>} : memref<2x3x18x18xf32, #tpu.memory_space<vmem>>, vector<1x1x18x18xf32>,
    %cst_379 = arith.constant 1.100000e+01 : f32
    %cst_380 = arith.constant 1.600000e+01 : f32
    %828 = vector.broadcast %cst_379 : f32 to vector<18x18xf32>
    %829 = arith.maximumf %828, %816 : vector<18x18xf32>
    %830 = vector.broadcast %cst_380 : f32 to vector<18x18xf32>
    %831 = arith.minimumf %830, %829 : vector<18x18xf32>
    %c1_381 = arith.constant 1 : index
    %c1_382 = arith.constant 1 : index
    %c0_383 = arith.constant 0 : index
    %c0_384 = arith.constant 0 : index
    %832 = vector.load %arg4[%c1_381, %c1_382, %c0_383, %c0_384] : memref<2x3x18x18xf32, #tpu.memory_space<vmem>>, vector<1x1x18x18xf32>
    %833 = vector.shape_cast %832 : vector<1x1x18x18xf32> to vector<18x18xf32>
    %834 = vector.shape_cast %831 : vector<18x18xf32> to vector<1x1x18x18xf32>
    tpu.vector_store %arg4[%c1_381, %c1_382, %c0_383, %c0_384], %834 {strides = array<i32>} : memref<2x3x18x18xf32, #tpu.memory_space<vmem>>, vector<1x1x18x18xf32>,
    %cst_385 = arith.constant 1.100000e+01 : f32
    %cst_386 = arith.constant 1.600000e+01 : f32
    %835 = vector.broadcast %cst_385 : f32 to vector<18x18xf32>
    %836 = arith.maximumf %835, %820 : vector<18x18xf32>
    %837 = vector.broadcast %cst_386 : f32 to vector<18x18xf32>
    %838 = arith.minimumf %837, %836 : vector<18x18xf32>
    %c1_387 = arith.constant 1 : index
    %c2_388 = arith.constant 2 : index
    %c0_389 = arith.constant 0 : index
    %c0_390 = arith.constant 0 : index
    %839 = vector.load %arg4[%c1_387, %c2_388, %c0_389, %c0_390] : memref<2x3x18x18xf32, #tpu.memory_space<vmem>>, vector<1x1x18x18xf32>
    %840 = vector.shape_cast %839 : vector<1x1x18x18xf32> to vector<18x18xf32>
    %841 = vector.shape_cast %838 : vector<18x18xf32> to vector<1x1x18x18xf32>
    tpu.vector_store %arg4[%c1_387, %c2_388, %c0_389, %c0_390], %841 {strides = array<i32>} : memref<2x3x18x18xf32, #tpu.memory_space<vmem>>, vector<1x1x18x18xf32>,
    return
  }
  func.func @transform_0(%arg0: i32) -> (i32, i32, i32, i32) {
    %c0_i32 = arith.constant 0 : i32
    %c0_i32_0 = arith.constant 0 : i32
    %c0_i32_1 = arith.constant 0 : i32
    %c0_i32_2 = arith.constant 0 : i32
    %c0_i32_3 = arith.constant 0 : i32
    return %c0_i32, %c0_i32_0, %c0_i32_1, %c0_i32_2 : i32, i32, i32, i32
  }
  func.func @transform_1(%arg0: i32) -> i32 {
    %c0_i32 = arith.constant 0 : i32
    %c0_i32_0 = arith.constant 0 : i32
    return %c0_i32 : i32
  }
  func.func @transform_2(%arg0: i32) -> i32 {
    %c0_i32 = arith.constant 0 : i32
    %c0_i32_0 = arith.constant 0 : i32
    return %c0_i32 : i32
  }
  func.func @transform_3(%arg0: i32) -> (i32, i32, i32, i32) {
    %c0_i32 = arith.constant 0 : i32
    %c0_i32_0 = arith.constant 0 : i32
    %c0_i32_1 = arith.constant 0 : i32
    %c0_i32_2 = arith.constant 0 : i32
    %c0_i32_3 = arith.constant 0 : i32
    return %c0_i32, %c0_i32_0, %c0_i32_1, %c0_i32_2 : i32, i32, i32, i32
  }
}

</mosaic_0001>

<llo_original>
// kernel: conv_transpose_clamp.1
$region0: #{conv_transpose_clamp.1}
  #allocation0 [shape = 'u32[]', space=smem, size = 0x4, offset = 0x4, fixed_abs, tag = 'smem constant byte address 0x4 - core index']
  #allocation1 [shape = 'u32[144,128]{1,0:T(1,128)}', space=vmem, size = 0x12000, scoped, tag = 'internal scratch']
  #allocation2 [shape = 'f32[2,3,20,20]{3,2,1,0:T(8,128)}', space=vmem, size = 0x12000, scoped, tag = 'scratch operand']
  %s0 = inlined_call_operand.hbm [shape: f32[2,3,16,16], index: 0, kind: input, shape index: {}]
  %s1 = inlined_call_operand.vmem [shape: f32[81], index: 1, kind: input, shape index: {}]
  %s2 = inlined_call_operand.vmem [shape: f32[3], index: 2, kind: input, shape index: {}]
  %s3 = inlined_call_operand.vmem [shape: f32[2,3,18,18], index: 3, kind: output, shape index: {}]
  %s4 = sld [smem:[#allocation0]]
  $region34: #{conv_transpose_clamp.1} parent=0
    _
  %s6 = ssub.s32 1, %s4
  %s7 = scalar_select 0, %s6, %s4
  $region1: #{conv_transpose_clamp.1} parent=0
    #allocation3 [shape = 'u8[49152]{0}', space=vmem, size = 0xc000, scoped, tag = 'input window, operand 0, single buffered']
    #allocation4 [shape = 's32[1]{0}', space=sflag, size = 0x4, scoped, tag = 'scoped memory for conv_transpose_clamp.1']
    #allocation5 [shape = 's32[1]{0}', space=sflag, size = 0x4, scoped, tag = 'scoped memory for conv_transpose_clamp.1']
    #allocation6 [shape = 'u8[512]{0}', space=smem, size = 0x200, scoped, tag = 'input window, operand 1, single buffered']
    #allocation7 [shape = 'u8[512]{0}', space=smem, size = 0x200, scoped, tag = 'input window, operand 2, single buffered']
    #allocation8 [shape = 's32[1]{0}', space=sflag, size = 0x4, scoped, tag = 'scoped memory for conv_transpose_clamp.1']
    %8 = vsyncpa [#allocation4], 0
    %9 = vsyncpa [#allocation5], 0
    %10 = vsyncpa [#allocation8], 0
    // Predicated region
    $region2: #{conv_transpose_clamp.1} parent=1 // pred_check
      _
    $region3: #{conv_transpose_clamp.1} parent=1 // pred_check_branch
      %12 = sbr.rel (0) target = $region5
    $region4: #{conv_transpose_clamp.1} parent=1 // pred_region
      %s14 = ssub.s32 1536, 1536
      %15 = vsyncadd [#allocation4], %s14
      %s16 = sshll.u32 [#allocation3], 4
      %s17 = int_to_ptr.vmem [resolvable:$true] %s16
      %22 = dma.hbm_to_vmem [thread:$0]  %s0, 1536, %s17, [#allocation4], 128, 128, 8
    $region5: #{conv_transpose_clamp.1} parent=1 // pred_fallthru
      _
    // Predicated region
    $region6: #{conv_transpose_clamp.1} parent=1 // pred_check
      _
    $region7: #{conv_transpose_clamp.1} parent=1 // pred_check_branch
      %24 = sbr.rel (0) target = $region9
    $region8: #{conv_transpose_clamp.1} parent=1 // pred_region
      %s26 = ssub.s32 16, 16
      %27 = vsyncadd [#allocation5], %s26
      %s29 = sshll.u32 %s1, 4
      %s30 = int_to_ptr.vmem [resolvable:$true] %s29
      %32 = dma.vmem_to_smem %s30, 16, [#allocation6], [#allocation5]
    $region9: #{conv_transpose_clamp.1} parent=1 // pred_fallthru
      _
    // Predicated region
    $region10: #{conv_transpose_clamp.1} parent=1 // pred_check
      _
    $region11: #{conv_transpose_clamp.1} parent=1 // pred_check_branch
      %34 = sbr.rel (0) target = $region13
    $region12: #{conv_transpose_clamp.1} parent=1 // pred_region
      %s36 = ssub.s32 16, 16
      %37 = vsyncadd [#allocation8], %s36
      %s39 = sshll.u32 %s2, 4
      %s40 = int_to_ptr.vmem [resolvable:$true] %s39
      %42 = dma.vmem_to_smem %s40, 16, [#allocation7], [#allocation8]
    $region13: #{conv_transpose_clamp.1} parent=1 // pred_fallthru
      _
    // Predicated region
    $region14: #{conv_transpose_clamp.1} parent=1 // pred_check
      _
    $region15: #{conv_transpose_clamp.1} parent=1 // pred_check_branch
      %44 = sbr.rel (0) target = $region17
    $region16: #{conv_transpose_clamp.1} parent=1 // pred_region
      %45 = dma.done [#allocation4], 1536
    $region17: #{conv_transpose_clamp.1} parent=1 // pred_fallthru
      _
    // Predicated region
    $region18: #{conv_transpose_clamp.1} parent=1 // pred_check
      _
    $region19: #{conv_transpose_clamp.1} parent=1 // pred_check_branch
      %47 = sbr.rel (0) target = $region21
    $region20: #{conv_transpose_clamp.1} parent=1 // pred_region
      %48 = dma.done [#allocation5], 16
    $region21: #{conv_transpose_clamp.1} parent=1 // pred_fallthru
      _
    // Predicated region
    $region22: #{conv_transpose_clamp.1} parent=1 // pred_check
      _
    $region23: #{conv_transpose_clamp.1} parent=1 // pred_check_branch
      %50 = sbr.rel (0) target = $region25
    $region24: #{conv_transpose_clamp.1} parent=1 // pred_region
      %51 = dma.done [#allocation8], 16
    $region25: #{conv_transpose_clamp.1} parent=1 // pred_fallthru
      _
    %52 = sfence
    %vm53 = vcmask 162816
    %54 = vst.msk [vmem:[#allocation2] sm:$0xff] %vm53, 0.0
    %55 = vst.msk [vmem:[#allocation2 + $0x8] sm:$0xff] %vm53, 0.0
    %vm56 = vcmask 158720
    %57 = vst.msk [vmem:[#allocation2 + $0x10] sm:$0xf] %vm56, 0.0
    %58 = vst.msk [vmem:[#allocation2 + $0x18] sm:$0xff] %vm53, 0.0
    %59 = vst.msk [vmem:[#allocation2 + $0x20] sm:$0xff] %vm53, 0.0
    %60 = vst.msk [vmem:[#allocation2 + $0x28] sm:$0xf] %vm56, 0.0
    %61 = vst.msk [vmem:[#allocation2 + $0x30] sm:$0xff] %vm53, 0.0
    %62 = vst.msk [vmem:[#allocation2 + $0x38] sm:$0xff] %vm53, 0.0
    %63 = vst.msk [vmem:[#allocation2 + $0x40] sm:$0xf] %vm56, 0.0
    %64 = vst.msk [vmem:[#allocation2 + $0x48] sm:$0xff] %vm53, 0.0
    %65 = vst.msk [vmem:[#allocation2 + $0x50] sm:$0xff] %vm53, 0.0
    %66 = vst.msk [vmem:[#allocation2 + $0x58] sm:$0xf] %vm56, 0.0
    %67 = vst.msk [vmem:[#allocation2 + $0x60] sm:$0xff] %vm53, 0.0
    %68 = vst.msk [vmem:[#allocation2 + $0x68] sm:$0xff] %vm53, 0.0
    %69 = vst.msk [vmem:[#allocation2 + $0x70] sm:$0xf] %vm56, 0.0
    %70 = vst.msk [vmem:[#allocation2 + $0x78] sm:$0xff] %vm53, 0.0
    %71 = vst.msk [vmem:[#allocation2 + $0x80] sm:$0xff] %vm53, 0.0
    %72 = vst.msk [vmem:[#allocation2 + $0x88] sm:$0xf] %vm56, 0.0
    %v73 = vld [vmem:[#allocation3] sm:$0xff]
    %v74 = vld [vmem:[#allocation3 + $0x8] sm:$0xff]
    %77 = vrot.lane.b32.xlu0 %v73, 2
    %v78 = vpop.permute.xlu0 %77
    %79 = vrot.lane.b32.xlu0 %v74, 2
    %v80 = vpop.permute.xlu0 %79
    %vm83 = vcmask 146448
    %84 = vst.msk [vmem:[#allocation2 + $0x2] sm:$0xff] %vm83, %v78
    %85 = vst.msk [vmem:[#allocation2 + $0xa] sm:$0xff] %vm83, %v80
    %s86 = scalar_lea.vmem [#allocation3], 16
    %v87 = vld [vmem:[%s86] sm:$0xff]
    %v88 = vld [vmem:[%s86 + $0x8] sm:$0xff]
    %91 = vrot.lane.b32.xlu0 %v87, 2
    %v92 = vpop.permute.xlu0 %91
    %93 = vrot.lane.b32.xlu0 %v88, 2
    %v94 = vpop.permute.xlu0 %93
    %s97 = scalar_lea.vmem [#allocation2], 24
    %98 = vst.msk [vmem:[%s97 + $0x2] sm:$0xff] %vm83, %v92
    %99 = vst.msk [vmem:[%s97 + $0xa] sm:$0xff] %vm83, %v94
    %s100 = scalar_lea.vmem [#allocation3], 32
    %v101 = vld [vmem:[%s100] sm:$0xff]
    %v102 = vld [vmem:[%s100 + $0x8] sm:$0xff]
    %105 = vrot.lane.b32.xlu0 %v101, 2
    %v106 = vpop.permute.xlu0 %105
    %107 = vrot.lane.b32.xlu0 %v102, 2
    %v108 = vpop.permute.xlu0 %107
    %s111 = scalar_lea.vmem [#allocation2], 48
    %112 = vst.msk [vmem:[%s111 + $0x2] sm:$0xff] %vm83, %v106
    %113 = vst.msk [vmem:[%s111 + $0xa] sm:$0xff] %vm83, %v108
    %s114 = scalar_lea.vmem [#allocation3], 48
    %v115 = vld [vmem:[%s114] sm:$0xff]
    %v116 = vld [vmem:[%s114 + $0x8] sm:$0xff]
    %119 = vrot.lane.b32.xlu0 %v115, 2
    %v120 = vpop.permute.xlu0 %119
    %121 = vrot.lane.b32.xlu0 %v116, 2
    %v122 = vpop.permute.xlu0 %121
    %s125 = scalar_lea.vmem [#allocation2], 72
    %126 = vst.msk [vmem:[%s125 + $0x2] sm:$0xff] %vm83, %v120
    %127 = vst.msk [vmem:[%s125 + $0xa] sm:$0xff] %vm83, %v122
    %s128 = scalar_lea.vmem [#allocation3], 64
    %v129 = vld [vmem:[%s128] sm:$0xff]
    %v130 = vld [vmem:[%s128 + $0x8] sm:$0xff]
    %133 = vrot.lane.b32.xlu0 %v129, 2
    %v134 = vpop.permute.xlu0 %133
    %135 = vrot.lane.b32.xlu0 %v130, 2
    %v136 = vpop.permute.xlu0 %135
    %s139 = scalar_lea.vmem [#allocation2], 96
    %140 = vst.msk [vmem:[%s139 + $0x2] sm:$0xff] %vm83, %v134
    %141 = vst.msk [vmem:[%s139 + $0xa] sm:$0xff] %vm83, %v136
    %s142 = scalar_lea.vmem [#allocation3], 80
    %v143 = vld [vmem:[%s142] sm:$0xff]
    %v144 = vld [vmem:[%s142 + $0x8] sm:$0xff]
    %147 = vrot.lane.b32.xlu0 %v143, 2
    %v148 = vpop.permute.xlu0 %147
    %149 = vrot.lane.b32.xlu0 %v144, 2
    %v150 = vpop.permute.xlu0 %149
    %s153 = scalar_lea.vmem [#allocation2], 120
    %154 = vst.msk [vmem:[%s153 + $0x2] sm:$0xff] %vm83, %v148
    %155 = vst.msk [vmem:[%s153 + $0xa] sm:$0xff] %vm83, %v150
    %s156 = sld [smem:[#allocation7]]
    %v157 = vstv %s156
    %s158 = sld [smem:[#allocation7 + $0x1]]
    %v159 = vstv %s158
    %s160 = sld [smem:[#allocation7 + $0x2]]
    %v161 = vstv %s160
    %v162 = vld [vmem:[#allocation2] sm:$0xff]
    %v163 = vld [vmem:[#allocation2 + $0x8] sm:$0xff]
    %v164 = vld [vmem:[#allocation2 + $0x10] sm:$0x3]
    %s165 = sld [smem:[#allocation6 + $0x8]]
    %v166 = vstv %s165
    %v167 = vmul.f32 %v166, %v162
    %v168 = vmul.f32 %v166, %v163
    %v169 = vmul.f32 %v166, %v164
    %v170 = vadd.f32 %v157, %v167
    %v171 = vadd.f32 %v157, %v168
    %v172 = vadd.f32 %v157, %v169
    %s173 = sld [smem:[#allocation6 + $0x11]]
    %v174 = vstv %s173
    %v175 = vmul.f32 %v174, %v162
    %v176 = vmul.f32 %v174, %v163
    %v177 = vmul.f32 %v174, %v164
    %v178 = vadd.f32 %v159, %v175
    %v179 = vadd.f32 %v159, %v176
    %v180 = vadd.f32 %v159, %v177
    %s181 = sld [smem:[#allocation6 + $0x1a]]
    %v182 = vstv %s181
    %v183 = vmul.f32 %v182, %v162
    %v184 = vmul.f32 %v182, %v163
    %v185 = vmul.f32 %v182, %v164
    %v186 = vadd.f32 %v161, %v183
    %v187 = vadd.f32 %v161, %v184
    %v188 = vadd.f32 %v161, %v185
    %s189 = sld [smem:[#allocation6 + $0x7]]
    %v190 = vstv %s189
    %v191 = vmul.f32 %v190, %v162
    %v192 = vmul.f32 %v190, %v163
    %v193 = vmul.f32 %v190, %v164
    %197 = vrot.lane.b32.xlu0 %v191, 127
    %v198 = vpop.permute.xlu0 %197
    %199 = vrot.lane.b32.xlu0 %v192, 127
    %v200 = vpop.permute.xlu0 %199
    %201 = vrot.lane.b32.xlu0 %v193, 127
    %v202 = vpop.permute.xlu0 %201
    %v206 = vadd.f32 %v170, %v198
    %v207 = vadd.f32 %v171, %v200
    %v208 = vadd.f32 %v172, %v202
    %s209 = sld [smem:[#allocation6 + $0x10]]
    %v210 = vstv %s209
    %v211 = vmul.f32 %v210, %v162
    %v212 = vmul.f32 %v210, %v163
    %v213 = vmul.f32 %v210, %v164
    %217 = vrot.lane.b32.xlu0 %v211, 127
    %v218 = vpop.permute.xlu0 %217
    %219 = vrot.lane.b32.xlu0 %v212, 127
    %v220 = vpop.permute.xlu0 %219
    %221 = vrot.lane.b32.xlu0 %v213, 127
    %v222 = vpop.permute.xlu0 %221
    %v226 = vadd.f32 %v178, %v218
    %v227 = vadd.f32 %v179, %v220
    %v228 = vadd.f32 %v180, %v222
    %s229 = sld [smem:[#allocation6 + $0x19]]
    %v230 = vstv %s229
    %v231 = vmul.f32 %v230, %v162
    %v232 = vmul.f32 %v230, %v163
    %v233 = vmul.f32 %v230, %v164
    %237 = vrot.lane.b32.xlu0 %v231, 127
    %v238 = vpop.permute.xlu0 %237
    %239 = vrot.lane.b32.xlu0 %v232, 127
    %v240 = vpop.permute.xlu0 %239
    %241 = vrot.lane.b32.xlu0 %v233, 127
    %v242 = vpop.permute.xlu0 %241
    %v246 = vadd.f32 %v186, %v238
    %v247 = vadd.f32 %v187, %v240
    %v248 = vadd.f32 %v188, %v242
    %s249 = sld [smem:[#allocation6 + $0x6]]
    %v250 = vstv %s249
    %v251 = vmul.f32 %v250, %v162
    %v252 = vmul.f32 %v250, %v163
    %v253 = vmul.f32 %v250, %v164
    %257 = vrot.lane.b32.xlu0 %v251, 126
    %v258 = vpop.permute.xlu0 %257
    %259 = vrot.lane.b32.xlu0 %v252, 126
    %v260 = vpop.permute.xlu0 %259
    %261 = vrot.lane.b32.xlu0 %v253, 126
    %v262 = vpop.permute.xlu0 %261
    %v266 = vadd.f32 %v206, %v258
    %v267 = vadd.f32 %v207, %v260
    %v268 = vadd.f32 %v208, %v262
    %s269 = sld [smem:[#allocation6 + $0xf]]
    %v270 = vstv %s269
    %v271 = vmul.f32 %v270, %v162
    %v272 = vmul.f32 %v270, %v163
    %v273 = vmul.f32 %v270, %v164
    %277 = vrot.lane.b32.xlu0 %v271, 126
    %v278 = vpop.permute.xlu0 %277
    %279 = vrot.lane.b32.xlu0 %v272, 126
    %v280 = vpop.permute.xlu0 %279
    %281 = vrot.lane.b32.xlu0 %v273, 126
    %v282 = vpop.permute.xlu0 %281
    %v286 = vadd.f32 %v226, %v278
    %v287 = vadd.f32 %v227, %v280
    %v288 = vadd.f32 %v228, %v282
    %s289 = sld [smem:[#allocation6 + $0x18]]
    %v290 = vstv %s289
    %v291 = vmul.f32 %v290, %v162
    %v292 = vmul.f32 %v290, %v163
    %v293 = vmul.f32 %v290, %v164
    %297 = vrot.lane.b32.xlu0 %v291, 126
    %v298 = vpop.permute.xlu0 %297
    %299 = vrot.lane.b32.xlu0 %v292, 126
    %v300 = vpop.permute.xlu0 %299
    %301 = vrot.lane.b32.xlu0 %v293, 126
    %v302 = vpop.permute.xlu0 %301
    %v306 = vadd.f32 %v246, %v298
    %v307 = vadd.f32 %v247, %v300
    %v308 = vadd.f32 %v248, %v302
    %v309 = vld [vmem:[#allocation2 + $0x1] sm:$0xff]
    %v310 = vld [vmem:[#allocation2 + $0x9] sm:$0xff]
    %v311 = vld [vmem:[#allocation2 + $0x11] sm:$0x3]
    %s312 = sld [smem:[#allocation6 + $0x5]]
    %v313 = vstv %s312
    %v314 = vmul.f32 %v313, %v309
    %v315 = vmul.f32 %v313, %v310
    %v316 = vmul.f32 %v313, %v311
    %v317 = vadd.f32 %v266, %v314
    %v318 = vadd.f32 %v267, %v315
    %v319 = vadd.f32 %v268, %v316
    %s320 = sld [smem:[#allocation6 + $0xe]]
    %v321 = vstv %s320
    %v322 = vmul.f32 %v321, %v309
    %v323 = vmul.f32 %v321, %v310
    %v324 = vmul.f32 %v321, %v311
    %v325 = vadd.f32 %v286, %v322
    %v326 = vadd.f32 %v287, %v323
    %v327 = vadd.f32 %v288, %v324
    %s328 = sld [smem:[#allocation6 + $0x17]]
    %v329 = vstv %s328
    %v330 = vmul.f32 %v329, %v309
    %v331 = vmul.f32 %v329, %v310
    %v332 = vmul.f32 %v329, %v311
    %v333 = vadd.f32 %v306, %v330
    %v334 = vadd.f32 %v307, %v331
    %v335 = vadd.f32 %v308, %v332
    %s336 = sld [smem:[#allocation6 + $0x4]]
    %v337 = vstv %s336
    %v338 = vmul.f32 %v337, %v309
    %v339 = vmul.f32 %v337, %v310
    %v340 = vmul.f32 %v337, %v311
    %344 = vrot.lane.b32.xlu0 %v338, 127
    %v345 = vpop.permute.xlu0 %344
    %346 = vrot.lane.b32.xlu0 %v339, 127
    %v347 = vpop.permute.xlu0 %346
    %348 = vrot.lane.b32.xlu0 %v340, 127
    %v349 = vpop.permute.xlu0 %348
    %v353 = vadd.f32 %v317, %v345
    %v354 = vadd.f32 %v318, %v347
    %v355 = vadd.f32 %v319, %v349
    %s356 = sld [smem:[#allocation6 + $0xd]]
    %v357 = vstv %s356
    %v358 = vmul.f32 %v357, %v309
    %v359 = vmul.f32 %v357, %v310
    %v360 = vmul.f32 %v357, %v311
    %364 = vrot.lane.b32.xlu0 %v358, 127
    %v365 = vpop.permute.xlu0 %364
    %366 = vrot.lane.b32.xlu0 %v359, 127
    %v367 = vpop.permute.xlu0 %366
    %368 = vrot.lane.b32.xlu0 %v360, 127
    %v369 = vpop.permute.xlu0 %368
    %v373 = vadd.f32 %v325, %v365
    %v374 = vadd.f32 %v326, %v367
    %v375 = vadd.f32 %v327, %v369
    %s376 = sld [smem:[#allocation6 + $0x16]]
    %v377 = vstv %s376
    %v378 = vmul.f32 %v377, %v309
    %v379 = vmul.f32 %v377, %v310
    %v380 = vmul.f32 %v377, %v311
    %384 = vrot.lane.b32.xlu0 %v378, 127
    %v385 = vpop.permute.xlu0 %384
    %386 = vrot.lane.b32.xlu0 %v379, 127
    %v387 = vpop.permute.xlu0 %386
    %388 = vrot.lane.b32.xlu0 %v380, 127
    %v389 = vpop.permute.xlu0 %388
    %v393 = vadd.f32 %v333, %v385
    %v394 = vadd.f32 %v334, %v387
    %v395 = vadd.f32 %v335, %v389
    %s396 = sld [smem:[#allocation6 + $0x3]]
    %v397 = vstv %s396
    %v398 = vmul.f32 %v397, %v309
    %v399 = vmul.f32 %v397, %v310
    %v400 = vmul.f32 %v397, %v311
    %404 = vrot.lane.b32.xlu0 %v398, 126
    %v405 = vpop.permute.xlu0 %404
    %406 = vrot.lane.b32.xlu0 %v399, 126
    %v407 = vpop.permute.xlu0 %406
    %408 = vrot.lane.b32.xlu0 %v400, 126
    %v409 = vpop.permute.xlu0 %408
    %v413 = vadd.f32 %v353, %v405
    %v414 = vadd.f32 %v354, %v407
    %v415 = vadd.f32 %v355, %v409
    %s416 = sld [smem:[#allocation6 + $0xc]]
    %v417 = vstv %s416
    %v418 = vmul.f32 %v417, %v309
    %v419 = vmul.f32 %v417, %v310
    %v420 = vmul.f32 %v417, %v311
    %424 = vrot.lane.b32.xlu0 %v418, 126
    %v425 = vpop.permute.xlu0 %424
    %426 = vrot.lane.b32.xlu0 %v419, 126
    %v427 = vpop.permute.xlu0 %426
    %428 = vrot.lane.b32.xlu0 %v420, 126
    %v429 = vpop.permute.xlu0 %428
    %v433 = vadd.f32 %v373, %v425
    %v434 = vadd.f32 %v374, %v427
    %v435 = vadd.f32 %v375, %v429
    %s436 = sld [smem:[#allocation6 + $0x15]]
    %v437 = vstv %s436
    %v438 = vmul.f32 %v437, %v309
    %v439 = vmul.f32 %v437, %v310
    %v440 = vmul.f32 %v437, %v311
    %444 = vrot.lane.b32.xlu0 %v438, 126
    %v445 = vpop.permute.xlu0 %444
    %446 = vrot.lane.b32.xlu0 %v439, 126
    %v447 = vpop.permute.xlu0 %446
    %448 = vrot.lane.b32.xlu0 %v440, 126
    %v449 = vpop.permute.xlu0 %448
    %v453 = vadd.f32 %v393, %v445
    %v454 = vadd.f32 %v394, %v447
    %v455 = vadd.f32 %v395, %v449
    %v456 = vld [vmem:[#allocation2 + $0x2] sm:$0xff]
    %v457 = vld [vmem:[#allocation2 + $0xa] sm:$0xff]
    %v458 = vld [vmem:[#allocation2 + $0x12] sm:$0x3]
    %s459 = sld [smem:[#allocation6 + $0x2]]
    %v460 = vstv %s459
    %v461 = vmul.f32 %v460, %v456
    %v462 = vmul.f32 %v460, %v457
    %v463 = vmul.f32 %v460, %v458
    %v464 = vadd.f32 %v413, %v461
    %v465 = vadd.f32 %v414, %v462
    %v466 = vadd.f32 %v415, %v463
    %s467 = sld [smem:[#allocation6 + $0xb]]
    %v468 = vstv %s467
    %v469 = vmul.f32 %v468, %v456
    %v470 = vmul.f32 %v468, %v457
    %v471 = vmul.f32 %v468, %v458
    %v472 = vadd.f32 %v433, %v469
    %v473 = vadd.f32 %v434, %v470
    %v474 = vadd.f32 %v435, %v471
    %s475 = sld [smem:[#allocation6 + $0x14]]
    %v476 = vstv %s475
    %v477 = vmul.f32 %v476, %v456
    %v478 = vmul.f32 %v476, %v457
    %v479 = vmul.f32 %v476, %v458
    %v480 = vadd.f32 %v453, %v477
    %v481 = vadd.f32 %v454, %v478
    %v482 = vadd.f32 %v455, %v479
    %s483 = sld [smem:[#allocation6 + $0x1]]
    %v484 = vstv %s483
    %v485 = vmul.f32 %v484, %v456
    %v486 = vmul.f32 %v484, %v457
    %v487 = vmul.f32 %v484, %v458
    %491 = vrot.lane.b32.xlu0 %v485, 127
    %v492 = vpop.permute.xlu0 %491
    %493 = vrot.lane.b32.xlu0 %v486, 127
    %v494 = vpop.permute.xlu0 %493
    %495 = vrot.lane.b32.xlu0 %v487, 127
    %v496 = vpop.permute.xlu0 %495
    %v500 = vadd.f32 %v464, %v492
    %v501 = vadd.f32 %v465, %v494
    %v502 = vadd.f32 %v466, %v496
    %s503 = sld [smem:[#allocation6 + $0xa]]
    %v504 = vstv %s503
    %v505 = vmul.f32 %v504, %v456
    %v506 = vmul.f32 %v504, %v457
    %v507 = vmul.f32 %v504, %v458
    %511 = vrot.lane.b32.xlu0 %v505, 127
    %v512 = vpop.permute.xlu0 %511
    %513 = vrot.lane.b32.xlu0 %v506, 127
    %v514 = vpop.permute.xlu0 %513
    %515 = vrot.lane.b32.xlu0 %v507, 127
    %v516 = vpop.permute.xlu0 %515
    %v520 = vadd.f32 %v472, %v512
    %v521 = vadd.f32 %v473, %v514
    %v522 = vadd.f32 %v474, %v516
    %s523 = sld [smem:[#allocation6 + $0x13]]
    %v524 = vstv %s523
    %v525 = vmul.f32 %v524, %v456
    %v526 = vmul.f32 %v524, %v457
    %v527 = vmul.f32 %v524, %v458
    %531 = vrot.lane.b32.xlu0 %v525, 127
    %v532 = vpop.permute.xlu0 %531
    %533 = vrot.lane.b32.xlu0 %v526, 127
    %v534 = vpop.permute.xlu0 %533
    %535 = vrot.lane.b32.xlu0 %v527, 127
    %v536 = vpop.permute.xlu0 %535
    %v540 = vadd.f32 %v480, %v532
    %v541 = vadd.f32 %v481, %v534
    %v542 = vadd.f32 %v482, %v536
    %s543 = sld [smem:[#allocation6]]
    %v544 = vstv %s543
    %v545 = vmul.f32 %v544, %v456
    %v546 = vmul.f32 %v544, %v457
    %v547 = vmul.f32 %v544, %v458
    %551 = vrot.lane.b32.xlu0 %v545, 126
    %v552 = vpop.permute.xlu0 %551
    %553 = vrot.lane.b32.xlu0 %v546, 126
    %v554 = vpop.permute.xlu0 %553
    %555 = vrot.lane.b32.xlu0 %v547, 126
    %v556 = vpop.permute.xlu0 %555
    %v560 = vadd.f32 %v500, %v552
    %v561 = vadd.f32 %v501, %v554
    %v562 = vadd.f32 %v502, %v556
    %s563 = sld [smem:[#allocation6 + $0x9]]
    %v564 = vstv %s563
    %v565 = vmul.f32 %v564, %v456
    %v566 = vmul.f32 %v564, %v457
    %v567 = vmul.f32 %v564, %v458
    %571 = vrot.lane.b32.xlu0 %v565, 126
    %v572 = vpop.permute.xlu0 %571
    %573 = vrot.lane.b32.xlu0 %v566, 126
    %v574 = vpop.permute.xlu0 %573
    %575 = vrot.lane.b32.xlu0 %v567, 126
    %v576 = vpop.permute.xlu0 %575
    %v580 = vadd.f32 %v520, %v572
    %v581 = vadd.f32 %v521, %v574
    %v582 = vadd.f32 %v522, %v576
    %s583 = sld [smem:[#allocation6 + $0x12]]
    %v584 = vstv %s583
    %v585 = vmul.f32 %v584, %v456
    %v586 = vmul.f32 %v584, %v457
    %v587 = vmul.f32 %v584, %v458
    %591 = vrot.lane.b32.xlu0 %v585, 126
    %v592 = vpop.permute.xlu0 %591
    %593 = vrot.lane.b32.xlu0 %v586, 126
    %v594 = vpop.permute.xlu0 %593
    %595 = vrot.lane.b32.xlu0 %v587, 126
    %v596 = vpop.permute.xlu0 %595
    %v600 = vadd.f32 %v540, %v592
    %v601 = vadd.f32 %v541, %v594
    %v602 = vadd.f32 %v542, %v596
    %v603 = vld [vmem:[%s97] sm:$0xff]
    %v604 = vld [vmem:[%s97 + $0x8] sm:$0xff]
    %v605 = vld [vmem:[%s97 + $0x10] sm:$0x3]
    %s606 = sld [smem:[#allocation6 + $0x23]]
    %v607 = vstv %s606
    %v608 = vmul.f32 %v607, %v603
    %v609 = vmul.f32 %v607, %v604
    %v610 = vmul.f32 %v607, %v605
    %v611 = vadd.f32 %v560, %v608
    %v612 = vadd.f32 %v561, %v609
    %v613 = vadd.f32 %v562, %v610
    %s614 = sld [smem:[#allocation6 + $0x2c]]
    %v615 = vstv %s614
    %v616 = vmul.f32 %v615, %v603
    %v617 = vmul.f32 %v615, %v604
    %v618 = vmul.f32 %v615, %v605
    %v619 = vadd.f32 %v580, %v616
    %v620 = vadd.f32 %v581, %v617
    %v621 = vadd.f32 %v582, %v618
    %s622 = sld [smem:[#allocation6 + $0x35]]
    %v623 = vstv %s622
    %v624 = vmul.f32 %v623, %v603
    %v625 = vmul.f32 %v623, %v604
    %v626 = vmul.f32 %v623, %v605
    %v627 = vadd.f32 %v600, %v624
    %v628 = vadd.f32 %v601, %v625
    %v629 = vadd.f32 %v602, %v626
    %s630 = sld [smem:[#allocation6 + $0x22]]
    %v631 = vstv %s630
    %v632 = vmul.f32 %v631, %v603
    %v633 = vmul.f32 %v631, %v604
    %v634 = vmul.f32 %v631, %v605
    %638 = vrot.lane.b32.xlu0 %v632, 127
    %v639 = vpop.permute.xlu0 %638
    %640 = vrot.lane.b32.xlu0 %v633, 127
    %v641 = vpop.permute.xlu0 %640
    %642 = vrot.lane.b32.xlu0 %v634, 127
    %v643 = vpop.permute.xlu0 %642
    %v647 = vadd.f32 %v611, %v639
    %v648 = vadd.f32 %v612, %v641
    %v649 = vadd.f32 %v613, %v643
    %s650 = sld [smem:[#allocation6 + $0x2b]]
    %v651 = vstv %s650
    %v652 = vmul.f32 %v651, %v603
    %v653 = vmul.f32 %v651, %v604
    %v654 = vmul.f32 %v651, %v605
    %658 = vrot.lane.b32.xlu0 %v652, 127
    %v659 = vpop.permute.xlu0 %658
    %660 = vrot.lane.b32.xlu0 %v653, 127
    %v661 = vpop.permute.xlu0 %660
    %662 = vrot.lane.b32.xlu0 %v654, 127
    %v663 = vpop.permute.xlu0 %662
    %v667 = vadd.f32 %v619, %v659
    %v668 = vadd.f32 %v620, %v661
    %v669 = vadd.f32 %v621, %v663
    %s670 = sld [smem:[#allocation6 + $0x34]]
    %v671 = vstv %s670
    %v672 = vmul.f32 %v671, %v603
    %v673 = vmul.f32 %v671, %v604
    %v674 = vmul.f32 %v671, %v605
    %678 = vrot.lane.b32.xlu0 %v672, 127
    %v679 = vpop.permute.xlu0 %678
    %680 = vrot.lane.b32.xlu0 %v673, 127
    %v681 = vpop.permute.xlu0 %680
    %682 = vrot.lane.b32.xlu0 %v674, 127
    %v683 = vpop.permute.xlu0 %682
    %v687 = vadd.f32 %v627, %v679
    %v688 = vadd.f32 %v628, %v681
    %v689 = vadd.f32 %v629, %v683
    %s690 = sld [smem:[#allocation6 + $0x21]]
    %v691 = vstv %s690
    %v692 = vmul.f32 %v691, %v603
    %v693 = vmul.f32 %v691, %v604
    %v694 = vmul.f32 %v691, %v605
    %698 = vrot.lane.b32.xlu0 %v692, 126
    %v699 = vpop.permute.xlu0 %698
    %700 = vrot.lane.b32.xlu0 %v693, 126
    %v701 = vpop.permute.xlu0 %700
    %702 = vrot.lane.b32.xlu0 %v694, 126
    %v703 = vpop.permute.xlu0 %702
    %v707 = vadd.f32 %v647, %v699
    %v708 = vadd.f32 %v648, %v701
    %v709 = vadd.f32 %v649, %v703
    %s710 = sld [smem:[#allocation6 + $0x2a]]
    %v711 = vstv %s710
    %v712 = vmul.f32 %v711, %v603
    %v713 = vmul.f32 %v711, %v604
    %v714 = vmul.f32 %v711, %v605
    %718 = vrot.lane.b32.xlu0 %v712, 126
    %v719 = vpop.permute.xlu0 %718
    %720 = vrot.lane.b32.xlu0 %v713, 126
    %v721 = vpop.permute.xlu0 %720
    %722 = vrot.lane.b32.xlu0 %v714, 126
    %v723 = vpop.permute.xlu0 %722
    %v727 = vadd.f32 %v667, %v719
    %v728 = vadd.f32 %v668, %v721
    %v729 = vadd.f32 %v669, %v723
    %s730 = sld [smem:[#allocation6 + $0x33]]
    %v731 = vstv %s730
    %v732 = vmul.f32 %v731, %v603
    %v733 = vmul.f32 %v731, %v604
    %v734 = vmul.f32 %v731, %v605
    %738 = vrot.lane.b32.xlu0 %v732, 126
    %v739 = vpop.permute.xlu0 %738
    %740 = vrot.lane.b32.xlu0 %v733, 126
    %v741 = vpop.permute.xlu0 %740
    %742 = vrot.lane.b32.xlu0 %v734, 126
    %v743 = vpop.permute.xlu0 %742
    %v747 = vadd.f32 %v687, %v739
    %v748 = vadd.f32 %v688, %v741
    %v749 = vadd.f32 %v689, %v743
    %v750 = vld [vmem:[%s97 + $0x1] sm:$0xff]
    %v751 = vld [vmem:[%s97 + $0x9] sm:$0xff]
    %v752 = vld [vmem:[%s97 + $0x11] sm:$0x3]
    %s753 = sld [smem:[#allocation6 + $0x20]]
    %v754 = vstv %s753
    %v755 = vmul.f32 %v754, %v750
    %v756 = vmul.f32 %v754, %v751
    %v757 = vmul.f32 %v754, %v752
    %v758 = vadd.f32 %v707, %v755
    %v759 = vadd.f32 %v708, %v756
    %v760 = vadd.f32 %v709, %v757
    %s761 = sld [smem:[#allocation6 + $0x29]]
    %v762 = vstv %s761
    %v763 = vmul.f32 %v762, %v750
    %v764 = vmul.f32 %v762, %v751
    %v765 = vmul.f32 %v762, %v752
    %v766 = vadd.f32 %v727, %v763
    %v767 = vadd.f32 %v728, %v764
    %v768 = vadd.f32 %v729, %v765
    %s769 = sld [smem:[#allocation6 + $0x32]]
    %v770 = vstv %s769
    %v771 = vmul.f32 %v770, %v750
    %v772 = vmul.f32 %v770, %v751
    %v773 = vmul.f32 %v770, %v752
    %v774 = vadd.f32 %v747, %v771
    %v775 = vadd.f32 %v748, %v772
    %v776 = vadd.f32 %v749, %v773
    %s777 = sld [smem:[#allocation6 + $0x1f]]
    %v778 = vstv %s777
    %v779 = vmul.f32 %v778, %v750
    %v780 = vmul.f32 %v778, %v751
    %v781 = vmul.f32 %v778, %v752
    %785 = vrot.lane.b32.xlu0 %v779, 127
    %v786 = vpop.permute.xlu0 %785
    %787 = vrot.lane.b32.xlu0 %v780, 127
    %v788 = vpop.permute.xlu0 %787
    %789 = vrot.lane.b32.xlu0 %v781, 127
    %v790 = vpop.permute.xlu0 %789
    %v794 = vadd.f32 %v758, %v786
    %v795 = vadd.f32 %v759, %v788
    %v796 = vadd.f32 %v760, %v790
    %s797 = sld [smem:[#allocation6 + $0x28]]
    %v798 = vstv %s797
    %v799 = vmul.f32 %v798, %v750
    %v800 = vmul.f32 %v798, %v751
    %v801 = vmul.f32 %v798, %v752
    %805 = vrot.lane.b32.xlu0 %v799, 127
    %v806 = vpop.permute.xlu0 %805
    %807 = vrot.lane.b32.xlu0 %v800, 127
    %v808 = vpop.permute.xlu0 %807
    %809 = vrot.lane.b32.xlu0 %v801, 127
    %v810 = vpop.permute.xlu0 %809
    %v814 = vadd.f32 %v766, %v806
    %v815 = vadd.f32 %v767, %v808
    %v816 = vadd.f32 %v768, %v810
    %s817 = sld [smem:[#allocation6 + $0x31]]
    %v818 = vstv %s817
    %v819 = vmul.f32 %v818, %v750
    %v820 = vmul.f32 %v818, %v751
    %v821 = vmul.f32 %v818, %v752
    %825 = vrot.lane.b32.xlu0 %v819, 127
    %v826 = vpop.permute.xlu0 %825
    %827 = vrot.lane.b32.xlu0 %v820, 127
    %v828 = vpop.permute.xlu0 %827
    %829 = vrot.lane.b32.xlu0 %v821, 127
    %v830 = vpop.permute.xlu0 %829
    %v834 = vadd.f32 %v774, %v826
    %v835 = vadd.f32 %v775, %v828
    %v836 = vadd.f32 %v776, %v830
    %s837 = sld [smem:[#allocation6 + $0x1e]]
    %v838 = vstv %s837
    %v839 = vmul.f32 %v838, %v750
    %v840 = vmul.f32 %v838, %v751
    %v841 = vmul.f32 %v838, %v752
    %845 = vrot.lane.b32.xlu0 %v839, 126
    %v846 = vpop.permute.xlu0 %845
    %847 = vrot.lane.b32.xlu0 %v840, 126
    %v848 = vpop.permute.xlu0 %847
    %849 = vrot.lane.b32.xlu0 %v841, 126
    %v850 = vpop.permute.xlu0 %849
    %v854 = vadd.f32 %v794, %v846
    %v855 = vadd.f32 %v795, %v848
    %v856 = vadd.f32 %v796, %v850
    %s857 = sld [smem:[#allocation6 + $0x27]]
    %v858 = vstv %s857
    %v859 = vmul.f32 %v858, %v750
    %v860 = vmul.f32 %v858, %v751
    %v861 = vmul.f32 %v858, %v752
    %865 = vrot.lane.b32.xlu0 %v859, 126
    %v866 = vpop.permute.xlu0 %865
    %867 = vrot.lane.b32.xlu0 %v860, 126
    %v868 = vpop.permute.xlu0 %867
    %869 = vrot.lane.b32.xlu0 %v861, 126
    %v870 = vpop.permute.xlu0 %869
    %v874 = vadd.f32 %v814, %v866
    %v875 = vadd.f32 %v815, %v868
    %v876 = vadd.f32 %v816, %v870
    %s877 = sld [smem:[#allocation6 + $0x30]]
    %v878 = vstv %s877
    %v879 = vmul.f32 %v878, %v750
    %v880 = vmul.f32 %v878, %v751
    %v881 = vmul.f32 %v878, %v752
    %885 = vrot.lane.b32.xlu0 %v879, 126
    %v886 = vpop.permute.xlu0 %885
    %887 = vrot.lane.b32.xlu0 %v880, 126
    %v888 = vpop.permute.xlu0 %887
    %889 = vrot.lane.b32.xlu0 %v881, 126
    %v890 = vpop.permute.xlu0 %889
    %v894 = vadd.f32 %v834, %v886
    %v895 = vadd.f32 %v835, %v888
    %v896 = vadd.f32 %v836, %v890
    %v897 = vld [vmem:[%s97 + $0x2] sm:$0xff]
    %v898 = vld [vmem:[%s97 + $0xa] sm:$0xff]
    %v899 = vld [vmem:[%s97 + $0x12] sm:$0x3]
    %s900 = sld [smem:[#allocation6 + $0x1d]]
    %v901 = vstv %s900
    %v902 = vmul.f32 %v901, %v897
    %v903 = vmul.f32 %v901, %v898
    %v904 = vmul.f32 %v901, %v899
    %v905 = vadd.f32 %v854, %v902
    %v906 = vadd.f32 %v855, %v903
    %v907 = vadd.f32 %v856, %v904
    %s908 = sld [smem:[#allocation6 + $0x26]]
    %v909 = vstv %s908
    %v910 = vmul.f32 %v909, %v897
    %v911 = vmul.f32 %v909, %v898
    %v912 = vmul.f32 %v909, %v899
    %v913 = vadd.f32 %v874, %v910
    %v914 = vadd.f32 %v875, %v911
    %v915 = vadd.f32 %v876, %v912
    %s916 = sld [smem:[#allocation6 + $0x2f]]
    %v917 = vstv %s916
    %v918 = vmul.f32 %v917, %v897
    %v919 = vmul.f32 %v917, %v898
    %v920 = vmul.f32 %v917, %v899
    %v921 = vadd.f32 %v894, %v918
    %v922 = vadd.f32 %v895, %v919
    %v923 = vadd.f32 %v896, %v920
    %s924 = sld [smem:[#allocation6 + $0x1c]]
    %v925 = vstv %s924
    %v926 = vmul.f32 %v925, %v897
    %v927 = vmul.f32 %v925, %v898
    %v928 = vmul.f32 %v925, %v899
    %932 = vrot.lane.b32.xlu0 %v926, 127
    %v933 = vpop.permute.xlu0 %932
    %934 = vrot.lane.b32.xlu0 %v927, 127
    %v935 = vpop.permute.xlu0 %934
    %936 = vrot.lane.b32.xlu0 %v928, 127
    %v937 = vpop.permute.xlu0 %936
    %v941 = vadd.f32 %v905, %v933
    %v942 = vadd.f32 %v906, %v935
    %v943 = vadd.f32 %v907, %v937
    %s944 = sld [smem:[#allocation6 + $0x25]]
    %v945 = vstv %s944
    %v946 = vmul.f32 %v945, %v897
    %v947 = vmul.f32 %v945, %v898
    %v948 = vmul.f32 %v945, %v899
    %952 = vrot.lane.b32.xlu0 %v946, 127
    %v953 = vpop.permute.xlu0 %952
    %954 = vrot.lane.b32.xlu0 %v947, 127
    %v955 = vpop.permute.xlu0 %954
    %956 = vrot.lane.b32.xlu0 %v948, 127
    %v957 = vpop.permute.xlu0 %956
    %v961 = vadd.f32 %v913, %v953
    %v962 = vadd.f32 %v914, %v955
    %v963 = vadd.f32 %v915, %v957
    %s964 = sld [smem:[#allocation6 + $0x2e]]
    %v965 = vstv %s964
    %v966 = vmul.f32 %v965, %v897
    %v967 = vmul.f32 %v965, %v898
    %v968 = vmul.f32 %v965, %v899
    %972 = vrot.lane.b32.xlu0 %v966, 127
    %v973 = vpop.permute.xlu0 %972
    %974 = vrot.lane.b32.xlu0 %v967, 127
    %v975 = vpop.permute.xlu0 %974
    %976 = vrot.lane.b32.xlu0 %v968, 127
    %v977 = vpop.permute.xlu0 %976
    %v981 = vadd.f32 %v921, %v973
    %v982 = vadd.f32 %v922, %v975
    %v983 = vadd.f32 %v923, %v977
    %s984 = sld [smem:[#allocation6 + $0x1b]]
    %v985 = vstv %s984
    %v986 = vmul.f32 %v985, %v897
    %v987 = vmul.f32 %v985, %v898
    %v988 = vmul.f32 %v985, %v899
    %992 = vrot.lane.b32.xlu0 %v986, 126
    %v993 = vpop.permute.xlu0 %992
    %994 = vrot.lane.b32.xlu0 %v987, 126
    %v995 = vpop.permute.xlu0 %994
    %996 = vrot.lane.b32.xlu0 %v988, 126
    %v997 = vpop.permute.xlu0 %996
    %v1001 = vadd.f32 %v941, %v993
    %v1002 = vadd.f32 %v942, %v995
    %v1003 = vadd.f32 %v943, %v997
    %s1004 = sld [smem:[#allocation6 + $0x24]]
    %v1005 = vstv %s1004
    %v1006 = vmul.f32 %v1005, %v897
    %v1007 = vmul.f32 %v1005, %v898
    %v1008 = vmul.f32 %v1005, %v899
    %1012 = vrot.lane.b32.xlu0 %v1006, 126
    %v1013 = vpop.permute.xlu0 %1012
    %1014 = vrot.lane.b32.xlu0 %v1007, 126
    %v1015 = vpop.permute.xlu0 %1014
    %1016 = vrot.lane.b32.xlu0 %v1008, 126
    %v1017 = vpop.permute.xlu0 %1016
    %v1021 = vadd.f32 %v961, %v1013
    %v1022 = vadd.f32 %v962, %v1015
    %v1023 = vadd.f32 %v963, %v1017
    %s1024 = sld [smem:[#allocation6 + $0x2d]]
    %v1025 = vstv %s1024
    %v1026 = vmul.f32 %v1025, %v897
    %v1027 = vmul.f32 %v1025, %v898
    %v1028 = vmul.f32 %v1025, %v899
    %1032 = vrot.lane.b32.xlu0 %v1026, 126
    %v1033 = vpop.permute.xlu0 %1032
    %1034 = vrot.lane.b32.xlu0 %v1027, 126
    %v1035 = vpop.permute.xlu0 %1034
    %1036 = vrot.lane.b32.xlu0 %v1028, 126
    %v1037 = vpop.permute.xlu0 %1036
    %v1041 = vadd.f32 %v981, %v1033
    %v1042 = vadd.f32 %v982, %v1035
    %v1043 = vadd.f32 %v983, %v1037
    %v1044 = vld [vmem:[%s111] sm:$0xff]
    %v1045 = vld [vmem:[%s111 + $0x8] sm:$0xff]
    %v1046 = vld [vmem:[%s111 + $0x10] sm:$0x3]
    %s1047 = sld [smem:[#allocation6 + $0x3e]]
    %v1048 = vstv %s1047
    %v1049 = vmul.f32 %v1048, %v1044
    %v1050 = vmul.f32 %v1048, %v1045
    %v1051 = vmul.f32 %v1048, %v1046
    %v1052 = vadd.f32 %v1001, %v1049
    %v1053 = vadd.f32 %v1002, %v1050
    %v1054 = vadd.f32 %v1003, %v1051
    %s1055 = sld [smem:[#allocation6 + $0x47]]
    %v1056 = vstv %s1055
    %v1057 = vmul.f32 %v1056, %v1044
    %v1058 = vmul.f32 %v1056, %v1045
    %v1059 = vmul.f32 %v1056, %v1046
    %v1060 = vadd.f32 %v1021, %v1057
    %v1061 = vadd.f32 %v1022, %v1058
    %v1062 = vadd.f32 %v1023, %v1059
    %s1063 = sld [smem:[#allocation6 + $0x50]]
    %v1064 = vstv %s1063
    %v1065 = vmul.f32 %v1064, %v1044
    %v1066 = vmul.f32 %v1064, %v1045
    %v1067 = vmul.f32 %v1064, %v1046
    %v1068 = vadd.f32 %v1041, %v1065
    %v1069 = vadd.f32 %v1042, %v1066
    %v1070 = vadd.f32 %v1043, %v1067
    %s1071 = sld [smem:[#allocation6 + $0x3d]]
    %v1072 = vstv %s1071
    %v1073 = vmul.f32 %v1072, %v1044
    %v1074 = vmul.f32 %v1072, %v1045
    %v1075 = vmul.f32 %v1072, %v1046
    %1079 = vrot.lane.b32.xlu0 %v1073, 127
    %v1080 = vpop.permute.xlu0 %1079
    %1081 = vrot.lane.b32.xlu0 %v1074, 127
    %v1082 = vpop.permute.xlu0 %1081
    %1083 = vrot.lane.b32.xlu0 %v1075, 127
    %v1084 = vpop.permute.xlu0 %1083
    %v1088 = vadd.f32 %v1052, %v1080
    %v1089 = vadd.f32 %v1053, %v1082
    %v1090 = vadd.f32 %v1054, %v1084
    %s1091 = sld [smem:[#allocation6 + $0x46]]
    %v1092 = vstv %s1091
    %v1093 = vmul.f32 %v1092, %v1044
    %v1094 = vmul.f32 %v1092, %v1045
    %v1095 = vmul.f32 %v1092, %v1046
    %1099 = vrot.lane.b32.xlu0 %v1093, 127
    %v1100 = vpop.permute.xlu0 %1099
    %1101 = vrot.lane.b32.xlu0 %v1094, 127
    %v1102 = vpop.permute.xlu0 %1101
    %1103 = vrot.lane.b32.xlu0 %v1095, 127
    %v1104 = vpop.permute.xlu0 %1103
    %v1108 = vadd.f32 %v1060, %v1100
    %v1109 = vadd.f32 %v1061, %v1102
    %v1110 = vadd.f32 %v1062, %v1104
    %s1111 = sld [smem:[#allocation6 + $0x4f]]
    %v1112 = vstv %s1111
    %v1113 = vmul.f32 %v1112, %v1044
    %v1114 = vmul.f32 %v1112, %v1045
    %v1115 = vmul.f32 %v1112, %v1046
    %1119 = vrot.lane.b32.xlu0 %v1113, 127
    %v1120 = vpop.permute.xlu0 %1119
    %1121 = vrot.lane.b32.xlu0 %v1114, 127
    %v1122 = vpop.permute.xlu0 %1121
    %1123 = vrot.lane.b32.xlu0 %v1115, 127
    %v1124 = vpop.permute.xlu0 %1123
    %v1128 = vadd.f32 %v1068, %v1120
    %v1129 = vadd.f32 %v1069, %v1122
    %v1130 = vadd.f32 %v1070, %v1124
    %s1131 = sld [smem:[#allocation6 + $0x3c]]
    %v1132 = vstv %s1131
    %v1133 = vmul.f32 %v1132, %v1044
    %v1134 = vmul.f32 %v1132, %v1045
    %v1135 = vmul.f32 %v1132, %v1046
    %1139 = vrot.lane.b32.xlu0 %v1133, 126
    %v1140 = vpop.permute.xlu0 %1139
    %1141 = vrot.lane.b32.xlu0 %v1134, 126
    %v1142 = vpop.permute.xlu0 %1141
    %1143 = vrot.lane.b32.xlu0 %v1135, 126
    %v1144 = vpop.permute.xlu0 %1143
    %v1148 = vadd.f32 %v1088, %v1140
    %v1149 = vadd.f32 %v1089, %v1142
    %v1150 = vadd.f32 %v1090, %v1144
    %s1151 = sld [smem:[#allocation6 + $0x45]]
    %v1152 = vstv %s1151
    %v1153 = vmul.f32 %v1152, %v1044
    %v1154 = vmul.f32 %v1152, %v1045
    %v1155 = vmul.f32 %v1152, %v1046
    %1159 = vrot.lane.b32.xlu0 %v1153, 126
    %v1160 = vpop.permute.xlu0 %1159
    %1161 = vrot.lane.b32.xlu0 %v1154, 126
    %v1162 = vpop.permute.xlu0 %1161
    %1163 = vrot.lane.b32.xlu0 %v1155, 126
    %v1164 = vpop.permute.xlu0 %1163
    %v1168 = vadd.f32 %v1108, %v1160
    %v1169 = vadd.f32 %v1109, %v1162
    %v1170 = vadd.f32 %v1110, %v1164
    %s1171 = sld [smem:[#allocation6 + $0x4e]]
    %v1172 = vstv %s1171
    %v1173 = vmul.f32 %v1172, %v1044
    %v1174 = vmul.f32 %v1172, %v1045
    %v1175 = vmul.f32 %v1172, %v1046
    %1179 = vrot.lane.b32.xlu0 %v1173, 126
    %v1180 = vpop.permute.xlu0 %1179
    %1181 = vrot.lane.b32.xlu0 %v1174, 126
    %v1182 = vpop.permute.xlu0 %1181
    %1183 = vrot.lane.b32.xlu0 %v1175, 126
    %v1184 = vpop.permute.xlu0 %1183
    %v1188 = vadd.f32 %v1128, %v1180
    %v1189 = vadd.f32 %v1129, %v1182
    %v1190 = vadd.f32 %v1130, %v1184
    %v1191 = vld [vmem:[%s111 + $0x1] sm:$0xff]
    %v1192 = vld [vmem:[%s111 + $0x9] sm:$0xff]
    %v1193 = vld [vmem:[%s111 + $0x11] sm:$0x3]
    %s1194 = sld [smem:[#allocation6 + $0x3b]]
    %v1195 = vstv %s1194
    %v1196 = vmul.f32 %v1195, %v1191
    %v1197 = vmul.f32 %v1195, %v1192
    %v1198 = vmul.f32 %v1195, %v1193
    %v1199 = vadd.f32 %v1148, %v1196
    %v1200 = vadd.f32 %v1149, %v1197
    %v1201 = vadd.f32 %v1150, %v1198
    %s1202 = sld [smem:[#allocation6 + $0x44]]
    %v1203 = vstv %s1202
    %v1204 = vmul.f32 %v1203, %v1191
    %v1205 = vmul.f32 %v1203, %v1192
    %v1206 = vmul.f32 %v1203, %v1193
    %v1207 = vadd.f32 %v1168, %v1204
    %v1208 = vadd.f32 %v1169, %v1205
    %v1209 = vadd.f32 %v1170, %v1206
    %s1210 = sld [smem:[#allocation6 + $0x4d]]
    %v1211 = vstv %s1210
    %v1212 = vmul.f32 %v1211, %v1191
    %v1213 = vmul.f32 %v1211, %v1192
    %v1214 = vmul.f32 %v1211, %v1193
    %v1215 = vadd.f32 %v1188, %v1212
    %v1216 = vadd.f32 %v1189, %v1213
    %v1217 = vadd.f32 %v1190, %v1214
    %s1218 = sld [smem:[#allocation6 + $0x3a]]
    %v1219 = vstv %s1218
    %v1220 = vmul.f32 %v1219, %v1191
    %v1221 = vmul.f32 %v1219, %v1192
    %v1222 = vmul.f32 %v1219, %v1193
    %1226 = vrot.lane.b32.xlu0 %v1220, 127
    %v1227 = vpop.permute.xlu0 %1226
    %1228 = vrot.lane.b32.xlu0 %v1221, 127
    %v1229 = vpop.permute.xlu0 %1228
    %1230 = vrot.lane.b32.xlu0 %v1222, 127
    %v1231 = vpop.permute.xlu0 %1230
    %v1235 = vadd.f32 %v1199, %v1227
    %v1236 = vadd.f32 %v1200, %v1229
    %v1237 = vadd.f32 %v1201, %v1231
    %s1238 = sld [smem:[#allocation6 + $0x43]]
    %v1239 = vstv %s1238
    %v1240 = vmul.f32 %v1239, %v1191
    %v1241 = vmul.f32 %v1239, %v1192
    %v1242 = vmul.f32 %v1239, %v1193
    %1246 = vrot.lane.b32.xlu0 %v1240, 127
    %v1247 = vpop.permute.xlu0 %1246
    %1248 = vrot.lane.b32.xlu0 %v1241, 127
    %v1249 = vpop.permute.xlu0 %1248
    %1250 = vrot.lane.b32.xlu0 %v1242, 127
    %v1251 = vpop.permute.xlu0 %1250
    %v1255 = vadd.f32 %v1207, %v1247
    %v1256 = vadd.f32 %v1208, %v1249
    %v1257 = vadd.f32 %v1209, %v1251
    %s1258 = sld [smem:[#allocation6 + $0x4c]]
    %v1259 = vstv %s1258
    %v1260 = vmul.f32 %v1259, %v1191
    %v1261 = vmul.f32 %v1259, %v1192
    %v1262 = vmul.f32 %v1259, %v1193
    %1266 = vrot.lane.b32.xlu0 %v1260, 127
    %v1267 = vpop.permute.xlu0 %1266
    %1268 = vrot.lane.b32.xlu0 %v1261, 127
    %v1269 = vpop.permute.xlu0 %1268
    %1270 = vrot.lane.b32.xlu0 %v1262, 127
    %v1271 = vpop.permute.xlu0 %1270
    %v1275 = vadd.f32 %v1215, %v1267
    %v1276 = vadd.f32 %v1216, %v1269
    %v1277 = vadd.f32 %v1217, %v1271
    %s1278 = sld [smem:[#allocation6 + $0x39]]
    %v1279 = vstv %s1278
    %v1280 = vmul.f32 %v1279, %v1191
    %v1281 = vmul.f32 %v1279, %v1192
    %v1282 = vmul.f32 %v1279, %v1193
    %1286 = vrot.lane.b32.xlu0 %v1280, 126
    %v1287 = vpop.permute.xlu0 %1286
    %1288 = vrot.lane.b32.xlu0 %v1281, 126
    %v1289 = vpop.permute.xlu0 %1288
    %1290 = vrot.lane.b32.xlu0 %v1282, 126
    %v1291 = vpop.permute.xlu0 %1290
    %v1295 = vadd.f32 %v1235, %v1287
    %v1296 = vadd.f32 %v1236, %v1289
    %v1297 = vadd.f32 %v1237, %v1291
    %s1298 = sld [smem:[#allocation6 + $0x42]]
    %v1299 = vstv %s1298
    %v1300 = vmul.f32 %v1299, %v1191
    %v1301 = vmul.f32 %v1299, %v1192
    %v1302 = vmul.f32 %v1299, %v1193
    %1306 = vrot.lane.b32.xlu0 %v1300, 126
    %v1307 = vpop.permute.xlu0 %1306
    %1308 = vrot.lane.b32.xlu0 %v1301, 126
    %v1309 = vpop.permute.xlu0 %1308
    %1310 = vrot.lane.b32.xlu0 %v1302, 126
    %v1311 = vpop.permute.xlu0 %1310
    %v1315 = vadd.f32 %v1255, %v1307
    %v1316 = vadd.f32 %v1256, %v1309
    %v1317 = vadd.f32 %v1257, %v1311
    %s1318 = sld [smem:[#allocation6 + $0x4b]]
    %v1319 = vstv %s1318
    %v1320 = vmul.f32 %v1319, %v1191
    %v1321 = vmul.f32 %v1319, %v1192
    %v1322 = vmul.f32 %v1319, %v1193
    %1326 = vrot.lane.b32.xlu0 %v1320, 126
    %v1327 = vpop.permute.xlu0 %1326
    %1328 = vrot.lane.b32.xlu0 %v1321, 126
    %v1329 = vpop.permute.xlu0 %1328
    %1330 = vrot.lane.b32.xlu0 %v1322, 126
    %v1331 = vpop.permute.xlu0 %1330
    %v1335 = vadd.f32 %v1275, %v1327
    %v1336 = vadd.f32 %v1276, %v1329
    %v1337 = vadd.f32 %v1277, %v1331
    %v1338 = vld [vmem:[%s111 + $0x2] sm:$0xff]
    %v1339 = vld [vmem:[%s111 + $0xa] sm:$0xff]
    %v1340 = vld [vmem:[%s111 + $0x12] sm:$0x3]
    %s1341 = sld [smem:[#allocation6 + $0x38]]
    %v1342 = vstv %s1341
    %v1343 = vmul.f32 %v1342, %v1338
    %v1344 = vmul.f32 %v1342, %v1339
    %v1345 = vmul.f32 %v1342, %v1340
    %v1346 = vadd.f32 %v1295, %v1343
    %v1347 = vadd.f32 %v1296, %v1344
    %v1348 = vadd.f32 %v1297, %v1345
    %s1349 = sld [smem:[#allocation6 + $0x41]]
    %v1350 = vstv %s1349
    %v1351 = vmul.f32 %v1350, %v1338
    %v1352 = vmul.f32 %v1350, %v1339
    %v1353 = vmul.f32 %v1350, %v1340
    %v1354 = vadd.f32 %v1315, %v1351
    %v1355 = vadd.f32 %v1316, %v1352
    %v1356 = vadd.f32 %v1317, %v1353
    %s1357 = sld [smem:[#allocation6 + $0x4a]]
    %v1358 = vstv %s1357
    %v1359 = vmul.f32 %v1358, %v1338
    %v1360 = vmul.f32 %v1358, %v1339
    %v1361 = vmul.f32 %v1358, %v1340
    %v1362 = vadd.f32 %v1335, %v1359
    %v1363 = vadd.f32 %v1336, %v1360
    %v1364 = vadd.f32 %v1337, %v1361
    %s1365 = sld [smem:[#allocation6 + $0x37]]
    %v1366 = vstv %s1365
    %v1367 = vmul.f32 %v1366, %v1338
    %v1368 = vmul.f32 %v1366, %v1339
    %v1369 = vmul.f32 %v1366, %v1340
    %1373 = vrot.lane.b32.xlu0 %v1367, 127
    %v1374 = vpop.permute.xlu0 %1373
    %1375 = vrot.lane.b32.xlu0 %v1368, 127
    %v1376 = vpop.permute.xlu0 %1375
    %1377 = vrot.lane.b32.xlu0 %v1369, 127
    %v1378 = vpop.permute.xlu0 %1377
    %v1382 = vadd.f32 %v1346, %v1374
    %v1383 = vadd.f32 %v1347, %v1376
    %v1384 = vadd.f32 %v1348, %v1378
    %s1385 = sld [smem:[#allocation6 + $0x40]]
    %v1386 = vstv %s1385
    %v1387 = vmul.f32 %v1386, %v1338
    %v1388 = vmul.f32 %v1386, %v1339
    %v1389 = vmul.f32 %v1386, %v1340
    %1393 = vrot.lane.b32.xlu0 %v1387, 127
    %v1394 = vpop.permute.xlu0 %1393
    %1395 = vrot.lane.b32.xlu0 %v1388, 127
    %v1396 = vpop.permute.xlu0 %1395
    %1397 = vrot.lane.b32.xlu0 %v1389, 127
    %v1398 = vpop.permute.xlu0 %1397
    %v1402 = vadd.f32 %v1354, %v1394
    %v1403 = vadd.f32 %v1355, %v1396
    %v1404 = vadd.f32 %v1356, %v1398
    %s1405 = sld [smem:[#allocation6 + $0x49]]
    %v1406 = vstv %s1405
    %v1407 = vmul.f32 %v1406, %v1338
    %v1408 = vmul.f32 %v1406, %v1339
    %v1409 = vmul.f32 %v1406, %v1340
    %1413 = vrot.lane.b32.xlu0 %v1407, 127
    %v1414 = vpop.permute.xlu0 %1413
    %1415 = vrot.lane.b32.xlu0 %v1408, 127
    %v1416 = vpop.permute.xlu0 %1415
    %1417 = vrot.lane.b32.xlu0 %v1409, 127
    %v1418 = vpop.permute.xlu0 %1417
    %v1422 = vadd.f32 %v1362, %v1414
    %v1423 = vadd.f32 %v1363, %v1416
    %v1424 = vadd.f32 %v1364, %v1418
    %s1425 = sld [smem:[#allocation6 + $0x36]]
    %v1426 = vstv %s1425
    %v1427 = vmul.f32 %v1426, %v1338
    %v1428 = vmul.f32 %v1426, %v1339
    %v1429 = vmul.f32 %v1426, %v1340
    %1433 = vrot.lane.b32.xlu0 %v1427, 126
    %v1434 = vpop.permute.xlu0 %1433
    %1435 = vrot.lane.b32.xlu0 %v1428, 126
    %v1436 = vpop.permute.xlu0 %1435
    %1437 = vrot.lane.b32.xlu0 %v1429, 126
    %v1438 = vpop.permute.xlu0 %1437
    %v1442 = vadd.f32 %v1382, %v1434
    %v1443 = vadd.f32 %v1383, %v1436
    %v1444 = vadd.f32 %v1384, %v1438
    %s1445 = sld [smem:[#allocation6 + $0x3f]]
    %v1446 = vstv %s1445
    %v1447 = vmul.f32 %v1446, %v1338
    %v1448 = vmul.f32 %v1446, %v1339
    %v1449 = vmul.f32 %v1446, %v1340
    %1453 = vrot.lane.b32.xlu0 %v1447, 126
    %v1454 = vpop.permute.xlu0 %1453
    %1455 = vrot.lane.b32.xlu0 %v1448, 126
    %v1456 = vpop.permute.xlu0 %1455
    %1457 = vrot.lane.b32.xlu0 %v1449, 126
    %v1458 = vpop.permute.xlu0 %1457
    %v1462 = vadd.f32 %v1402, %v1454
    %v1463 = vadd.f32 %v1403, %v1456
    %v1464 = vadd.f32 %v1404, %v1458
    %s1465 = sld [smem:[#allocation6 + $0x48]]
    %v1466 = vstv %s1465
    %v1467 = vmul.f32 %v1466, %v1338
    %v1468 = vmul.f32 %v1466, %v1339
    %v1469 = vmul.f32 %v1466, %v1340
    %1473 = vrot.lane.b32.xlu0 %v1467, 126
    %v1474 = vpop.permute.xlu0 %1473
    %1475 = vrot.lane.b32.xlu0 %v1468, 126
    %v1476 = vpop.permute.xlu0 %1475
    %1477 = vrot.lane.b32.xlu0 %v1469, 126
    %v1478 = vpop.permute.xlu0 %1477
    %v1482 = vadd.f32 %v1422, %v1474
    %v1483 = vadd.f32 %v1423, %v1476
    %v1484 = vadd.f32 %v1424, %v1478
    %v1485 = vmax.f32 %v1442, 11.0
    %v1486 = vmax.f32 %v1443, 11.0
    %v1487 = vmax.f32 %v1444, 11.0
    %v1488 = vmin.f32 %v1485, 16.0
    %v1489 = vmin.f32 %v1486, 16.0
    %v1490 = vmin.f32 %v1487, 16.0
    %vm1491 = vcmask 146432
    %1492 = vst.msk [vmem:[%s3] sm:$0xff] %vm1491, %v1488
    %1493 = vst.msk [vmem:[%s3 + $0x8] sm:$0xff] %vm1491, %v1489
    %vm1494 = vcmask 140288
    %1495 = vst.msk [vmem:[%s3 + $0x10] sm:$0x3] %vm1494, %v1490
    %v1496 = vmax.f32 %v1462, 11.0
    %v1497 = vmax.f32 %v1463, 11.0
    %v1498 = vmax.f32 %v1464, 11.0
    %v1499 = vmin.f32 %v1496, 16.0
    %v1500 = vmin.f32 %v1497, 16.0
    %v1501 = vmin.f32 %v1498, 16.0
    %s1502 = scalar_lea.vmem %s3, 24
    %1503 = vst.msk [vmem:[%s1502] sm:$0xff] %vm1491, %v1499
    %1504 = vst.msk [vmem:[%s1502 + $0x8] sm:$0xff] %vm1491, %v1500
    %1505 = vst.msk [vmem:[%s1502 + $0x10] sm:$0x3] %vm1494, %v1501
    %v1506 = vmax.f32 %v1482, 11.0
    %v1507 = vmax.f32 %v1483, 11.0
    %v1508 = vmax.f32 %v1484, 11.0
    %v1509 = vmin.f32 %v1506, 16.0
    %v1510 = vmin.f32 %v1507, 16.0
    %v1511 = vmin.f32 %v1508, 16.0
    %s1512 = scalar_lea.vmem %s3, 48
    %1513 = vst.msk [vmem:[%s1512] sm:$0xff] %vm1491, %v1509
    %1514 = vst.msk [vmem:[%s1512 + $0x8] sm:$0xff] %vm1491, %v1510
    %1515 = vst.msk [vmem:[%s1512 + $0x10] sm:$0x3] %vm1494, %v1511
    %s1516 = sld [smem:[#allocation7]]
    %v1517 = vstv %s1516
    %s1518 = sld [smem:[#allocation7 + $0x1]]
    %v1519 = vstv %s1518
    %s1520 = sld [smem:[#allocation7 + $0x2]]
    %v1521 = vstv %s1520
    %v1522 = vld [vmem:[%s125] sm:$0xff]
    %v1523 = vld [vmem:[%s125 + $0x8] sm:$0xff]
    %v1524 = vld [vmem:[%s125 + $0x10] sm:$0x3]
    %s1525 = sld [smem:[#allocation6 + $0x8]]
    %v1526 = vstv %s1525
    %v1527 = vmul.f32 %v1526, %v1522
    %v1528 = vmul.f32 %v1526, %v1523
    %v1529 = vmul.f32 %v1526, %v1524
    %v1530 = vadd.f32 %v1517, %v1527
    %v1531 = vadd.f32 %v1517, %v1528
    %v1532 = vadd.f32 %v1517, %v1529
    %s1533 = sld [smem:[#allocation6 + $0x11]]
    %v1534 = vstv %s1533
    %v1535 = vmul.f32 %v1534, %v1522
    %v1536 = vmul.f32 %v1534, %v1523
    %v1537 = vmul.f32 %v1534, %v1524
    %v1538 = vadd.f32 %v1519, %v1535
    %v1539 = vadd.f32 %v1519, %v1536
    %v1540 = vadd.f32 %v1519, %v1537
    %s1541 = sld [smem:[#allocation6 + $0x1a]]
    %v1542 = vstv %s1541
    %v1543 = vmul.f32 %v1542, %v1522
    %v1544 = vmul.f32 %v1542, %v1523
    %v1545 = vmul.f32 %v1542, %v1524
    %v1546 = vadd.f32 %v1521, %v1543
    %v1547 = vadd.f32 %v1521, %v1544
    %v1548 = vadd.f32 %v1521, %v1545
    %s1549 = sld [smem:[#allocation6 + $0x7]]
    %v1550 = vstv %s1549
    %v1551 = vmul.f32 %v1550, %v1522
    %v1552 = vmul.f32 %v1550, %v1523
    %v1553 = vmul.f32 %v1550, %v1524
    %1557 = vrot.lane.b32.xlu0 %v1551, 127
    %v1558 = vpop.permute.xlu0 %1557
    %1559 = vrot.lane.b32.xlu0 %v1552, 127
    %v1560 = vpop.permute.xlu0 %1559
    %1561 = vrot.lane.b32.xlu0 %v1553, 127
    %v1562 = vpop.permute.xlu0 %1561
    %v1566 = vadd.f32 %v1530, %v1558
    %v1567 = vadd.f32 %v1531, %v1560
    %v1568 = vadd.f32 %v1532, %v1562
    %s1569 = sld [smem:[#allocation6 + $0x10]]
    %v1570 = vstv %s1569
    %v1571 = vmul.f32 %v1570, %v1522
    %v1572 = vmul.f32 %v1570, %v1523
    %v1573 = vmul.f32 %v1570, %v1524
    %1577 = vrot.lane.b32.xlu0 %v1571, 127
    %v1578 = vpop.permute.xlu0 %1577
    %1579 = vrot.lane.b32.xlu0 %v1572, 127
    %v1580 = vpop.permute.xlu0 %1579
    %1581 = vrot.lane.b32.xlu0 %v1573, 127
    %v1582 = vpop.permute.xlu0 %1581
    %v1586 = vadd.f32 %v1538, %v1578
    %v1587 = vadd.f32 %v1539, %v1580
    %v1588 = vadd.f32 %v1540, %v1582
    %s1589 = sld [smem:[#allocation6 + $0x19]]
    %v1590 = vstv %s1589
    %v1591 = vmul.f32 %v1590, %v1522
    %v1592 = vmul.f32 %v1590, %v1523
    %v1593 = vmul.f32 %v1590, %v1524
    %1597 = vrot.lane.b32.xlu0 %v1591, 127
    %v1598 = vpop.permute.xlu0 %1597
    %1599 = vrot.lane.b32.xlu0 %v1592, 127
    %v1600 = vpop.permute.xlu0 %1599
    %1601 = vrot.lane.b32.xlu0 %v1593, 127
    %v1602 = vpop.permute.xlu0 %1601
    %v1606 = vadd.f32 %v1546, %v1598
    %v1607 = vadd.f32 %v1547, %v1600
    %v1608 = vadd.f32 %v1548, %v1602
    %s1609 = sld [smem:[#allocation6 + $0x6]]
    %v1610 = vstv %s1609
    %v1611 = vmul.f32 %v1610, %v1522
    %v1612 = vmul.f32 %v1610, %v1523
    %v1613 = vmul.f32 %v1610, %v1524
    %1617 = vrot.lane.b32.xlu0 %v1611, 126
    %v1618 = vpop.permute.xlu0 %1617
    %1619 = vrot.lane.b32.xlu0 %v1612, 126
    %v1620 = vpop.permute.xlu0 %1619
    %1621 = vrot.lane.b32.xlu0 %v1613, 126
    %v1622 = vpop.permute.xlu0 %1621
    %v1626 = vadd.f32 %v1566, %v1618
    %v1627 = vadd.f32 %v1567, %v1620
    %v1628 = vadd.f32 %v1568, %v1622
    %s1629 = sld [smem:[#allocation6 + $0xf]]
    %v1630 = vstv %s1629
    %v1631 = vmul.f32 %v1630, %v1522
    %v1632 = vmul.f32 %v1630, %v1523
    %v1633 = vmul.f32 %v1630, %v1524
    %1637 = vrot.lane.b32.xlu0 %v1631, 126
    %v1638 = vpop.permute.xlu0 %1637
    %1639 = vrot.lane.b32.xlu0 %v1632, 126
    %v1640 = vpop.permute.xlu0 %1639
    %1641 = vrot.lane.b32.xlu0 %v1633, 126
    %v1642 = vpop.permute.xlu0 %1641
    %v1646 = vadd.f32 %v1586, %v1638
    %v1647 = vadd.f32 %v1587, %v1640
    %v1648 = vadd.f32 %v1588, %v1642
    %s1649 = sld [smem:[#allocation6 + $0x18]]
    %v1650 = vstv %s1649
    %v1651 = vmul.f32 %v1650, %v1522
    %v1652 = vmul.f32 %v1650, %v1523
    %v1653 = vmul.f32 %v1650, %v1524
    %1657 = vrot.lane.b32.xlu0 %v1651, 126
    %v1658 = vpop.permute.xlu0 %1657
    %1659 = vrot.lane.b32.xlu0 %v1652, 126
    %v1660 = vpop.permute.xlu0 %1659
    %1661 = vrot.lane.b32.xlu0 %v1653, 126
    %v1662 = vpop.permute.xlu0 %1661
    %v1666 = vadd.f32 %v1606, %v1658
    %v1667 = vadd.f32 %v1607, %v1660
    %v1668 = vadd.f32 %v1608, %v1662
    %v1669 = vld [vmem:[%s125 + $0x1] sm:$0xff]
    %v1670 = vld [vmem:[%s125 + $0x9] sm:$0xff]
    %v1671 = vld [vmem:[%s125 + $0x11] sm:$0x3]
    %s1672 = sld [smem:[#allocation6 + $0x5]]
    %v1673 = vstv %s1672
    %v1674 = vmul.f32 %v1673, %v1669
    %v1675 = vmul.f32 %v1673, %v1670
    %v1676 = vmul.f32 %v1673, %v1671
    %v1677 = vadd.f32 %v1626, %v1674
    %v1678 = vadd.f32 %v1627, %v1675
    %v1679 = vadd.f32 %v1628, %v1676
    %s1680 = sld [smem:[#allocation6 + $0xe]]
    %v1681 = vstv %s1680
    %v1682 = vmul.f32 %v1681, %v1669
    %v1683 = vmul.f32 %v1681, %v1670
    %v1684 = vmul.f32 %v1681, %v1671
    %v1685 = vadd.f32 %v1646, %v1682
    %v1686 = vadd.f32 %v1647, %v1683
    %v1687 = vadd.f32 %v1648, %v1684
    %s1688 = sld [smem:[#allocation6 + $0x17]]
    %v1689 = vstv %s1688
    %v1690 = vmul.f32 %v1689, %v1669
    %v1691 = vmul.f32 %v1689, %v1670
    %v1692 = vmul.f32 %v1689, %v1671
    %v1693 = vadd.f32 %v1666, %v1690
    %v1694 = vadd.f32 %v1667, %v1691
    %v1695 = vadd.f32 %v1668, %v1692
    %s1696 = sld [smem:[#allocation6 + $0x4]]
    %v1697 = vstv %s1696
    %v1698 = vmul.f32 %v1697, %v1669
    %v1699 = vmul.f32 %v1697, %v1670
    %v1700 = vmul.f32 %v1697, %v1671
    %1704 = vrot.lane.b32.xlu0 %v1698, 127
    %v1705 = vpop.permute.xlu0 %1704
    %1706 = vrot.lane.b32.xlu0 %v1699, 127
    %v1707 = vpop.permute.xlu0 %1706
    %1708 = vrot.lane.b32.xlu0 %v1700, 127
    %v1709 = vpop.permute.xlu0 %1708
    %v1713 = vadd.f32 %v1677, %v1705
    %v1714 = vadd.f32 %v1678, %v1707
    %v1715 = vadd.f32 %v1679, %v1709
    %s1716 = sld [smem:[#allocation6 + $0xd]]
    %v1717 = vstv %s1716
    %v1718 = vmul.f32 %v1717, %v1669
    %v1719 = vmul.f32 %v1717, %v1670
    %v1720 = vmul.f32 %v1717, %v1671
    %1724 = vrot.lane.b32.xlu0 %v1718, 127
    %v1725 = vpop.permute.xlu0 %1724
    %1726 = vrot.lane.b32.xlu0 %v1719, 127
    %v1727 = vpop.permute.xlu0 %1726
    %1728 = vrot.lane.b32.xlu0 %v1720, 127
    %v1729 = vpop.permute.xlu0 %1728
    %v1733 = vadd.f32 %v1685, %v1725
    %v1734 = vadd.f32 %v1686, %v1727
    %v1735 = vadd.f32 %v1687, %v1729
    %s1736 = sld [smem:[#allocation6 + $0x16]]
    %v1737 = vstv %s1736
    %v1738 = vmul.f32 %v1737, %v1669
    %v1739 = vmul.f32 %v1737, %v1670
    %v1740 = vmul.f32 %v1737, %v1671
    %1744 = vrot.lane.b32.xlu0 %v1738, 127
    %v1745 = vpop.permute.xlu0 %1744
    %1746 = vrot.lane.b32.xlu0 %v1739, 127
    %v1747 = vpop.permute.xlu0 %1746
    %1748 = vrot.lane.b32.xlu0 %v1740, 127
    %v1749 = vpop.permute.xlu0 %1748
    %v1753 = vadd.f32 %v1693, %v1745
    %v1754 = vadd.f32 %v1694, %v1747
    %v1755 = vadd.f32 %v1695, %v1749
    %s1756 = sld [smem:[#allocation6 + $0x3]]
    %v1757 = vstv %s1756
    %v1758 = vmul.f32 %v1757, %v1669
    %v1759 = vmul.f32 %v1757, %v1670
    %v1760 = vmul.f32 %v1757, %v1671
    %1764 = vrot.lane.b32.xlu0 %v1758, 126
    %v1765 = vpop.permute.xlu0 %1764
    %1766 = vrot.lane.b32.xlu0 %v1759, 126
    %v1767 = vpop.permute.xlu0 %1766
    %1768 = vrot.lane.b32.xlu0 %v1760, 126
    %v1769 = vpop.permute.xlu0 %1768
    %v1773 = vadd.f32 %v1713, %v1765
    %v1774 = vadd.f32 %v1714, %v1767
    %v1775 = vadd.f32 %v1715, %v1769
    %s1776 = sld [smem:[#allocation6 + $0xc]]
    %v1777 = vstv %s1776
    %v1778 = vmul.f32 %v1777, %v1669
    %v1779 = vmul.f32 %v1777, %v1670
    %v1780 = vmul.f32 %v1777, %v1671
    %1784 = vrot.lane.b32.xlu0 %v1778, 126
    %v1785 = vpop.permute.xlu0 %1784
    %1786 = vrot.lane.b32.xlu0 %v1779, 126
    %v1787 = vpop.permute.xlu0 %1786
    %1788 = vrot.lane.b32.xlu0 %v1780, 126
    %v1789 = vpop.permute.xlu0 %1788
    %v1793 = vadd.f32 %v1733, %v1785
    %v1794 = vadd.f32 %v1734, %v1787
    %v1795 = vadd.f32 %v1735, %v1789
    %s1796 = sld [smem:[#allocation6 + $0x15]]
    %v1797 = vstv %s1796
    %v1798 = vmul.f32 %v1797, %v1669
    %v1799 = vmul.f32 %v1797, %v1670
    %v1800 = vmul.f32 %v1797, %v1671
    %1804 = vrot.lane.b32.xlu0 %v1798, 126
    %v1805 = vpop.permute.xlu0 %1804
    %1806 = vrot.lane.b32.xlu0 %v1799, 126
    %v1807 = vpop.permute.xlu0 %1806
    %1808 = vrot.lane.b32.xlu0 %v1800, 126
    %v1809 = vpop.permute.xlu0 %1808
    %v1813 = vadd.f32 %v1753, %v1805
    %v1814 = vadd.f32 %v1754, %v1807
    %v1815 = vadd.f32 %v1755, %v1809
    %v1816 = vld [vmem:[%s125 + $0x2] sm:$0xff]
    %v1817 = vld [vmem:[%s125 + $0xa] sm:$0xff]
    %v1818 = vld [vmem:[%s125 + $0x12] sm:$0x3]
    %s1819 = sld [smem:[#allocation6 + $0x2]]
    %v1820 = vstv %s1819
    %v1821 = vmul.f32 %v1820, %v1816
    %v1822 = vmul.f32 %v1820, %v1817
    %v1823 = vmul.f32 %v1820, %v1818
    %v1824 = vadd.f32 %v1773, %v1821
    %v1825 = vadd.f32 %v1774, %v1822
    %v1826 = vadd.f32 %v1775, %v1823
    %s1827 = sld [smem:[#allocation6 + $0xb]]
    %v1828 = vstv %s1827
    %v1829 = vmul.f32 %v1828, %v1816
    %v1830 = vmul.f32 %v1828, %v1817
    %v1831 = vmul.f32 %v1828, %v1818
    %v1832 = vadd.f32 %v1793, %v1829
    %v1833 = vadd.f32 %v1794, %v1830
    %v1834 = vadd.f32 %v1795, %v1831
    %s1835 = sld [smem:[#allocation6 + $0x14]]
    %v1836 = vstv %s1835
    %v1837 = vmul.f32 %v1836, %v1816
    %v1838 = vmul.f32 %v1836, %v1817
    %v1839 = vmul.f32 %v1836, %v1818
    %v1840 = vadd.f32 %v1813, %v1837
    %v1841 = vadd.f32 %v1814, %v1838
    %v1842 = vadd.f32 %v1815, %v1839
    %s1843 = sld [smem:[#allocation6 + $0x1]]
    %v1844 = vstv %s1843
    %v1845 = vmul.f32 %v1844, %v1816
    %v1846 = vmul.f32 %v1844, %v1817
    %v1847 = vmul.f32 %v1844, %v1818
    %1851 = vrot.lane.b32.xlu0 %v1845, 127
    %v1852 = vpop.permute.xlu0 %1851
    %1853 = vrot.lane.b32.xlu0 %v1846, 127
    %v1854 = vpop.permute.xlu0 %1853
    %1855 = vrot.lane.b32.xlu0 %v1847, 127
    %v1856 = vpop.permute.xlu0 %1855
    %v1860 = vadd.f32 %v1824, %v1852
    %v1861 = vadd.f32 %v1825, %v1854
    %v1862 = vadd.f32 %v1826, %v1856
    %s1863 = sld [smem:[#allocation6 + $0xa]]
    %v1864 = vstv %s1863
    %v1865 = vmul.f32 %v1864, %v1816
    %v1866 = vmul.f32 %v1864, %v1817
    %v1867 = vmul.f32 %v1864, %v1818
    %1871 = vrot.lane.b32.xlu0 %v1865, 127
    %v1872 = vpop.permute.xlu0 %1871
    %1873 = vrot.lane.b32.xlu0 %v1866, 127
    %v1874 = vpop.permute.xlu0 %1873
    %1875 = vrot.lane.b32.xlu0 %v1867, 127
    %v1876 = vpop.permute.xlu0 %1875
    %v1880 = vadd.f32 %v1832, %v1872
    %v1881 = vadd.f32 %v1833, %v1874
    %v1882 = vadd.f32 %v1834, %v1876
    %s1883 = sld [smem:[#allocation6 + $0x13]]
    %v1884 = vstv %s1883
    %v1885 = vmul.f32 %v1884, %v1816
    %v1886 = vmul.f32 %v1884, %v1817
    %v1887 = vmul.f32 %v1884, %v1818
    %1891 = vrot.lane.b32.xlu0 %v1885, 127
    %v1892 = vpop.permute.xlu0 %1891
    %1893 = vrot.lane.b32.xlu0 %v1886, 127
    %v1894 = vpop.permute.xlu0 %1893
    %1895 = vrot.lane.b32.xlu0 %v1887, 127
    %v1896 = vpop.permute.xlu0 %1895
    %v1900 = vadd.f32 %v1840, %v1892
    %v1901 = vadd.f32 %v1841, %v1894
    %v1902 = vadd.f32 %v1842, %v1896
    %s1903 = sld [smem:[#allocation6]]
    %v1904 = vstv %s1903
    %v1905 = vmul.f32 %v1904, %v1816
    %v1906 = vmul.f32 %v1904, %v1817
    %v1907 = vmul.f32 %v1904, %v1818
    %1911 = vrot.lane.b32.xlu0 %v1905, 126
    %v1912 = vpop.permute.xlu0 %1911
    %1913 = vrot.lane.b32.xlu0 %v1906, 126
    %v1914 = vpop.permute.xlu0 %1913
    %1915 = vrot.lane.b32.xlu0 %v1907, 126
    %v1916 = vpop.permute.xlu0 %1915
    %v1920 = vadd.f32 %v1860, %v1912
    %v1921 = vadd.f32 %v1861, %v1914
    %v1922 = vadd.f32 %v1862, %v1916
    %s1923 = sld [smem:[#allocation6 + $0x9]]
    %v1924 = vstv %s1923
    %v1925 = vmul.f32 %v1924, %v1816
    %v1926 = vmul.f32 %v1924, %v1817
    %v1927 = vmul.f32 %v1924, %v1818
    %1931 = vrot.lane.b32.xlu0 %v1925, 126
    %v1932 = vpop.permute.xlu0 %1931
    %1933 = vrot.lane.b32.xlu0 %v1926, 126
    %v1934 = vpop.permute.xlu0 %1933
    %1935 = vrot.lane.b32.xlu0 %v1927, 126
    %v1936 = vpop.permute.xlu0 %1935
    %v1940 = vadd.f32 %v1880, %v1932
    %v1941 = vadd.f32 %v1881, %v1934
    %v1942 = vadd.f32 %v1882, %v1936
    %s1943 = sld [smem:[#allocation6 + $0x12]]
    %v1944 = vstv %s1943
    %v1945 = vmul.f32 %v1944, %v1816
    %v1946 = vmul.f32 %v1944, %v1817
    %v1947 = vmul.f32 %v1944, %v1818
    %1951 = vrot.lane.b32.xlu0 %v1945, 126
    %v1952 = vpop.permute.xlu0 %1951
    %1953 = vrot.lane.b32.xlu0 %v1946, 126
    %v1954 = vpop.permute.xlu0 %1953
    %1955 = vrot.lane.b32.xlu0 %v1947, 126
    %v1956 = vpop.permute.xlu0 %1955
    %v1960 = vadd.f32 %v1900, %v1952
    %v1961 = vadd.f32 %v1901, %v1954
    %v1962 = vadd.f32 %v1902, %v1956
    %v1963 = vld [vmem:[%s139] sm:$0xff]
    %v1964 = vld [vmem:[%s139 + $0x8] sm:$0xff]
    %v1965 = vld [vmem:[%s139 + $0x10] sm:$0x3]
    %s1966 = sld [smem:[#allocation6 + $0x23]]
    %v1967 = vstv %s1966
    %v1968 = vmul.f32 %v1967, %v1963
    %v1969 = vmul.f32 %v1967, %v1964
    %v1970 = vmul.f32 %v1967, %v1965
    %v1971 = vadd.f32 %v1920, %v1968
    %v1972 = vadd.f32 %v1921, %v1969
    %v1973 = vadd.f32 %v1922, %v1970
    %s1974 = sld [smem:[#allocation6 + $0x2c]]
    %v1975 = vstv %s1974
    %v1976 = vmul.f32 %v1975, %v1963
    %v1977 = vmul.f32 %v1975, %v1964
    %v1978 = vmul.f32 %v1975, %v1965
    %v1979 = vadd.f32 %v1940, %v1976
    %v1980 = vadd.f32 %v1941, %v1977
    %v1981 = vadd.f32 %v1942, %v1978
    %s1982 = sld [smem:[#allocation6 + $0x35]]
    %v1983 = vstv %s1982
    %v1984 = vmul.f32 %v1983, %v1963
    %v1985 = vmul.f32 %v1983, %v1964
    %v1986 = vmul.f32 %v1983, %v1965
    %v1987 = vadd.f32 %v1960, %v1984
    %v1988 = vadd.f32 %v1961, %v1985
    %v1989 = vadd.f32 %v1962, %v1986
    %s1990 = sld [smem:[#allocation6 + $0x22]]
    %v1991 = vstv %s1990
    %v1992 = vmul.f32 %v1991, %v1963
    %v1993 = vmul.f32 %v1991, %v1964
    %v1994 = vmul.f32 %v1991, %v1965
    %1998 = vrot.lane.b32.xlu0 %v1992, 127
    %v1999 = vpop.permute.xlu0 %1998
    %2000 = vrot.lane.b32.xlu0 %v1993, 127
    %v2001 = vpop.permute.xlu0 %2000
    %2002 = vrot.lane.b32.xlu0 %v1994, 127
    %v2003 = vpop.permute.xlu0 %2002
    %v2007 = vadd.f32 %v1971, %v1999
    %v2008 = vadd.f32 %v1972, %v2001
    %v2009 = vadd.f32 %v1973, %v2003
    %s2010 = sld [smem:[#allocation6 + $0x2b]]
    %v2011 = vstv %s2010
    %v2012 = vmul.f32 %v2011, %v1963
    %v2013 = vmul.f32 %v2011, %v1964
    %v2014 = vmul.f32 %v2011, %v1965
    %2018 = vrot.lane.b32.xlu0 %v2012, 127
    %v2019 = vpop.permute.xlu0 %2018
    %2020 = vrot.lane.b32.xlu0 %v2013, 127
    %v2021 = vpop.permute.xlu0 %2020
    %2022 = vrot.lane.b32.xlu0 %v2014, 127
    %v2023 = vpop.permute.xlu0 %2022
    %v2027 = vadd.f32 %v1979, %v2019
    %v2028 = vadd.f32 %v1980, %v2021
    %v2029 = vadd.f32 %v1981, %v2023
    %s2030 = sld [smem:[#allocation6 + $0x34]]
    %v2031 = vstv %s2030
    %v2032 = vmul.f32 %v2031, %v1963
    %v2033 = vmul.f32 %v2031, %v1964
    %v2034 = vmul.f32 %v2031, %v1965
    %2038 = vrot.lane.b32.xlu0 %v2032, 127
    %v2039 = vpop.permute.xlu0 %2038
    %2040 = vrot.lane.b32.xlu0 %v2033, 127
    %v2041 = vpop.permute.xlu0 %2040
    %2042 = vrot.lane.b32.xlu0 %v2034, 127
    %v2043 = vpop.permute.xlu0 %2042
    %v2047 = vadd.f32 %v1987, %v2039
    %v2048 = vadd.f32 %v1988, %v2041
    %v2049 = vadd.f32 %v1989, %v2043
    %s2050 = sld [smem:[#allocation6 + $0x21]]
    %v2051 = vstv %s2050
    %v2052 = vmul.f32 %v2051, %v1963
    %v2053 = vmul.f32 %v2051, %v1964
    %v2054 = vmul.f32 %v2051, %v1965
    %2058 = vrot.lane.b32.xlu0 %v2052, 126
    %v2059 = vpop.permute.xlu0 %2058
    %2060 = vrot.lane.b32.xlu0 %v2053, 126
    %v2061 = vpop.permute.xlu0 %2060
    %2062 = vrot.lane.b32.xlu0 %v2054, 126
    %v2063 = vpop.permute.xlu0 %2062
    %v2067 = vadd.f32 %v2007, %v2059
    %v2068 = vadd.f32 %v2008, %v2061
    %v2069 = vadd.f32 %v2009, %v2063
    %s2070 = sld [smem:[#allocation6 + $0x2a]]
    %v2071 = vstv %s2070
    %v2072 = vmul.f32 %v2071, %v1963
    %v2073 = vmul.f32 %v2071, %v1964
    %v2074 = vmul.f32 %v2071, %v1965
    %2078 = vrot.lane.b32.xlu0 %v2072, 126
    %v2079 = vpop.permute.xlu0 %2078
    %2080 = vrot.lane.b32.xlu0 %v2073, 126
    %v2081 = vpop.permute.xlu0 %2080
    %2082 = vrot.lane.b32.xlu0 %v2074, 126
    %v2083 = vpop.permute.xlu0 %2082
    %v2087 = vadd.f32 %v2027, %v2079
    %v2088 = vadd.f32 %v2028, %v2081
    %v2089 = vadd.f32 %v2029, %v2083
    %s2090 = sld [smem:[#allocation6 + $0x33]]
    %v2091 = vstv %s2090
    %v2092 = vmul.f32 %v2091, %v1963
    %v2093 = vmul.f32 %v2091, %v1964
    %v2094 = vmul.f32 %v2091, %v1965
    %2098 = vrot.lane.b32.xlu0 %v2092, 126
    %v2099 = vpop.permute.xlu0 %2098
    %2100 = vrot.lane.b32.xlu0 %v2093, 126
    %v2101 = vpop.permute.xlu0 %2100
    %2102 = vrot.lane.b32.xlu0 %v2094, 126
    %v2103 = vpop.permute.xlu0 %2102
    %v2107 = vadd.f32 %v2047, %v2099
    %v2108 = vadd.f32 %v2048, %v2101
    %v2109 = vadd.f32 %v2049, %v2103
    %v2110 = vld [vmem:[%s139 + $0x1] sm:$0xff]
    %v2111 = vld [vmem:[%s139 + $0x9] sm:$0xff]
    %v2112 = vld [vmem:[%s139 + $0x11] sm:$0x3]
    %s2113 = sld [smem:[#allocation6 + $0x20]]
    %v2114 = vstv %s2113
    %v2115 = vmul.f32 %v2114, %v2110
    %v2116 = vmul.f32 %v2114, %v2111
    %v2117 = vmul.f32 %v2114, %v2112
    %v2118 = vadd.f32 %v2067, %v2115
    %v2119 = vadd.f32 %v2068, %v2116
    %v2120 = vadd.f32 %v2069, %v2117
    %s2121 = sld [smem:[#allocation6 + $0x29]]
    %v2122 = vstv %s2121
    %v2123 = vmul.f32 %v2122, %v2110
    %v2124 = vmul.f32 %v2122, %v2111
    %v2125 = vmul.f32 %v2122, %v2112
    %v2126 = vadd.f32 %v2087, %v2123
    %v2127 = vadd.f32 %v2088, %v2124
    %v2128 = vadd.f32 %v2089, %v2125
    %s2129 = sld [smem:[#allocation6 + $0x32]]
    %v2130 = vstv %s2129
    %v2131 = vmul.f32 %v2130, %v2110
    %v2132 = vmul.f32 %v2130, %v2111
    %v2133 = vmul.f32 %v2130, %v2112
    %v2134 = vadd.f32 %v2107, %v2131
    %v2135 = vadd.f32 %v2108, %v2132
    %v2136 = vadd.f32 %v2109, %v2133
    %s2137 = sld [smem:[#allocation6 + $0x1f]]
    %v2138 = vstv %s2137
    %v2139 = vmul.f32 %v2138, %v2110
    %v2140 = vmul.f32 %v2138, %v2111
    %v2141 = vmul.f32 %v2138, %v2112
    %2145 = vrot.lane.b32.xlu0 %v2139, 127
    %v2146 = vpop.permute.xlu0 %2145
    %2147 = vrot.lane.b32.xlu0 %v2140, 127
    %v2148 = vpop.permute.xlu0 %2147
    %2149 = vrot.lane.b32.xlu0 %v2141, 127
    %v2150 = vpop.permute.xlu0 %2149
    %v2154 = vadd.f32 %v2118, %v2146
    %v2155 = vadd.f32 %v2119, %v2148
    %v2156 = vadd.f32 %v2120, %v2150
    %s2157 = sld [smem:[#allocation6 + $0x28]]
    %v2158 = vstv %s2157
    %v2159 = vmul.f32 %v2158, %v2110
    %v2160 = vmul.f32 %v2158, %v2111
    %v2161 = vmul.f32 %v2158, %v2112
    %2165 = vrot.lane.b32.xlu0 %v2159, 127
    %v2166 = vpop.permute.xlu0 %2165
    %2167 = vrot.lane.b32.xlu0 %v2160, 127
    %v2168 = vpop.permute.xlu0 %2167
    %2169 = vrot.lane.b32.xlu0 %v2161, 127
    %v2170 = vpop.permute.xlu0 %2169
    %v2174 = vadd.f32 %v2126, %v2166
    %v2175 = vadd.f32 %v2127, %v2168
    %v2176 = vadd.f32 %v2128, %v2170
    %s2177 = sld [smem:[#allocation6 + $0x31]]
    %v2178 = vstv %s2177
    %v2179 = vmul.f32 %v2178, %v2110
    %v2180 = vmul.f32 %v2178, %v2111
    %v2181 = vmul.f32 %v2178, %v2112
    %2185 = vrot.lane.b32.xlu0 %v2179, 127
    %v2186 = vpop.permute.xlu0 %2185
    %2187 = vrot.lane.b32.xlu0 %v2180, 127
    %v2188 = vpop.permute.xlu0 %2187
    %2189 = vrot.lane.b32.xlu0 %v2181, 127
    %v2190 = vpop.permute.xlu0 %2189
    %v2194 = vadd.f32 %v2134, %v2186
    %v2195 = vadd.f32 %v2135, %v2188
    %v2196 = vadd.f32 %v2136, %v2190
    %s2197 = sld [smem:[#allocation6 + $0x1e]]
    %v2198 = vstv %s2197
    %v2199 = vmul.f32 %v2198, %v2110
    %v2200 = vmul.f32 %v2198, %v2111
    %v2201 = vmul.f32 %v2198, %v2112
    %2205 = vrot.lane.b32.xlu0 %v2199, 126
    %v2206 = vpop.permute.xlu0 %2205
    %2207 = vrot.lane.b32.xlu0 %v2200, 126
    %v2208 = vpop.permute.xlu0 %2207
    %2209 = vrot.lane.b32.xlu0 %v2201, 126
    %v2210 = vpop.permute.xlu0 %2209
    %v2214 = vadd.f32 %v2154, %v2206
    %v2215 = vadd.f32 %v2155, %v2208
    %v2216 = vadd.f32 %v2156, %v2210
    %s2217 = sld [smem:[#allocation6 + $0x27]]
    %v2218 = vstv %s2217
    %v2219 = vmul.f32 %v2218, %v2110
    %v2220 = vmul.f32 %v2218, %v2111
    %v2221 = vmul.f32 %v2218, %v2112
    %2225 = vrot.lane.b32.xlu0 %v2219, 126
    %v2226 = vpop.permute.xlu0 %2225
    %2227 = vrot.lane.b32.xlu0 %v2220, 126
    %v2228 = vpop.permute.xlu0 %2227
    %2229 = vrot.lane.b32.xlu0 %v2221, 126
    %v2230 = vpop.permute.xlu0 %2229
    %v2234 = vadd.f32 %v2174, %v2226
    %v2235 = vadd.f32 %v2175, %v2228
    %v2236 = vadd.f32 %v2176, %v2230
    %s2237 = sld [smem:[#allocation6 + $0x30]]
    %v2238 = vstv %s2237
    %v2239 = vmul.f32 %v2238, %v2110
    %v2240 = vmul.f32 %v2238, %v2111
    %v2241 = vmul.f32 %v2238, %v2112
    %2245 = vrot.lane.b32.xlu0 %v2239, 126
    %v2246 = vpop.permute.xlu0 %2245
    %2247 = vrot.lane.b32.xlu0 %v2240, 126
    %v2248 = vpop.permute.xlu0 %2247
    %2249 = vrot.lane.b32.xlu0 %v2241, 126
    %v2250 = vpop.permute.xlu0 %2249
    %v2254 = vadd.f32 %v2194, %v2246
    %v2255 = vadd.f32 %v2195, %v2248
    %v2256 = vadd.f32 %v2196, %v2250
    %v2257 = vld [vmem:[%s139 + $0x2] sm:$0xff]
    %v2258 = vld [vmem:[%s139 + $0xa] sm:$0xff]
    %v2259 = vld [vmem:[%s139 + $0x12] sm:$0x3]
    %s2260 = sld [smem:[#allocation6 + $0x1d]]
    %v2261 = vstv %s2260
    %v2262 = vmul.f32 %v2261, %v2257
    %v2263 = vmul.f32 %v2261, %v2258
    %v2264 = vmul.f32 %v2261, %v2259
    %v2265 = vadd.f32 %v2214, %v2262
    %v2266 = vadd.f32 %v2215, %v2263
    %v2267 = vadd.f32 %v2216, %v2264
    %s2268 = sld [smem:[#allocation6 + $0x26]]
    %v2269 = vstv %s2268
    %v2270 = vmul.f32 %v2269, %v2257
    %v2271 = vmul.f32 %v2269, %v2258
    %v2272 = vmul.f32 %v2269, %v2259
    %v2273 = vadd.f32 %v2234, %v2270
    %v2274 = vadd.f32 %v2235, %v2271
    %v2275 = vadd.f32 %v2236, %v2272
    %s2276 = sld [smem:[#allocation6 + $0x2f]]
    %v2277 = vstv %s2276
    %v2278 = vmul.f32 %v2277, %v2257
    %v2279 = vmul.f32 %v2277, %v2258
    %v2280 = vmul.f32 %v2277, %v2259
    %v2281 = vadd.f32 %v2254, %v2278
    %v2282 = vadd.f32 %v2255, %v2279
    %v2283 = vadd.f32 %v2256, %v2280
    %s2284 = sld [smem:[#allocation6 + $0x1c]]
    %v2285 = vstv %s2284
    %v2286 = vmul.f32 %v2285, %v2257
    %v2287 = vmul.f32 %v2285, %v2258
    %v2288 = vmul.f32 %v2285, %v2259
    %2292 = vrot.lane.b32.xlu0 %v2286, 127
    %v2293 = vpop.permute.xlu0 %2292
    %2294 = vrot.lane.b32.xlu0 %v2287, 127
    %v2295 = vpop.permute.xlu0 %2294
    %2296 = vrot.lane.b32.xlu0 %v2288, 127
    %v2297 = vpop.permute.xlu0 %2296
    %v2301 = vadd.f32 %v2265, %v2293
    %v2302 = vadd.f32 %v2266, %v2295
    %v2303 = vadd.f32 %v2267, %v2297
    %s2304 = sld [smem:[#allocation6 + $0x25]]
    %v2305 = vstv %s2304
    %v2306 = vmul.f32 %v2305, %v2257
    %v2307 = vmul.f32 %v2305, %v2258
    %v2308 = vmul.f32 %v2305, %v2259
    %2312 = vrot.lane.b32.xlu0 %v2306, 127
    %v2313 = vpop.permute.xlu0 %2312
    %2314 = vrot.lane.b32.xlu0 %v2307, 127
    %v2315 = vpop.permute.xlu0 %2314
    %2316 = vrot.lane.b32.xlu0 %v2308, 127
    %v2317 = vpop.permute.xlu0 %2316
    %v2321 = vadd.f32 %v2273, %v2313
    %v2322 = vadd.f32 %v2274, %v2315
    %v2323 = vadd.f32 %v2275, %v2317
    %s2324 = sld [smem:[#allocation6 + $0x2e]]
    %v2325 = vstv %s2324
    %v2326 = vmul.f32 %v2325, %v2257
    %v2327 = vmul.f32 %v2325, %v2258
    %v2328 = vmul.f32 %v2325, %v2259
    %2332 = vrot.lane.b32.xlu0 %v2326, 127
    %v2333 = vpop.permute.xlu0 %2332
    %2334 = vrot.lane.b32.xlu0 %v2327, 127
    %v2335 = vpop.permute.xlu0 %2334
    %2336 = vrot.lane.b32.xlu0 %v2328, 127
    %v2337 = vpop.permute.xlu0 %2336
    %v2341 = vadd.f32 %v2281, %v2333
    %v2342 = vadd.f32 %v2282, %v2335
    %v2343 = vadd.f32 %v2283, %v2337
    %s2344 = sld [smem:[#allocation6 + $0x1b]]
    %v2345 = vstv %s2344
    %v2346 = vmul.f32 %v2345, %v2257
    %v2347 = vmul.f32 %v2345, %v2258
    %v2348 = vmul.f32 %v2345, %v2259
    %2352 = vrot.lane.b32.xlu0 %v2346, 126
    %v2353 = vpop.permute.xlu0 %2352
    %2354 = vrot.lane.b32.xlu0 %v2347, 126
    %v2355 = vpop.permute.xlu0 %2354
    %2356 = vrot.lane.b32.xlu0 %v2348, 126
    %v2357 = vpop.permute.xlu0 %2356
    %v2361 = vadd.f32 %v2301, %v2353
    %v2362 = vadd.f32 %v2302, %v2355
    %v2363 = vadd.f32 %v2303, %v2357
    %s2364 = sld [smem:[#allocation6 + $0x24]]
    %v2365 = vstv %s2364
    %v2366 = vmul.f32 %v2365, %v2257
    %v2367 = vmul.f32 %v2365, %v2258
    %v2368 = vmul.f32 %v2365, %v2259
    %2372 = vrot.lane.b32.xlu0 %v2366, 126
    %v2373 = vpop.permute.xlu0 %2372
    %2374 = vrot.lane.b32.xlu0 %v2367, 126
    %v2375 = vpop.permute.xlu0 %2374
    %2376 = vrot.lane.b32.xlu0 %v2368, 126
    %v2377 = vpop.permute.xlu0 %2376
    %v2381 = vadd.f32 %v2321, %v2373
    %v2382 = vadd.f32 %v2322, %v2375
    %v2383 = vadd.f32 %v2323, %v2377
    %s2384 = sld [smem:[#allocation6 + $0x2d]]
    %v2385 = vstv %s2384
    %v2386 = vmul.f32 %v2385, %v2257
    %v2387 = vmul.f32 %v2385, %v2258
    %v2388 = vmul.f32 %v2385, %v2259
    %2392 = vrot.lane.b32.xlu0 %v2386, 126
    %v2393 = vpop.permute.xlu0 %2392
    %2394 = vrot.lane.b32.xlu0 %v2387, 126
    %v2395 = vpop.permute.xlu0 %2394
    %2396 = vrot.lane.b32.xlu0 %v2388, 126
    %v2397 = vpop.permute.xlu0 %2396
    %v2401 = vadd.f32 %v2341, %v2393
    %v2402 = vadd.f32 %v2342, %v2395
    %v2403 = vadd.f32 %v2343, %v2397
    %v2404 = vld [vmem:[%s153] sm:$0xff]
    %v2405 = vld [vmem:[%s153 + $0x8] sm:$0xff]
    %v2406 = vld [vmem:[%s153 + $0x10] sm:$0x3]
    %s2407 = sld [smem:[#allocation6 + $0x3e]]
    %v2408 = vstv %s2407
    %v2409 = vmul.f32 %v2408, %v2404
    %v2410 = vmul.f32 %v2408, %v2405
    %v2411 = vmul.f32 %v2408, %v2406
    %v2412 = vadd.f32 %v2361, %v2409
    %v2413 = vadd.f32 %v2362, %v2410
    %v2414 = vadd.f32 %v2363, %v2411
    %s2415 = sld [smem:[#allocation6 + $0x47]]
    %v2416 = vstv %s2415
    %v2417 = vmul.f32 %v2416, %v2404
    %v2418 = vmul.f32 %v2416, %v2405
    %v2419 = vmul.f32 %v2416, %v2406
    %v2420 = vadd.f32 %v2381, %v2417
    %v2421 = vadd.f32 %v2382, %v2418
    %v2422 = vadd.f32 %v2383, %v2419
    %s2423 = sld [smem:[#allocation6 + $0x50]]
    %v2424 = vstv %s2423
    %v2425 = vmul.f32 %v2424, %v2404
    %v2426 = vmul.f32 %v2424, %v2405
    %v2427 = vmul.f32 %v2424, %v2406
    %v2428 = vadd.f32 %v2401, %v2425
    %v2429 = vadd.f32 %v2402, %v2426
    %v2430 = vadd.f32 %v2403, %v2427
    %s2431 = sld [smem:[#allocation6 + $0x3d]]
    %v2432 = vstv %s2431
    %v2433 = vmul.f32 %v2432, %v2404
    %v2434 = vmul.f32 %v2432, %v2405
    %v2435 = vmul.f32 %v2432, %v2406
    %2439 = vrot.lane.b32.xlu0 %v2433, 127
    %v2440 = vpop.permute.xlu0 %2439
    %2441 = vrot.lane.b32.xlu0 %v2434, 127
    %v2442 = vpop.permute.xlu0 %2441
    %2443 = vrot.lane.b32.xlu0 %v2435, 127
    %v2444 = vpop.permute.xlu0 %2443
    %v2448 = vadd.f32 %v2412, %v2440
    %v2449 = vadd.f32 %v2413, %v2442
    %v2450 = vadd.f32 %v2414, %v2444
    %s2451 = sld [smem:[#allocation6 + $0x46]]
    %v2452 = vstv %s2451
    %v2453 = vmul.f32 %v2452, %v2404
    %v2454 = vmul.f32 %v2452, %v2405
    %v2455 = vmul.f32 %v2452, %v2406
    %2459 = vrot.lane.b32.xlu0 %v2453, 127
    %v2460 = vpop.permute.xlu0 %2459
    %2461 = vrot.lane.b32.xlu0 %v2454, 127
    %v2462 = vpop.permute.xlu0 %2461
    %2463 = vrot.lane.b32.xlu0 %v2455, 127
    %v2464 = vpop.permute.xlu0 %2463
    %v2468 = vadd.f32 %v2420, %v2460
    %v2469 = vadd.f32 %v2421, %v2462
    %v2470 = vadd.f32 %v2422, %v2464
    %s2471 = sld [smem:[#allocation6 + $0x4f]]
    %v2472 = vstv %s2471
    %v2473 = vmul.f32 %v2472, %v2404
    %v2474 = vmul.f32 %v2472, %v2405
    %v2475 = vmul.f32 %v2472, %v2406
    %2479 = vrot.lane.b32.xlu0 %v2473, 127
    %v2480 = vpop.permute.xlu0 %2479
    %2481 = vrot.lane.b32.xlu0 %v2474, 127
    %v2482 = vpop.permute.xlu0 %2481
    %2483 = vrot.lane.b32.xlu0 %v2475, 127
    %v2484 = vpop.permute.xlu0 %2483
    %v2488 = vadd.f32 %v2428, %v2480
    %v2489 = vadd.f32 %v2429, %v2482
    %v2490 = vadd.f32 %v2430, %v2484
    %s2491 = sld [smem:[#allocation6 + $0x3c]]
    %v2492 = vstv %s2491
    %v2493 = vmul.f32 %v2492, %v2404
    %v2494 = vmul.f32 %v2492, %v2405
    %v2495 = vmul.f32 %v2492, %v2406
    %2499 = vrot.lane.b32.xlu0 %v2493, 126
    %v2500 = vpop.permute.xlu0 %2499
    %2501 = vrot.lane.b32.xlu0 %v2494, 126
    %v2502 = vpop.permute.xlu0 %2501
    %2503 = vrot.lane.b32.xlu0 %v2495, 126
    %v2504 = vpop.permute.xlu0 %2503
    %v2508 = vadd.f32 %v2448, %v2500
    %v2509 = vadd.f32 %v2449, %v2502
    %v2510 = vadd.f32 %v2450, %v2504
    %s2511 = sld [smem:[#allocation6 + $0x45]]
    %v2512 = vstv %s2511
    %v2513 = vmul.f32 %v2512, %v2404
    %v2514 = vmul.f32 %v2512, %v2405
    %v2515 = vmul.f32 %v2512, %v2406
    %2519 = vrot.lane.b32.xlu0 %v2513, 126
    %v2520 = vpop.permute.xlu0 %2519
    %2521 = vrot.lane.b32.xlu0 %v2514, 126
    %v2522 = vpop.permute.xlu0 %2521
    %2523 = vrot.lane.b32.xlu0 %v2515, 126
    %v2524 = vpop.permute.xlu0 %2523
    %v2528 = vadd.f32 %v2468, %v2520
    %v2529 = vadd.f32 %v2469, %v2522
    %v2530 = vadd.f32 %v2470, %v2524
    %s2531 = sld [smem:[#allocation6 + $0x4e]]
    %v2532 = vstv %s2531
    %v2533 = vmul.f32 %v2532, %v2404
    %v2534 = vmul.f32 %v2532, %v2405
    %v2535 = vmul.f32 %v2532, %v2406
    %2539 = vrot.lane.b32.xlu0 %v2533, 126
    %v2540 = vpop.permute.xlu0 %2539
    %2541 = vrot.lane.b32.xlu0 %v2534, 126
    %v2542 = vpop.permute.xlu0 %2541
    %2543 = vrot.lane.b32.xlu0 %v2535, 126
    %v2544 = vpop.permute.xlu0 %2543
    %v2548 = vadd.f32 %v2488, %v2540
    %v2549 = vadd.f32 %v2489, %v2542
    %v2550 = vadd.f32 %v2490, %v2544
    %v2551 = vld [vmem:[%s153 + $0x1] sm:$0xff]
    %v2552 = vld [vmem:[%s153 + $0x9] sm:$0xff]
    %v2553 = vld [vmem:[%s153 + $0x11] sm:$0x3]
    %s2554 = sld [smem:[#allocation6 + $0x3b]]
    %v2555 = vstv %s2554
    %v2556 = vmul.f32 %v2555, %v2551
    %v2557 = vmul.f32 %v2555, %v2552
    %v2558 = vmul.f32 %v2555, %v2553
    %v2559 = vadd.f32 %v2508, %v2556
    %v2560 = vadd.f32 %v2509, %v2557
    %v2561 = vadd.f32 %v2510, %v2558
    %s2562 = sld [smem:[#allocation6 + $0x44]]
    %v2563 = vstv %s2562
    %v2564 = vmul.f32 %v2563, %v2551
    %v2565 = vmul.f32 %v2563, %v2552
    %v2566 = vmul.f32 %v2563, %v2553
    %v2567 = vadd.f32 %v2528, %v2564
    %v2568 = vadd.f32 %v2529, %v2565
    %v2569 = vadd.f32 %v2530, %v2566
    %s2570 = sld [smem:[#allocation6 + $0x4d]]
    %v2571 = vstv %s2570
    %v2572 = vmul.f32 %v2571, %v2551
    %v2573 = vmul.f32 %v2571, %v2552
    %v2574 = vmul.f32 %v2571, %v2553
    %v2575 = vadd.f32 %v2548, %v2572
    %v2576 = vadd.f32 %v2549, %v2573
    %v2577 = vadd.f32 %v2550, %v2574
    %s2578 = sld [smem:[#allocation6 + $0x3a]]
    %v2579 = vstv %s2578
    %v2580 = vmul.f32 %v2579, %v2551
    %v2581 = vmul.f32 %v2579, %v2552
    %v2582 = vmul.f32 %v2579, %v2553
    %2586 = vrot.lane.b32.xlu0 %v2580, 127
    %v2587 = vpop.permute.xlu0 %2586
    %2588 = vrot.lane.b32.xlu0 %v2581, 127
    %v2589 = vpop.permute.xlu0 %2588
    %2590 = vrot.lane.b32.xlu0 %v2582, 127
    %v2591 = vpop.permute.xlu0 %2590
    %v2595 = vadd.f32 %v2559, %v2587
    %v2596 = vadd.f32 %v2560, %v2589
    %v2597 = vadd.f32 %v2561, %v2591
    %s2598 = sld [smem:[#allocation6 + $0x43]]
    %v2599 = vstv %s2598
    %v2600 = vmul.f32 %v2599, %v2551
    %v2601 = vmul.f32 %v2599, %v2552
    %v2602 = vmul.f32 %v2599, %v2553
    %2606 = vrot.lane.b32.xlu0 %v2600, 127
    %v2607 = vpop.permute.xlu0 %2606
    %2608 = vrot.lane.b32.xlu0 %v2601, 127
    %v2609 = vpop.permute.xlu0 %2608
    %2610 = vrot.lane.b32.xlu0 %v2602, 127
    %v2611 = vpop.permute.xlu0 %2610
    %v2615 = vadd.f32 %v2567, %v2607
    %v2616 = vadd.f32 %v2568, %v2609
    %v2617 = vadd.f32 %v2569, %v2611
    %s2618 = sld [smem:[#allocation6 + $0x4c]]
    %v2619 = vstv %s2618
    %v2620 = vmul.f32 %v2619, %v2551
    %v2621 = vmul.f32 %v2619, %v2552
    %v2622 = vmul.f32 %v2619, %v2553
    %2626 = vrot.lane.b32.xlu0 %v2620, 127
    %v2627 = vpop.permute.xlu0 %2626
    %2628 = vrot.lane.b32.xlu0 %v2621, 127
    %v2629 = vpop.permute.xlu0 %2628
    %2630 = vrot.lane.b32.xlu0 %v2622, 127
    %v2631 = vpop.permute.xlu0 %2630
    %v2635 = vadd.f32 %v2575, %v2627
    %v2636 = vadd.f32 %v2576, %v2629
    %v2637 = vadd.f32 %v2577, %v2631
    %s2638 = sld [smem:[#allocation6 + $0x39]]
    %v2639 = vstv %s2638
    %v2640 = vmul.f32 %v2639, %v2551
    %v2641 = vmul.f32 %v2639, %v2552
    %v2642 = vmul.f32 %v2639, %v2553
    %2646 = vrot.lane.b32.xlu0 %v2640, 126
    %v2647 = vpop.permute.xlu0 %2646
    %2648 = vrot.lane.b32.xlu0 %v2641, 126
    %v2649 = vpop.permute.xlu0 %2648
    %2650 = vrot.lane.b32.xlu0 %v2642, 126
    %v2651 = vpop.permute.xlu0 %2650
    %v2655 = vadd.f32 %v2595, %v2647
    %v2656 = vadd.f32 %v2596, %v2649
    %v2657 = vadd.f32 %v2597, %v2651
    %s2658 = sld [smem:[#allocation6 + $0x42]]
    %v2659 = vstv %s2658
    %v2660 = vmul.f32 %v2659, %v2551
    %v2661 = vmul.f32 %v2659, %v2552
    %v2662 = vmul.f32 %v2659, %v2553
    %2666 = vrot.lane.b32.xlu0 %v2660, 126
    %v2667 = vpop.permute.xlu0 %2666
    %2668 = vrot.lane.b32.xlu0 %v2661, 126
    %v2669 = vpop.permute.xlu0 %2668
    %2670 = vrot.lane.b32.xlu0 %v2662, 126
    %v2671 = vpop.permute.xlu0 %2670
    %v2675 = vadd.f32 %v2615, %v2667
    %v2676 = vadd.f32 %v2616, %v2669
    %v2677 = vadd.f32 %v2617, %v2671
    %s2678 = sld [smem:[#allocation6 + $0x4b]]
    %v2679 = vstv %s2678
    %v2680 = vmul.f32 %v2679, %v2551
    %v2681 = vmul.f32 %v2679, %v2552
    %v2682 = vmul.f32 %v2679, %v2553
    %2686 = vrot.lane.b32.xlu0 %v2680, 126
    %v2687 = vpop.permute.xlu0 %2686
    %2688 = vrot.lane.b32.xlu0 %v2681, 126
    %v2689 = vpop.permute.xlu0 %2688
    %2690 = vrot.lane.b32.xlu0 %v2682, 126
    %v2691 = vpop.permute.xlu0 %2690
    %v2695 = vadd.f32 %v2635, %v2687
    %v2696 = vadd.f32 %v2636, %v2689
    %v2697 = vadd.f32 %v2637, %v2691
    %v2698 = vld [vmem:[%s153 + $0x2] sm:$0xff]
    %v2699 = vld [vmem:[%s153 + $0xa] sm:$0xff]
    %v2700 = vld [vmem:[%s153 + $0x12] sm:$0x3]
    %s2701 = sld [smem:[#allocation6 + $0x38]]
    %v2702 = vstv %s2701
    %v2703 = vmul.f32 %v2702, %v2698
    %v2704 = vmul.f32 %v2702, %v2699
    %v2705 = vmul.f32 %v2702, %v2700
    %v2706 = vadd.f32 %v2655, %v2703
    %v2707 = vadd.f32 %v2656, %v2704
    %v2708 = vadd.f32 %v2657, %v2705
    %s2709 = sld [smem:[#allocation6 + $0x41]]
    %v2710 = vstv %s2709
    %v2711 = vmul.f32 %v2710, %v2698
    %v2712 = vmul.f32 %v2710, %v2699
    %v2713 = vmul.f32 %v2710, %v2700
    %v2714 = vadd.f32 %v2675, %v2711
    %v2715 = vadd.f32 %v2676, %v2712
    %v2716 = vadd.f32 %v2677, %v2713
    %s2717 = sld [smem:[#allocation6 + $0x4a]]
    %v2718 = vstv %s2717
    %v2719 = vmul.f32 %v2718, %v2698
    %v2720 = vmul.f32 %v2718, %v2699
    %v2721 = vmul.f32 %v2718, %v2700
    %v2722 = vadd.f32 %v2695, %v2719
    %v2723 = vadd.f32 %v2696, %v2720
    %v2724 = vadd.f32 %v2697, %v2721
    %s2725 = sld [smem:[#allocation6 + $0x37]]
    %v2726 = vstv %s2725
    %v2727 = vmul.f32 %v2726, %v2698
    %v2728 = vmul.f32 %v2726, %v2699
    %v2729 = vmul.f32 %v2726, %v2700
    %2733 = vrot.lane.b32.xlu0 %v2727, 127
    %v2734 = vpop.permute.xlu0 %2733
    %2735 = vrot.lane.b32.xlu0 %v2728, 127
    %v2736 = vpop.permute.xlu0 %2735
    %2737 = vrot.lane.b32.xlu0 %v2729, 127
    %v2738 = vpop.permute.xlu0 %2737
    %v2742 = vadd.f32 %v2706, %v2734
    %v2743 = vadd.f32 %v2707, %v2736
    %v2744 = vadd.f32 %v2708, %v2738
    %s2745 = sld [smem:[#allocation6 + $0x40]]
    %v2746 = vstv %s2745
    %v2747 = vmul.f32 %v2746, %v2698
    %v2748 = vmul.f32 %v2746, %v2699
    %v2749 = vmul.f32 %v2746, %v2700
    %2753 = vrot.lane.b32.xlu0 %v2747, 127
    %v2754 = vpop.permute.xlu0 %2753
    %2755 = vrot.lane.b32.xlu0 %v2748, 127
    %v2756 = vpop.permute.xlu0 %2755
    %2757 = vrot.lane.b32.xlu0 %v2749, 127
    %v2758 = vpop.permute.xlu0 %2757
    %v2762 = vadd.f32 %v2714, %v2754
    %v2763 = vadd.f32 %v2715, %v2756
    %v2764 = vadd.f32 %v2716, %v2758
    %s2765 = sld [smem:[#allocation6 + $0x49]]
    %v2766 = vstv %s2765
    %v2767 = vmul.f32 %v2766, %v2698
    %v2768 = vmul.f32 %v2766, %v2699
    %v2769 = vmul.f32 %v2766, %v2700
    %2773 = vrot.lane.b32.xlu0 %v2767, 127
    %v2774 = vpop.permute.xlu0 %2773
    %2775 = vrot.lane.b32.xlu0 %v2768, 127
    %v2776 = vpop.permute.xlu0 %2775
    %2777 = vrot.lane.b32.xlu0 %v2769, 127
    %v2778 = vpop.permute.xlu0 %2777
    %v2782 = vadd.f32 %v2722, %v2774
    %v2783 = vadd.f32 %v2723, %v2776
    %v2784 = vadd.f32 %v2724, %v2778
    %s2785 = sld [smem:[#allocation6 + $0x36]]
    %v2786 = vstv %s2785
    %v2787 = vmul.f32 %v2786, %v2698
    %v2788 = vmul.f32 %v2786, %v2699
    %v2789 = vmul.f32 %v2786, %v2700
    %2793 = vrot.lane.b32.xlu0 %v2787, 126
    %v2794 = vpop.permute.xlu0 %2793
    %2795 = vrot.lane.b32.xlu0 %v2788, 126
    %v2796 = vpop.permute.xlu0 %2795
    %2797 = vrot.lane.b32.xlu0 %v2789, 126
    %v2798 = vpop.permute.xlu0 %2797
    %v2802 = vadd.f32 %v2742, %v2794
    %v2803 = vadd.f32 %v2743, %v2796
    %v2804 = vadd.f32 %v2744, %v2798
    %s2805 = sld [smem:[#allocation6 + $0x3f]]
    %v2806 = vstv %s2805
    %v2807 = vmul.f32 %v2806, %v2698
    %v2808 = vmul.f32 %v2806, %v2699
    %v2809 = vmul.f32 %v2806, %v2700
    %2813 = vrot.lane.b32.xlu0 %v2807, 126
    %v2814 = vpop.permute.xlu0 %2813
    %2815 = vrot.lane.b32.xlu0 %v2808, 126
    %v2816 = vpop.permute.xlu0 %2815
    %2817 = vrot.lane.b32.xlu0 %v2809, 126
    %v2818 = vpop.permute.xlu0 %2817
    %v2822 = vadd.f32 %v2762, %v2814
    %v2823 = vadd.f32 %v2763, %v2816
    %v2824 = vadd.f32 %v2764, %v2818
    %s2825 = sld [smem:[#allocation6 + $0x48]]
    %v2826 = vstv %s2825
    %v2827 = vmul.f32 %v2826, %v2698
    %v2828 = vmul.f32 %v2826, %v2699
    %v2829 = vmul.f32 %v2826, %v2700
    %2833 = vrot.lane.b32.xlu0 %v2827, 126
    %v2834 = vpop.permute.xlu0 %2833
    %2835 = vrot.lane.b32.xlu0 %v2828, 126
    %v2836 = vpop.permute.xlu0 %2835
    %2837 = vrot.lane.b32.xlu0 %v2829, 126
    %v2838 = vpop.permute.xlu0 %2837
    %v2842 = vadd.f32 %v2782, %v2834
    %v2843 = vadd.f32 %v2783, %v2836
    %v2844 = vadd.f32 %v2784, %v2838
    %v2845 = vmax.f32 %v2802, 11.0
    %v2846 = vmax.f32 %v2803, 11.0
    %v2847 = vmax.f32 %v2804, 11.0
    %v2848 = vmin.f32 %v2845, 16.0
    %v2849 = vmin.f32 %v2846, 16.0
    %v2850 = vmin.f32 %v2847, 16.0
    %s2851 = scalar_lea.vmem %s3, 72
    %2852 = vst.msk [vmem:[%s2851] sm:$0xff] %vm1491, %v2848
    %2853 = vst.msk [vmem:[%s2851 + $0x8] sm:$0xff] %vm1491, %v2849
    %2854 = vst.msk [vmem:[%s2851 + $0x10] sm:$0x3] %vm1494, %v2850
    %v2855 = vmax.f32 %v2822, 11.0
    %v2856 = vmax.f32 %v2823, 11.0
    %v2857 = vmax.f32 %v2824, 11.0
    %v2858 = vmin.f32 %v2855, 16.0
    %v2859 = vmin.f32 %v2856, 16.0
    %v2860 = vmin.f32 %v2857, 16.0
    %s2861 = scalar_lea.vmem %s3, 96
    %2862 = vst.msk [vmem:[%s2861] sm:$0xff] %vm1491, %v2858
    %2863 = vst.msk [vmem:[%s2861 + $0x8] sm:$0xff] %vm1491, %v2859
    %2864 = vst.msk [vmem:[%s2861 + $0x10] sm:$0x3] %vm1494, %v2860
    %v2865 = vmax.f32 %v2842, 11.0
    %v2866 = vmax.f32 %v2843, 11.0
    %v2867 = vmax.f32 %v2844, 11.0
    %v2868 = vmin.f32 %v2865, 16.0
    %v2869 = vmin.f32 %v2866, 16.0
    %v2870 = vmin.f32 %v2867, 16.0
    %s2871 = scalar_lea.vmem %s3, 120
    %2872 = vst.msk [vmem:[%s2871] sm:$0xff] %vm1491, %v2868
    %2873 = vst.msk [vmem:[%s2871 + $0x8] sm:$0xff] %vm1491, %v2869
    %2874 = vst.msk [vmem:[%s2871 + $0x10] sm:$0x3] %vm1494, %v2870
    // Predicated region
    $region26: #{conv_transpose_clamp.1} parent=1 // pred_check
      _
    $region27: #{conv_transpose_clamp.1} parent=1 // pred_check_branch
      %2876 = sbr.rel (0) target = $region29
    $region28: #{conv_transpose_clamp.1} parent=1 // pred_region
      _
    $region29: #{conv_transpose_clamp.1} parent=1 // pred_fallthru
      _
    // Predicated region
    $region30: #{conv_transpose_clamp.1} parent=1 // pred_check
      _
    $region31: #{conv_transpose_clamp.1} parent=1 // pred_check_branch
      %2878 = sbr.rel (0) target = $region33
    $region32: #{conv_transpose_clamp.1} parent=1 // pred_region
      _
    $region33: #{conv_transpose_clamp.1} parent=1 // pred_fallthru
      _
    %2879 = vsyncpa [#allocation4], 1
    %2880 = vsyncpa [#allocation5], 1
    %2881 = vsyncpa [#allocation8], 1

</llo_original>
